<compile_context>
chip_gen: v6e
topology: v6e:2x2x1
jax: 0.10.0
libtpu: 0.0.40
codegen_flags: <defaults>
</compile_context>

<pallas_src>
import math

import jax
import jax.numpy as jnp
from jax import lax
from jax.experimental import pallas as pl
from jax.experimental.pallas import tpu as pltpu


# ----------------------------------------------------------------------------
# Kernel 1: fused conv (tap-folded) + bias + ReLU + 2x2/2 max-pool, per batch elem
# ----------------------------------------------------------------------------
def _conv_relu_pool_kernel(x_ref, w_ref, b_ref, o_ref, row_buf):
    # x_ref:   (H, Wout, KW*Cin)  -- dx/cin taps folded into the lane axis
    # w_ref:   (KH, KW*Cin, Cout)
    # b_ref:   (1, Cout)
    # o_ref:   (HP, WP, Cout)     -- pooled output
    # row_buf: VMEM (Wout, Cout)  -- one H-pooled conv row (single live accumulator)
    KH = w_ref.shape[0]
    Wout = x_ref.shape[1]
    HP, WP, _ = o_ref.shape

    def conv_row(y):
        # One conv output row = KH matmuls with K = KW*Cin (taps folded into K).
        acc = jnp.dot(x_ref[y, :, :], w_ref[0],
                      preferred_element_type=jnp.float32)
        for dy in range(1, KH):
            acc = acc + jnp.dot(x_ref[y + dy, :, :], w_ref[dy],
                                preferred_element_type=jnp.float32)
        return jnp.maximum(acc + b_ref[...], 0.0)            # bias + ReLU

    def body(i, carry):
        # H-pooling: write row 2i, then max-accumulate row 2i+1 (one live acc).
        row_buf[...] = conv_row(2 * i)
        row_buf[...] = jnp.maximum(row_buf[...], conv_row(2 * i + 1))
        # W-pooling via strided sublane loads from the VMEM scratch.
        even = row_buf[pl.ds(0, WP, stride=2), :]
        odd = row_buf[pl.ds(1, WP, stride=2), :]
        o_ref[i, :, :] = jnp.maximum(even, odd)
        return carry

    lax.fori_loop(0, HP, body, 0)


def conv_relu_pool(x_folded, w, b):
    """x_folded: (B, H, Wout, KW*Cin); w: (KH, KW*Cin, Cout); b: (1, Cout)."""
    B, H, Wout, KT = x_folded.shape
    KH, _, Cout = w.shape
    Hout = H - KH + 1
    assert Hout % 2 == 0 and Wout % 2 == 0, "pooling assumes even conv output dims"
    HP, WP = Hout // 2, Wout // 2
    return pl.pallas_call(
        _conv_relu_pool_kernel,
        out_shape=jax.ShapeDtypeStruct((B, HP, WP, Cout), jnp.float32),
        grid_spec=pltpu.PrefetchScalarGridSpec(
            num_scalar_prefetch=0,
            grid=(B,),
            in_specs=[
                pl.BlockSpec((None, H, Wout, KT), lambda bb: (bb, 0, 0, 0)),
                pl.BlockSpec((KH, KT, Cout), lambda bb: (0, 0, 0)),
                pl.BlockSpec((1, Cout), lambda bb: (0, 0)),
            ],
            out_specs=pl.BlockSpec((None, HP, WP, Cout), lambda bb: (bb, 0, 0, 0)),
            scratch_shapes=[pltpu.VMEM((Wout, Cout), jnp.float32)],
        ),
        compiler_params=pltpu.CompilerParams(dimension_semantics=("parallel",)),
    )(x_folded, w, b)


# ----------------------------------------------------------------------------
# Kernel 2: fused fc1 -> ReLU -> fc2 -> ReLU -> fc3 (all weights VMEM-resident)
# ----------------------------------------------------------------------------
def _mlp_kernel(x_ref, w1_ref, b1_ref, w2_ref, b2_ref, w3_ref, b3_ref, o_ref):
    h = jnp.dot(x_ref[...], w1_ref[...], preferred_element_type=jnp.float32)
    h = jnp.maximum(h + b1_ref[...], 0.0)
    h = jnp.dot(h, w2_ref[...], preferred_element_type=jnp.float32)
    h = jnp.maximum(h + b2_ref[...], 0.0)
    o_ref[...] = jnp.dot(h, w3_ref[...],
                         preferred_element_type=jnp.float32) + b3_ref[...]


def mlp_forward(x, w1, b1, w2, b2, w3, b3):
    """x: (B, 400); w1: (400,120); w2: (120,84); w3: (84,10); biases (1, N)."""
    B, K = x.shape
    N1, N2, N3 = w1.shape[1], w2.shape[1], w3.shape[1]
    return pl.pallas_call(
        _mlp_kernel,
        out_shape=jax.ShapeDtypeStruct((B, N3), jnp.float32),
        grid_spec=pltpu.PrefetchScalarGridSpec(
            num_scalar_prefetch=0,
            grid=(1,),
            in_specs=[
                pl.BlockSpec((B, K), lambda i: (0, 0)),
                pl.BlockSpec((K, N1), lambda i: (0, 0)),
                pl.BlockSpec((1, N1), lambda i: (0, 0)),
                pl.BlockSpec((N1, N2), lambda i: (0, 0)),
                pl.BlockSpec((1, N2), lambda i: (0, 0)),
                pl.BlockSpec((N2, N3), lambda i: (0, 0)),
                pl.BlockSpec((1, N3), lambda i: (0, 0)),
            ],
            out_specs=pl.BlockSpec((B, N3), lambda i: (0, 0)),
        ),
        compiler_params=pltpu.CompilerParams(dimension_semantics=("arbitrary",)),
    )(x, w1, b1, w2, b2, w3, b3)


# ----------------------------------------------------------------------------
# Offline (outside jit) parameter preparation -- done ONCE, not per call
# ----------------------------------------------------------------------------
def prepare_params(p):
    def conv_w(w):
        # torch (O, I, KH, KW) -> (KH, KW*I, O): dx/cin taps folded into K.
        o, i, kh, kw = w.shape
        return jnp.transpose(w, (2, 3, 1, 0)).reshape(kh, kw * i, o)

    # fc1 rows permuted from PyTorch's (c, h, w) flatten order to the kernel's
    # NHWC (h, w, c) flatten order, so no runtime activation transpose is needed.
    c, hp, wp = 16, 5, 5
    fc1 = p["fc1_w"].reshape(p["fc1_w"].shape[0], c, hp, wp)
    fc1 = jnp.transpose(fc1, (2, 3, 1, 0)).reshape(c * hp * wp, -1)   # (400, 120)

    return {
        "c1w": conv_w(p["conv1_w"]), "c1b": p["conv1_b"].reshape(1, -1),
        "c2w": conv_w(p["conv2_w"]), "c2b": p["conv2_b"].reshape(1, -1),
        "w1": fc1,                   "b1": p["fc1_b"].reshape(1, -1),
        "w2": p["fc2_w"].T,          "b2": p["fc2_b"].reshape(1, -1),
        "w3": p["fc3_w"].T,          "b3": p["fc3_b"].reshape(1, -1),
    }


def _fold_dx(x, kw):
    # NHWC (B, H, W, C) -> (B, H, W-kw+1, kw*C): pack the kw W-taps into channels
    # so the conv kernel contracts K = kw*C per dot.  A few-KB XLA copy here.
    wout = x.shape[2] - kw + 1
    return jnp.concatenate([x[:, :, dx:dx + wout, :] for dx in range(kw)], axis=-1)


# ----------------------------------------------------------------------------
# Forward pass (takes pre-prepared params)
# ----------------------------------------------------------------------------
def forward(x_nchw, cp):
    B = x_nchw.shape[0]
    x = jnp.transpose(x_nchw, (0, 2, 3, 1))              # NCHW -> NHWC
    x = _fold_dx(x, 5)                                   # (B, 32, 28, 15)
    h = conv_relu_pool(x, cp["c1w"], cp["c1b"])          # (B, 14, 14, 6)
    h = _fold_dx(h, 5)                                   # (B, 14, 10, 30)
    h = conv_relu_pool(h, cp["c2w"], cp["c2b"])          # (B, 5, 5, 16)
    flat = h.reshape(B, 5 * 5 * 16)                      # NHWC flatten (matches w1 rows)
    return mlp_forward(flat, cp["w1"], cp["b1"], cp["w2"], cp["b2"],
                       cp["w3"], cp["b3"])


def init_params(key):
    ks = jax.random.split(key, 10)

    def g(k, shape, fan_in):
        return jax.random.normal(k, shape, jnp.float32) / math.sqrt(fan_in)

    return {
        "conv1_w": g(ks[0], (6, 3, 5, 5), 3 * 25),
        "conv1_b": g(ks[1], (6,), 3 * 25),
        "conv2_w": g(ks[2], (16, 6, 5, 5), 6 * 25),
        "conv2_b": g(ks[3], (16,), 6 * 25),
        "fc1_w": g(ks[4], (120, 400), 400),
        "fc1_b": g(ks[5], (120,), 400),
        "fc2_w": g(ks[6], (84, 120), 120),
        "fc2_b": g(ks[7], (84,), 120),
        "fc3_w": g(ks[8], (10, 84), 84),
        "fc3_b": g(ks[9], (10,), 84),
    }


# ----------------------------------------------------------------------------
# Pure-JAX reference (PyTorch semantics, NCHW throughout)
# ----------------------------------------------------------------------------
def reference_forward(x, p):
    dn = ("NCHW", "OIHW", "NCHW")
    hi = lax.Precision.HIGHEST

    def conv(y, w, b):
        y = lax.conv_general_dilated(y, w, (1, 1), "VALID",
                                     dimension_numbers=dn, precision=hi)
        return jnp.maximum(y + b[None, :, None, None], 0.0)

    def pool(y):
        return lax.reduce_window(y, -jnp.inf, lax.max,
                                 (1, 1, 2, 2), (1, 1, 2, 2), "VALID")

    y = pool(conv(x, p["conv1_w"], p["conv1_b"]))
    y = pool(conv(y, p["conv2_w"], p["conv2_b"]))
    f = y.reshape(y.shape[0], -1)
    h = jnp.maximum(jnp.dot(f, p["fc1_w"].T, precision=hi) + p["fc1_b"], 0.0)
    h = jnp.maximum(jnp.dot(h, p["fc2_w"].T, precision=hi) + p["fc2_b"], 0.0)
    return jnp.dot(h, p["fc3_w"].T, precision=hi) + p["fc3_b"]


if __name__ == "__main__":
    key = jax.random.PRNGKey(0)
    pkey, xkey = jax.random.split(key)
    params = init_params(pkey)
    cp = prepare_params(params)          # one-time offline weight prep (outside jit)
    # BaseConvNet implies 3x32x32 input (32 -> 28 -> 14 -> 10 -> 5 = 16*5*5 flatten).
    x = jax.random.normal(xkey, (2, 3, 32, 32), jnp.float32)

    out = jax.block_until_ready(jax.jit(forward)(x, cp))
    assert out.shape == (2, 10)

    ref = jax.block_until_ready(jax.jit(reference_forward)(x, params))
    if not bool(jnp.allclose(out, ref, rtol=2e-2, atol=2e-2)):
        raise RuntimeError("Pallas output does not match reference")

    print("KERNEL_OK")
</pallas_src>

<mosaic_0001>
module attributes {stable_mosaic.version = 11 : i64} {
  func.func @_conv_relu_pool_kernel(%arg0: i32, %arg1: memref<1x32x28x15xf32, #tpu.memory_space<vmem>>, %arg2: memref<5x15x6xf32, #tpu.memory_space<vmem>>, %arg3: memref<1x6xf32, #tpu.memory_space<vmem>>, %arg4: memref<1x14x14x6xf32, #tpu.memory_space<vmem>>, %arg5: memref<28x6xf32, #tpu.memory_space<vmem>>) attributes {dimension_semantics = [#tpu.dimension_semantics<parallel>], iteration_bounds = array<i64: 2>, scalar_prefetch = 0 : i64, scratch_operands = 1 : i64, tpu.core_type = #tpu.core_type<tc>, window_params = [{transform_indices = @transform_0, window_bounds = array<i64: 1, 32, 28, 15>}, {pipeline_mode = #tpu.pipeline_mode<synchronous>, transform_indices = @transform_1, window_bounds = array<i64: 5, 15, 6>}, {pipeline_mode = #tpu.pipeline_mode<synchronous>, transform_indices = @transform_2, window_bounds = array<i64: 1, 6>}, {transform_indices = @transform_3, window_bounds = array<i64: 1, 14, 14, 6>}]} {
    %c0_i32 = arith.constant 0 : i32
    %c14_i32 = arith.constant 14 : i32
    %0 = arith.addi %c0_i32, %c14_i32 : i32
    %c1_i32 = arith.constant 1 : i32
    scf.for %arg6 = %c0_i32 to %0 step %c1_i32  : i32 {
      %c2_i32 = arith.constant 2 : i32
      %1 = arith.muli %c2_i32, %arg6 : i32
      %c0 = arith.constant 0 : index
      %2 = arith.index_cast %1 : i32 to index
      %c0_1 = arith.constant 0 : index
      %c0_2 = arith.constant 0 : index
      %3 = vector.load %arg1[%c0, %2, %c0_1, %c0_2] : memref<1x32x28x15xf32, #tpu.memory_space<vmem>>, vector<1x1x28x15xf32>
      %4 = vector.shape_cast %3 : vector<1x1x28x15xf32> to vector<28x15xf32>
      %c0_3 = arith.constant 0 : index
      %c0_4 = arith.constant 0 : index
      %c0_5 = arith.constant 0 : index
      %5 = vector.load %arg2[%c0_3, %c0_4, %c0_5] : memref<5x15x6xf32, #tpu.memory_space<vmem>>, vector<1x15x6xf32>
      %6 = vector.shape_cast %5 : vector<1x15x6xf32> to vector<15x6xf32>
      %cst = arith.constant dense<0.000000e+00> : vector<28x6xf32>
      %7 = tpu.matmul %4, %6, %cst {dimension_numbers = #tpu.dot_dimension_numbers<[1], [0], [0], [1], [0, 0, 1, 1], [], []>} : vector<28x15xf32>, vector<15x6xf32>, vector<28x6xf32> -> vector<28x6xf32>
      %c1_i32_6 = arith.constant 1 : i32
      %8 = arith.addi %1, %c1_i32_6 : i32
      %c0_7 = arith.constant 0 : index
      %9 = arith.index_cast %8 : i32 to index
      %c0_8 = arith.constant 0 : index
      %c0_9 = arith.constant 0 : index
      %10 = vector.load %arg1[%c0_7, %9, %c0_8, %c0_9] : memref<1x32x28x15xf32, #tpu.memory_space<vmem>>, vector<1x1x28x15xf32>
      %11 = vector.shape_cast %10 : vector<1x1x28x15xf32> to vector<28x15xf32>
      %c1 = arith.constant 1 : index
      %c0_10 = arith.constant 0 : index
      %c0_11 = arith.constant 0 : index
      %12 = vector.load %arg2[%c1, %c0_10, %c0_11] : memref<5x15x6xf32, #tpu.memory_space<vmem>>, vector<1x15x6xf32>
      %13 = vector.shape_cast %12 : vector<1x15x6xf32> to vector<15x6xf32>
      %cst_12 = arith.constant dense<0.000000e+00> : vector<28x6xf32>
      %14 = tpu.matmul %11, %13, %cst_12 {dimension_numbers = #tpu.dot_dimension_numbers<[1], [0], [0], [1], [0, 0, 1, 1], [], []>} : vector<28x15xf32>, vector<15x6xf32>, vector<28x6xf32> -> vector<28x6xf32>
      %15 = arith.addf %7, %14 : vector<28x6xf32>
      %c2_i32_13 = arith.constant 2 : i32
      %16 = arith.addi %1, %c2_i32_13 : i32
      %c0_14 = arith.constant 0 : index
      %17 = arith.index_cast %16 : i32 to index
      %c0_15 = arith.constant 0 : index
      %c0_16 = arith.constant 0 : index
      %18 = vector.load %arg1[%c0_14, %17, %c0_15, %c0_16] : memref<1x32x28x15xf32, #tpu.memory_space<vmem>>, vector<1x1x28x15xf32>
      %19 = vector.shape_cast %18 : vector<1x1x28x15xf32> to vector<28x15xf32>
      %c2 = arith.constant 2 : index
      %c0_17 = arith.constant 0 : index
      %c0_18 = arith.constant 0 : index
      %20 = vector.load %arg2[%c2, %c0_17, %c0_18] : memref<5x15x6xf32, #tpu.memory_space<vmem>>, vector<1x15x6xf32>
      %21 = vector.shape_cast %20 : vector<1x15x6xf32> to vector<15x6xf32>
      %cst_19 = arith.constant dense<0.000000e+00> : vector<28x6xf32>
      %22 = tpu.matmul %19, %21, %cst_19 {dimension_numbers = #tpu.dot_dimension_numbers<[1], [0], [0], [1], [0, 0, 1, 1], [], []>} : vector<28x15xf32>, vector<15x6xf32>, vector<28x6xf32> -> vector<28x6xf32>
      %23 = arith.addf %15, %22 : vector<28x6xf32>
      %c3_i32 = arith.constant 3 : i32
      %24 = arith.addi %1, %c3_i32 : i32
      %c0_20 = arith.constant 0 : index
      %25 = arith.index_cast %24 : i32 to index
      %c0_21 = arith.constant 0 : index
      %c0_22 = arith.constant 0 : index
      %26 = vector.load %arg1[%c0_20, %25, %c0_21, %c0_22] : memref<1x32x28x15xf32, #tpu.memory_space<vmem>>, vector<1x1x28x15xf32>
      %27 = vector.shape_cast %26 : vector<1x1x28x15xf32> to vector<28x15xf32>
      %c3 = arith.constant 3 : index
      %c0_23 = arith.constant 0 : index
      %c0_24 = arith.constant 0 : index
      %28 = vector.load %arg2[%c3, %c0_23, %c0_24] : memref<5x15x6xf32, #tpu.memory_space<vmem>>, vector<1x15x6xf32>
      %29 = vector.shape_cast %28 : vector<1x15x6xf32> to vector<15x6xf32>
      %cst_25 = arith.constant dense<0.000000e+00> : vector<28x6xf32>
      %30 = tpu.matmul %27, %29, %cst_25 {dimension_numbers = #tpu.dot_dimension_numbers<[1], [0], [0], [1], [0, 0, 1, 1], [], []>} : vector<28x15xf32>, vector<15x6xf32>, vector<28x6xf32> -> vector<28x6xf32>
      %31 = arith.addf %23, %30 : vector<28x6xf32>
      %c4_i32 = arith.constant 4 : i32
      %32 = arith.addi %1, %c4_i32 : i32
      %c0_26 = arith.constant 0 : index
      %33 = arith.index_cast %32 : i32 to index
      %c0_27 = arith.constant 0 : index
      %c0_28 = arith.constant 0 : index
      %34 = vector.load %arg1[%c0_26, %33, %c0_27, %c0_28] : memref<1x32x28x15xf32, #tpu.memory_space<vmem>>, vector<1x1x28x15xf32>
      %35 = vector.shape_cast %34 : vector<1x1x28x15xf32> to vector<28x15xf32>
      %c4 = arith.constant 4 : index
      %c0_29 = arith.constant 0 : index
      %c0_30 = arith.constant 0 : index
      %36 = vector.load %arg2[%c4, %c0_29, %c0_30] : memref<5x15x6xf32, #tpu.memory_space<vmem>>, vector<1x15x6xf32>
      %37 = vector.shape_cast %36 : vector<1x15x6xf32> to vector<15x6xf32>
      %cst_31 = arith.constant dense<0.000000e+00> : vector<28x6xf32>
      %38 = tpu.matmul %35, %37, %cst_31 {dimension_numbers = #tpu.dot_dimension_numbers<[1], [0], [0], [1], [0, 0, 1, 1], [], []>} : vector<28x15xf32>, vector<15x6xf32>, vector<28x6xf32> -> vector<28x6xf32>
      %39 = arith.addf %31, %38 : vector<28x6xf32>
      %c0_32 = arith.constant 0 : index
      %c0_33 = arith.constant 0 : index
      %40 = vector.load %arg3[%c0_32, %c0_33] : memref<1x6xf32, #tpu.memory_space<vmem>>, vector<1x6xf32>
      %41 = vector.broadcast %40 : vector<1x6xf32> to vector<28x6xf32>
      %42 = arith.addf %39, %41 : vector<28x6xf32>
      %cst_34 = arith.constant 0.000000e+00 : f32
      %43 = vector.broadcast %cst_34 : f32 to vector<28x6xf32>
      %44 = arith.maximumf %42, %43 : vector<28x6xf32>
      %c0_35 = arith.constant 0 : index
      %c0_36 = arith.constant 0 : index
      %45 = vector.load %arg5[%c0_35, %c0_36] : memref<28x6xf32, #tpu.memory_space<vmem>>, vector<28x6xf32>
      tpu.vector_store %arg5[%c0_35, %c0_36], %44 {strides = array<i32>} : memref<28x6xf32, #tpu.memory_space<vmem>>, vector<28x6xf32>,
      %c0_37 = arith.constant 0 : index
      %c0_38 = arith.constant 0 : index
      %46 = vector.load %arg5[%c0_37, %c0_38] : memref<28x6xf32, #tpu.memory_space<vmem>>, vector<28x6xf32>
      %c2_i32_39 = arith.constant 2 : i32
      %47 = arith.muli %c2_i32_39, %arg6 : i32
      %c1_i32_40 = arith.constant 1 : i32
      %48 = arith.addi %47, %c1_i32_40 : i32
      %c0_41 = arith.constant 0 : index
      %49 = arith.index_cast %48 : i32 to index
      %c0_42 = arith.constant 0 : index
      %c0_43 = arith.constant 0 : index
      %50 = vector.load %arg1[%c0_41, %49, %c0_42, %c0_43] : memref<1x32x28x15xf32, #tpu.memory_space<vmem>>, vector<1x1x28x15xf32>
      %51 = vector.shape_cast %50 : vector<1x1x28x15xf32> to vector<28x15xf32>
      %c0_44 = arith.constant 0 : index
      %c0_45 = arith.constant 0 : index
      %c0_46 = arith.constant 0 : index
      %52 = vector.load %arg2[%c0_44, %c0_45, %c0_46] : memref<5x15x6xf32, #tpu.memory_space<vmem>>, vector<1x15x6xf32>
      %53 = vector.shape_cast %52 : vector<1x15x6xf32> to vector<15x6xf32>
      %cst_47 = arith.constant dense<0.000000e+00> : vector<28x6xf32>
      %54 = tpu.matmul %51, %53, %cst_47 {dimension_numbers = #tpu.dot_dimension_numbers<[1], [0], [0], [1], [0, 0, 1, 1], [], []>} : vector<28x15xf32>, vector<15x6xf32>, vector<28x6xf32> -> vector<28x6xf32>
      %c1_i32_48 = arith.constant 1 : i32
      %55 = arith.addi %48, %c1_i32_48 : i32
      %c0_49 = arith.constant 0 : index
      %56 = arith.index_cast %55 : i32 to index
      %c0_50 = arith.constant 0 : index
      %c0_51 = arith.constant 0 : index
      %57 = vector.load %arg1[%c0_49, %56, %c0_50, %c0_51] : memref<1x32x28x15xf32, #tpu.memory_space<vmem>>, vector<1x1x28x15xf32>
      %58 = vector.shape_cast %57 : vector<1x1x28x15xf32> to vector<28x15xf32>
      %c1_52 = arith.constant 1 : index
      %c0_53 = arith.constant 0 : index
      %c0_54 = arith.constant 0 : index
      %59 = vector.load %arg2[%c1_52, %c0_53, %c0_54] : memref<5x15x6xf32, #tpu.memory_space<vmem>>, vector<1x15x6xf32>
      %60 = vector.shape_cast %59 : vector<1x15x6xf32> to vector<15x6xf32>
      %cst_55 = arith.constant dense<0.000000e+00> : vector<28x6xf32>
      %61 = tpu.matmul %58, %60, %cst_55 {dimension_numbers = #tpu.dot_dimension_numbers<[1], [0], [0], [1], [0, 0, 1, 1], [], []>} : vector<28x15xf32>, vector<15x6xf32>, vector<28x6xf32> -> vector<28x6xf32>
      %62 = arith.addf %54, %61 : vector<28x6xf32>
      %c2_i32_56 = arith.constant 2 : i32
      %63 = arith.addi %48, %c2_i32_56 : i32
      %c0_57 = arith.constant 0 : index
      %64 = arith.index_cast %63 : i32 to index
      %c0_58 = arith.constant 0 : index
      %c0_59 = arith.constant 0 : index
      %65 = vector.load %arg1[%c0_57, %64, %c0_58, %c0_59] : memref<1x32x28x15xf32, #tpu.memory_space<vmem>>, vector<1x1x28x15xf32>
      %66 = vector.shape_cast %65 : vector<1x1x28x15xf32> to vector<28x15xf32>
      %c2_60 = arith.constant 2 : index
      %c0_61 = arith.constant 0 : index
      %c0_62 = arith.constant 0 : index
      %67 = vector.load %arg2[%c2_60, %c0_61, %c0_62] : memref<5x15x6xf32, #tpu.memory_space<vmem>>, vector<1x15x6xf32>
      %68 = vector.shape_cast %67 : vector<1x15x6xf32> to vector<15x6xf32>
      %cst_63 = arith.constant dense<0.000000e+00> : vector<28x6xf32>
      %69 = tpu.matmul %66, %68, %cst_63 {dimension_numbers = #tpu.dot_dimension_numbers<[1], [0], [0], [1], [0, 0, 1, 1], [], []>} : vector<28x15xf32>, vector<15x6xf32>, vector<28x6xf32> -> vector<28x6xf32>
      %70 = arith.addf %62, %69 : vector<28x6xf32>
      %c3_i32_64 = arith.constant 3 : i32
      %71 = arith.addi %48, %c3_i32_64 : i32
      %c0_65 = arith.constant 0 : index
      %72 = arith.index_cast %71 : i32 to index
      %c0_66 = arith.constant 0 : index
      %c0_67 = arith.constant 0 : index
      %73 = vector.load %arg1[%c0_65, %72, %c0_66, %c0_67] : memref<1x32x28x15xf32, #tpu.memory_space<vmem>>, vector<1x1x28x15xf32>
      %74 = vector.shape_cast %73 : vector<1x1x28x15xf32> to vector<28x15xf32>
      %c3_68 = arith.constant 3 : index
      %c0_69 = arith.constant 0 : index
      %c0_70 = arith.constant 0 : index
      %75 = vector.load %arg2[%c3_68, %c0_69, %c0_70] : memref<5x15x6xf32, #tpu.memory_space<vmem>>, vector<1x15x6xf32>
      %76 = vector.shape_cast %75 : vector<1x15x6xf32> to vector<15x6xf32>
      %cst_71 = arith.constant dense<0.000000e+00> : vector<28x6xf32>
      %77 = tpu.matmul %74, %76, %cst_71 {dimension_numbers = #tpu.dot_dimension_numbers<[1], [0], [0], [1], [0, 0, 1, 1], [], []>} : vector<28x15xf32>, vector<15x6xf32>, vector<28x6xf32> -> vector<28x6xf32>
      %78 = arith.addf %70, %77 : vector<28x6xf32>
      %c4_i32_72 = arith.constant 4 : i32
      %79 = arith.addi %48, %c4_i32_72 : i32
      %c0_73 = arith.constant 0 : index
      %80 = arith.index_cast %79 : i32 to index
      %c0_74 = arith.constant 0 : index
      %c0_75 = arith.constant 0 : index
      %81 = vector.load %arg1[%c0_73, %80, %c0_74, %c0_75] : memref<1x32x28x15xf32, #tpu.memory_space<vmem>>, vector<1x1x28x15xf32>
      %82 = vector.shape_cast %81 : vector<1x1x28x15xf32> to vector<28x15xf32>
      %c4_76 = arith.constant 4 : index
      %c0_77 = arith.constant 0 : index
      %c0_78 = arith.constant 0 : index
      %83 = vector.load %arg2[%c4_76, %c0_77, %c0_78] : memref<5x15x6xf32, #tpu.memory_space<vmem>>, vector<1x15x6xf32>
      %84 = vector.shape_cast %83 : vector<1x15x6xf32> to vector<15x6xf32>
      %cst_79 = arith.constant dense<0.000000e+00> : vector<28x6xf32>
      %85 = tpu.matmul %82, %84, %cst_79 {dimension_numbers = #tpu.dot_dimension_numbers<[1], [0], [0], [1], [0, 0, 1, 1], [], []>} : vector<28x15xf32>, vector<15x6xf32>, vector<28x6xf32> -> vector<28x6xf32>
      %86 = arith.addf %78, %85 : vector<28x6xf32>
      %c0_80 = arith.constant 0 : index
      %c0_81 = arith.constant 0 : index
      %87 = vector.load %arg3[%c0_80, %c0_81] : memref<1x6xf32, #tpu.memory_space<vmem>>, vector<1x6xf32>
      %88 = vector.broadcast %87 : vector<1x6xf32> to vector<28x6xf32>
      %89 = arith.addf %86, %88 : vector<28x6xf32>
      %cst_82 = arith.constant 0.000000e+00 : f32
      %90 = vector.broadcast %cst_82 : f32 to vector<28x6xf32>
      %91 = arith.maximumf %89, %90 : vector<28x6xf32>
      %92 = arith.maximumf %46, %91 : vector<28x6xf32>
      %c0_83 = arith.constant 0 : index
      %c0_84 = arith.constant 0 : index
      %93 = vector.load %arg5[%c0_83, %c0_84] : memref<28x6xf32, #tpu.memory_space<vmem>>, vector<28x6xf32>
      tpu.vector_store %arg5[%c0_83, %c0_84], %92 {strides = array<i32>} : memref<28x6xf32, #tpu.memory_space<vmem>>, vector<28x6xf32>,
      %c0_85 = arith.constant 0 : index
      %c0_86 = arith.constant 0 : index
      %94 = tpu.strided_load %arg5[%c0_85, %c0_86] {strides = array<i32: 2, 1>} : memref<28x6xf32, #tpu.memory_space<vmem>>, vector<14x6xf32>
      %c1_87 = arith.constant 1 : index
      %c0_88 = arith.constant 0 : index
      %95 = tpu.strided_load %arg5[%c1_87, %c0_88] {strides = array<i32: 2, 1>} : memref<28x6xf32, #tpu.memory_space<vmem>>, vector<14x6xf32>
      %96 = arith.maximumf %94, %95 : vector<14x6xf32>
      %c0_89 = arith.constant 0 : index
      %97 = arith.index_cast %arg6 : i32 to index
      %c0_90 = arith.constant 0 : index
      %c0_91 = arith.constant 0 : index
      %98 = vector.load %arg4[%c0_89, %97, %c0_90, %c0_91] : memref<1x14x14x6xf32, #tpu.memory_space<vmem>>, vector<1x1x14x6xf32>
      %99 = vector.shape_cast %98 : vector<1x1x14x6xf32> to vector<14x6xf32>
      %100 = vector.shape_cast %96 : vector<14x6xf32> to vector<1x1x14x6xf32>
      tpu.vector_store %arg4[%c0_89, %97, %c0_90, %c0_91], %100 {strides = array<i32>} : memref<1x14x14x6xf32, #tpu.memory_space<vmem>>, vector<1x1x14x6xf32>,
    }
    %c14_i32_0 = arith.constant 14 : i32
    return
  }
  func.func @transform_0(%arg0: i32) -> (i32, i32, i32, i32) {
    %c0_i32 = arith.constant 0 : i32
    %c0_i32_0 = arith.constant 0 : i32
    %c0_i32_1 = arith.constant 0 : i32
    %c0_i32_2 = arith.constant 0 : i32
    return %arg0, %c0_i32, %c0_i32_0, %c0_i32_1 : i32, i32, i32, i32
  }
  func.func @transform_1(%arg0: i32) -> (i32, i32, i32) {
    %c0_i32 = arith.constant 0 : i32
    %c0_i32_0 = arith.constant 0 : i32
    %c0_i32_1 = arith.constant 0 : i32
    %c0_i32_2 = arith.constant 0 : i32
    return %c0_i32, %c0_i32_0, %c0_i32_1 : i32, i32, i32
  }
  func.func @transform_2(%arg0: i32) -> (i32, i32) {
    %c0_i32 = arith.constant 0 : i32
    %c0_i32_0 = arith.constant 0 : i32
    %c0_i32_1 = arith.constant 0 : i32
    return %c0_i32, %c0_i32_0 : i32, i32
  }
  func.func @transform_3(%arg0: i32) -> (i32, i32, i32, i32) {
    %c0_i32 = arith.constant 0 : i32
    %c0_i32_0 = arith.constant 0 : i32
    %c0_i32_1 = arith.constant 0 : i32
    %c0_i32_2 = arith.constant 0 : i32
    return %arg0, %c0_i32, %c0_i32_0, %c0_i32_1 : i32, i32, i32, i32
  }
}

module attributes {stable_mosaic.version = 11 : i64} {
  func.func @_conv_relu_pool_kernel(%arg0: i32, %arg1: memref<1x14x10x30xf32, #tpu.memory_space<vmem>>, %arg2: memref<5x30x16xf32, #tpu.memory_space<vmem>>, %arg3: memref<1x16xf32, #tpu.memory_space<vmem>>, %arg4: memref<1x5x5x16xf32, #tpu.memory_space<vmem>>, %arg5: memref<10x16xf32, #tpu.memory_space<vmem>>) attributes {dimension_semantics = [#tpu.dimension_semantics<parallel>], iteration_bounds = array<i64: 2>, scalar_prefetch = 0 : i64, scratch_operands = 1 : i64, tpu.core_type = #tpu.core_type<tc>, window_params = [{transform_indices = @transform_0, window_bounds = array<i64: 1, 14, 10, 30>}, {pipeline_mode = #tpu.pipeline_mode<synchronous>, transform_indices = @transform_1, window_bounds = array<i64: 5, 30, 16>}, {pipeline_mode = #tpu.pipeline_mode<synchronous>, transform_indices = @transform_2, window_bounds = array<i64: 1, 16>}, {transform_indices = @transform_3, window_bounds = array<i64: 1, 5, 5, 16>}]} {
    %c0_i32 = arith.constant 0 : i32
    %c5_i32 = arith.constant 5 : i32
    %0 = arith.addi %c0_i32, %c5_i32 : i32
    %c1_i32 = arith.constant 1 : i32
    scf.for %arg6 = %c0_i32 to %0 step %c1_i32  : i32 {
      %c2_i32 = arith.constant 2 : i32
      %1 = arith.muli %c2_i32, %arg6 : i32
      %c0 = arith.constant 0 : index
      %2 = arith.index_cast %1 : i32 to index
      %c0_1 = arith.constant 0 : index
      %c0_2 = arith.constant 0 : index
      %3 = vector.load %arg1[%c0, %2, %c0_1, %c0_2] : memref<1x14x10x30xf32, #tpu.memory_space<vmem>>, vector<1x1x10x30xf32>
      %4 = vector.shape_cast %3 : vector<1x1x10x30xf32> to vector<10x30xf32>
      %c0_3 = arith.constant 0 : index
      %c0_4 = arith.constant 0 : index
      %c0_5 = arith.constant 0 : index
      %5 = vector.load %arg2[%c0_3, %c0_4, %c0_5] : memref<5x30x16xf32, #tpu.memory_space<vmem>>, vector<1x30x16xf32>
      %6 = vector.shape_cast %5 : vector<1x30x16xf32> to vector<30x16xf32>
      %cst = arith.constant dense<0.000000e+00> : vector<10x16xf32>
      %7 = tpu.matmul %4, %6, %cst {dimension_numbers = #tpu.dot_dimension_numbers<[1], [0], [0], [1], [0, 0, 1, 1], [], []>} : vector<10x30xf32>, vector<30x16xf32>, vector<10x16xf32> -> vector<10x16xf32>
      %c1_i32_6 = arith.constant 1 : i32
      %8 = arith.addi %1, %c1_i32_6 : i32
      %c0_7 = arith.constant 0 : index
      %9 = arith.index_cast %8 : i32 to index
      %c0_8 = arith.constant 0 : index
      %c0_9 = arith.constant 0 : index
      %10 = vector.load %arg1[%c0_7, %9, %c0_8, %c0_9] : memref<1x14x10x30xf32, #tpu.memory_space<vmem>>, vector<1x1x10x30xf32>
      %11 = vector.shape_cast %10 : vector<1x1x10x30xf32> to vector<10x30xf32>
      %c1 = arith.constant 1 : index
      %c0_10 = arith.constant 0 : index
      %c0_11 = arith.constant 0 : index
      %12 = vector.load %arg2[%c1, %c0_10, %c0_11] : memref<5x30x16xf32, #tpu.memory_space<vmem>>, vector<1x30x16xf32>
      %13 = vector.shape_cast %12 : vector<1x30x16xf32> to vector<30x16xf32>
      %cst_12 = arith.constant dense<0.000000e+00> : vector<10x16xf32>
      %14 = tpu.matmul %11, %13, %cst_12 {dimension_numbers = #tpu.dot_dimension_numbers<[1], [0], [0], [1], [0, 0, 1, 1], [], []>} : vector<10x30xf32>, vector<30x16xf32>, vector<10x16xf32> -> vector<10x16xf32>
      %15 = arith.addf %7, %14 : vector<10x16xf32>
      %c2_i32_13 = arith.constant 2 : i32
      %16 = arith.addi %1, %c2_i32_13 : i32
      %c0_14 = arith.constant 0 : index
      %17 = arith.index_cast %16 : i32 to index
      %c0_15 = arith.constant 0 : index
      %c0_16 = arith.constant 0 : index
      %18 = vector.load %arg1[%c0_14, %17, %c0_15, %c0_16] : memref<1x14x10x30xf32, #tpu.memory_space<vmem>>, vector<1x1x10x30xf32>
      %19 = vector.shape_cast %18 : vector<1x1x10x30xf32> to vector<10x30xf32>
      %c2 = arith.constant 2 : index
      %c0_17 = arith.constant 0 : index
      %c0_18 = arith.constant 0 : index
      %20 = vector.load %arg2[%c2, %c0_17, %c0_18] : memref<5x30x16xf32, #tpu.memory_space<vmem>>, vector<1x30x16xf32>
      %21 = vector.shape_cast %20 : vector<1x30x16xf32> to vector<30x16xf32>
      %cst_19 = arith.constant dense<0.000000e+00> : vector<10x16xf32>
      %22 = tpu.matmul %19, %21, %cst_19 {dimension_numbers = #tpu.dot_dimension_numbers<[1], [0], [0], [1], [0, 0, 1, 1], [], []>} : vector<10x30xf32>, vector<30x16xf32>, vector<10x16xf32> -> vector<10x16xf32>
      %23 = arith.addf %15, %22 : vector<10x16xf32>
      %c3_i32 = arith.constant 3 : i32
      %24 = arith.addi %1, %c3_i32 : i32
      %c0_20 = arith.constant 0 : index
      %25 = arith.index_cast %24 : i32 to index
      %c0_21 = arith.constant 0 : index
      %c0_22 = arith.constant 0 : index
      %26 = vector.load %arg1[%c0_20, %25, %c0_21, %c0_22] : memref<1x14x10x30xf32, #tpu.memory_space<vmem>>, vector<1x1x10x30xf32>
      %27 = vector.shape_cast %26 : vector<1x1x10x30xf32> to vector<10x30xf32>
      %c3 = arith.constant 3 : index
      %c0_23 = arith.constant 0 : index
      %c0_24 = arith.constant 0 : index
      %28 = vector.load %arg2[%c3, %c0_23, %c0_24] : memref<5x30x16xf32, #tpu.memory_space<vmem>>, vector<1x30x16xf32>
      %29 = vector.shape_cast %28 : vector<1x30x16xf32> to vector<30x16xf32>
      %cst_25 = arith.constant dense<0.000000e+00> : vector<10x16xf32>
      %30 = tpu.matmul %27, %29, %cst_25 {dimension_numbers = #tpu.dot_dimension_numbers<[1], [0], [0], [1], [0, 0, 1, 1], [], []>} : vector<10x30xf32>, vector<30x16xf32>, vector<10x16xf32> -> vector<10x16xf32>
      %31 = arith.addf %23, %30 : vector<10x16xf32>
      %c4_i32 = arith.constant 4 : i32
      %32 = arith.addi %1, %c4_i32 : i32
      %c0_26 = arith.constant 0 : index
      %33 = arith.index_cast %32 : i32 to index
      %c0_27 = arith.constant 0 : index
      %c0_28 = arith.constant 0 : index
      %34 = vector.load %arg1[%c0_26, %33, %c0_27, %c0_28] : memref<1x14x10x30xf32, #tpu.memory_space<vmem>>, vector<1x1x10x30xf32>
      %35 = vector.shape_cast %34 : vector<1x1x10x30xf32> to vector<10x30xf32>
      %c4 = arith.constant 4 : index
      %c0_29 = arith.constant 0 : index
      %c0_30 = arith.constant 0 : index
      %36 = vector.load %arg2[%c4, %c0_29, %c0_30] : memref<5x30x16xf32, #tpu.memory_space<vmem>>, vector<1x30x16xf32>
      %37 = vector.shape_cast %36 : vector<1x30x16xf32> to vector<30x16xf32>
      %cst_31 = arith.constant dense<0.000000e+00> : vector<10x16xf32>
      %38 = tpu.matmul %35, %37, %cst_31 {dimension_numbers = #tpu.dot_dimension_numbers<[1], [0], [0], [1], [0, 0, 1, 1], [], []>} : vector<10x30xf32>, vector<30x16xf32>, vector<10x16xf32> -> vector<10x16xf32>
      %39 = arith.addf %31, %38 : vector<10x16xf32>
      %c0_32 = arith.constant 0 : index
      %c0_33 = arith.constant 0 : index
      %40 = vector.load %arg3[%c0_32, %c0_33] : memref<1x16xf32, #tpu.memory_space<vmem>>, vector<1x16xf32>
      %41 = vector.broadcast %40 : vector<1x16xf32> to vector<10x16xf32>
      %42 = arith.addf %39, %41 : vector<10x16xf32>
      %cst_34 = arith.constant 0.000000e+00 : f32
      %43 = vector.broadcast %cst_34 : f32 to vector<10x16xf32>
      %44 = arith.maximumf %42, %43 : vector<10x16xf32>
      %c0_35 = arith.constant 0 : index
      %c0_36 = arith.constant 0 : index
      %45 = vector.load %arg5[%c0_35, %c0_36] : memref<10x16xf32, #tpu.memory_space<vmem>>, vector<10x16xf32>
      tpu.vector_store %arg5[%c0_35, %c0_36], %44 {strides = array<i32>} : memref<10x16xf32, #tpu.memory_space<vmem>>, vector<10x16xf32>,
      %c0_37 = arith.constant 0 : index
      %c0_38 = arith.constant 0 : index
      %46 = vector.load %arg5[%c0_37, %c0_38] : memref<10x16xf32, #tpu.memory_space<vmem>>, vector<10x16xf32>
      %c2_i32_39 = arith.constant 2 : i32
      %47 = arith.muli %c2_i32_39, %arg6 : i32
      %c1_i32_40 = arith.constant 1 : i32
      %48 = arith.addi %47, %c1_i32_40 : i32
      %c0_41 = arith.constant 0 : index
      %49 = arith.index_cast %48 : i32 to index
      %c0_42 = arith.constant 0 : index
      %c0_43 = arith.constant 0 : index
      %50 = vector.load %arg1[%c0_41, %49, %c0_42, %c0_43] : memref<1x14x10x30xf32, #tpu.memory_space<vmem>>, vector<1x1x10x30xf32>
      %51 = vector.shape_cast %50 : vector<1x1x10x30xf32> to vector<10x30xf32>
      %c0_44 = arith.constant 0 : index
      %c0_45 = arith.constant 0 : index
      %c0_46 = arith.constant 0 : index
      %52 = vector.load %arg2[%c0_44, %c0_45, %c0_46] : memref<5x30x16xf32, #tpu.memory_space<vmem>>, vector<1x30x16xf32>
      %53 = vector.shape_cast %52 : vector<1x30x16xf32> to vector<30x16xf32>
      %cst_47 = arith.constant dense<0.000000e+00> : vector<10x16xf32>
      %54 = tpu.matmul %51, %53, %cst_47 {dimension_numbers = #tpu.dot_dimension_numbers<[1], [0], [0], [1], [0, 0, 1, 1], [], []>} : vector<10x30xf32>, vector<30x16xf32>, vector<10x16xf32> -> vector<10x16xf32>
      %c1_i32_48 = arith.constant 1 : i32
      %55 = arith.addi %48, %c1_i32_48 : i32
      %c0_49 = arith.constant 0 : index
      %56 = arith.index_cast %55 : i32 to index
      %c0_50 = arith.constant 0 : index
      %c0_51 = arith.constant 0 : index
      %57 = vector.load %arg1[%c0_49, %56, %c0_50, %c0_51] : memref<1x14x10x30xf32, #tpu.memory_space<vmem>>, vector<1x1x10x30xf32>
      %58 = vector.shape_cast %57 : vector<1x1x10x30xf32> to vector<10x30xf32>
      %c1_52 = arith.constant 1 : index
      %c0_53 = arith.constant 0 : index
      %c0_54 = arith.constant 0 : index
      %59 = vector.load %arg2[%c1_52, %c0_53, %c0_54] : memref<5x30x16xf32, #tpu.memory_space<vmem>>, vector<1x30x16xf32>
      %60 = vector.shape_cast %59 : vector<1x30x16xf32> to vector<30x16xf32>
      %cst_55 = arith.constant dense<0.000000e+00> : vector<10x16xf32>
      %61 = tpu.matmul %58, %60, %cst_55 {dimension_numbers = #tpu.dot_dimension_numbers<[1], [0], [0], [1], [0, 0, 1, 1], [], []>} : vector<10x30xf32>, vector<30x16xf32>, vector<10x16xf32> -> vector<10x16xf32>
      %62 = arith.addf %54, %61 : vector<10x16xf32>
      %c2_i32_56 = arith.constant 2 : i32
      %63 = arith.addi %48, %c2_i32_56 : i32
      %c0_57 = arith.constant 0 : index
      %64 = arith.index_cast %63 : i32 to index
      %c0_58 = arith.constant 0 : index
      %c0_59 = arith.constant 0 : index
      %65 = vector.load %arg1[%c0_57, %64, %c0_58, %c0_59] : memref<1x14x10x30xf32, #tpu.memory_space<vmem>>, vector<1x1x10x30xf32>
      %66 = vector.shape_cast %65 : vector<1x1x10x30xf32> to vector<10x30xf32>
      %c2_60 = arith.constant 2 : index
      %c0_61 = arith.constant 0 : index
      %c0_62 = arith.constant 0 : index
      %67 = vector.load %arg2[%c2_60, %c0_61, %c0_62] : memref<5x30x16xf32, #tpu.memory_space<vmem>>, vector<1x30x16xf32>
      %68 = vector.shape_cast %67 : vector<1x30x16xf32> to vector<30x16xf32>
      %cst_63 = arith.constant dense<0.000000e+00> : vector<10x16xf32>
      %69 = tpu.matmul %66, %68, %cst_63 {dimension_numbers = #tpu.dot_dimension_numbers<[1], [0], [0], [1], [0, 0, 1, 1], [], []>} : vector<10x30xf32>, vector<30x16xf32>, vector<10x16xf32> -> vector<10x16xf32>
      %70 = arith.addf %62, %69 : vector<10x16xf32>
      %c3_i32_64 = arith.constant 3 : i32
      %71 = arith.addi %48, %c3_i32_64 : i32
      %c0_65 = arith.constant 0 : index
      %72 = arith.index_cast %71 : i32 to index
      %c0_66 = arith.constant 0 : index
      %c0_67 = arith.constant 0 : index
      %73 = vector.load %arg1[%c0_65, %72, %c0_66, %c0_67] : memref<1x14x10x30xf32, #tpu.memory_space<vmem>>, vector<1x1x10x30xf32>
      %74 = vector.shape_cast %73 : vector<1x1x10x30xf32> to vector<10x30xf32>
      %c3_68 = arith.constant 3 : index
      %c0_69 = arith.constant 0 : index
      %c0_70 = arith.constant 0 : index
      %75 = vector.load %arg2[%c3_68, %c0_69, %c0_70] : memref<5x30x16xf32, #tpu.memory_space<vmem>>, vector<1x30x16xf32>
      %76 = vector.shape_cast %75 : vector<1x30x16xf32> to vector<30x16xf32>
      %cst_71 = arith.constant dense<0.000000e+00> : vector<10x16xf32>
      %77 = tpu.matmul %74, %76, %cst_71 {dimension_numbers = #tpu.dot_dimension_numbers<[1], [0], [0], [1], [0, 0, 1, 1], [], []>} : vector<10x30xf32>, vector<30x16xf32>, vector<10x16xf32> -> vector<10x16xf32>
      %78 = arith.addf %70, %77 : vector<10x16xf32>
      %c4_i32_72 = arith.constant 4 : i32
      %79 = arith.addi %48, %c4_i32_72 : i32
      %c0_73 = arith.constant 0 : index
      %80 = arith.index_cast %79 : i32 to index
      %c0_74 = arith.constant 0 : index
      %c0_75 = arith.constant 0 : index
      %81 = vector.load %arg1[%c0_73, %80, %c0_74, %c0_75] : memref<1x14x10x30xf32, #tpu.memory_space<vmem>>, vector<1x1x10x30xf32>
      %82 = vector.shape_cast %81 : vector<1x1x10x30xf32> to vector<10x30xf32>
      %c4_76 = arith.constant 4 : index
      %c0_77 = arith.constant 0 : index
      %c0_78 = arith.constant 0 : index
      %83 = vector.load %arg2[%c4_76, %c0_77, %c0_78] : memref<5x30x16xf32, #tpu.memory_space<vmem>>, vector<1x30x16xf32>
      %84 = vector.shape_cast %83 : vector<1x30x16xf32> to vector<30x16xf32>
      %cst_79 = arith.constant dense<0.000000e+00> : vector<10x16xf32>
      %85 = tpu.matmul %82, %84, %cst_79 {dimension_numbers = #tpu.dot_dimension_numbers<[1], [0], [0], [1], [0, 0, 1, 1], [], []>} : vector<10x30xf32>, vector<30x16xf32>, vector<10x16xf32> -> vector<10x16xf32>
      %86 = arith.addf %78, %85 : vector<10x16xf32>
      %c0_80 = arith.constant 0 : index
      %c0_81 = arith.constant 0 : index
      %87 = vector.load %arg3[%c0_80, %c0_81] : memref<1x16xf32, #tpu.memory_space<vmem>>, vector<1x16xf32>
      %88 = vector.broadcast %87 : vector<1x16xf32> to vector<10x16xf32>
      %89 = arith.addf %86, %88 : vector<10x16xf32>
      %cst_82 = arith.constant 0.000000e+00 : f32
      %90 = vector.broadcast %cst_82 : f32 to vector<10x16xf32>
      %91 = arith.maximumf %89, %90 : vector<10x16xf32>
      %92 = arith.maximumf %46, %91 : vector<10x16xf32>
      %c0_83 = arith.constant 0 : index
      %c0_84 = arith.constant 0 : index
      %93 = vector.load %arg5[%c0_83, %c0_84] : memref<10x16xf32, #tpu.memory_space<vmem>>, vector<10x16xf32>
      tpu.vector_store %arg5[%c0_83, %c0_84], %92 {strides = array<i32>} : memref<10x16xf32, #tpu.memory_space<vmem>>, vector<10x16xf32>,
      %c0_85 = arith.constant 0 : index
      %c0_86 = arith.constant 0 : index
      %94 = tpu.strided_load %arg5[%c0_85, %c0_86] {strides = array<i32: 2, 1>} : memref<10x16xf32, #tpu.memory_space<vmem>>, vector<5x16xf32>
      %c1_87 = arith.constant 1 : index
      %c0_88 = arith.constant 0 : index
      %95 = tpu.strided_load %arg5[%c1_87, %c0_88] {strides = array<i32: 2, 1>} : memref<10x16xf32, #tpu.memory_space<vmem>>, vector<5x16xf32>
      %96 = arith.maximumf %94, %95 : vector<5x16xf32>
      %c0_89 = arith.constant 0 : index
      %97 = arith.index_cast %arg6 : i32 to index
      %c0_90 = arith.constant 0 : index
      %c0_91 = arith.constant 0 : index
      %98 = vector.load %arg4[%c0_89, %97, %c0_90, %c0_91] : memref<1x5x5x16xf32, #tpu.memory_space<vmem>>, vector<1x1x5x16xf32>
      %99 = vector.shape_cast %98 : vector<1x1x5x16xf32> to vector<5x16xf32>
      %100 = vector.shape_cast %96 : vector<5x16xf32> to vector<1x1x5x16xf32>
      tpu.vector_store %arg4[%c0_89, %97, %c0_90, %c0_91], %100 {strides = array<i32>} : memref<1x5x5x16xf32, #tpu.memory_space<vmem>>, vector<1x1x5x16xf32>,
    }
    %c5_i32_0 = arith.constant 5 : i32
    return
  }
  func.func @transform_0(%arg0: i32) -> (i32, i32, i32, i32) {
    %c0_i32 = arith.constant 0 : i32
    %c0_i32_0 = arith.constant 0 : i32
    %c0_i32_1 = arith.constant 0 : i32
    %c0_i32_2 = arith.constant 0 : i32
    return %arg0, %c0_i32, %c0_i32_0, %c0_i32_1 : i32, i32, i32, i32
  }
  func.func @transform_1(%arg0: i32) -> (i32, i32, i32) {
    %c0_i32 = arith.constant 0 : i32
    %c0_i32_0 = arith.constant 0 : i32
    %c0_i32_1 = arith.constant 0 : i32
    %c0_i32_2 = arith.constant 0 : i32
    return %c0_i32, %c0_i32_0, %c0_i32_1 : i32, i32, i32
  }
  func.func @transform_2(%arg0: i32) -> (i32, i32) {
    %c0_i32 = arith.constant 0 : i32
    %c0_i32_0 = arith.constant 0 : i32
    %c0_i32_1 = arith.constant 0 : i32
    return %c0_i32, %c0_i32_0 : i32, i32
  }
  func.func @transform_3(%arg0: i32) -> (i32, i32, i32, i32) {
    %c0_i32 = arith.constant 0 : i32
    %c0_i32_0 = arith.constant 0 : i32
    %c0_i32_1 = arith.constant 0 : i32
    %c0_i32_2 = arith.constant 0 : i32
    return %arg0, %c0_i32, %c0_i32_0, %c0_i32_1 : i32, i32, i32, i32
  }
}

module attributes {stable_mosaic.version = 11 : i64} {
  func.func @_mlp_kernel(%arg0: i32, %arg1: memref<2x400xf32, #tpu.memory_space<vmem>>, %arg2: memref<400x120xf32, #tpu.memory_space<vmem>>, %arg3: memref<1x120xf32, #tpu.memory_space<vmem>>, %arg4: memref<120x84xf32, #tpu.memory_space<vmem>>, %arg5: memref<1x84xf32, #tpu.memory_space<vmem>>, %arg6: memref<84x10xf32, #tpu.memory_space<vmem>>, %arg7: memref<1x10xf32, #tpu.memory_space<vmem>>, %arg8: memref<2x10xf32, #tpu.memory_space<vmem>>) attributes {dimension_semantics = [#tpu.dimension_semantics<arbitrary>], iteration_bounds = array<i64: 1>, scalar_prefetch = 0 : i64, scratch_operands = 0 : i64, tpu.core_type = #tpu.core_type<tc>, window_params = [{pipeline_mode = #tpu.pipeline_mode<synchronous>, transform_indices = @transform_0, window_bounds = array<i64: 2, 400>}, {pipeline_mode = #tpu.pipeline_mode<synchronous>, transform_indices = @transform_1, window_bounds = array<i64: 400, 120>}, {pipeline_mode = #tpu.pipeline_mode<synchronous>, transform_indices = @transform_2, window_bounds = array<i64: 1, 120>}, {pipeline_mode = #tpu.pipeline_mode<synchronous>, transform_indices = @transform_3, window_bounds = array<i64: 120, 84>}, {pipeline_mode = #tpu.pipeline_mode<synchronous>, transform_indices = @transform_4, window_bounds = array<i64: 1, 84>}, {pipeline_mode = #tpu.pipeline_mode<synchronous>, transform_indices = @transform_5, window_bounds = array<i64: 84, 10>}, {pipeline_mode = #tpu.pipeline_mode<synchronous>, transform_indices = @transform_6, window_bounds = array<i64: 1, 10>}, {pipeline_mode = #tpu.pipeline_mode<synchronous>, transform_indices = @transform_7, window_bounds = array<i64: 2, 10>}]} {
    %c0 = arith.constant 0 : index
    %c0_0 = arith.constant 0 : index
    %0 = vector.load %arg1[%c0, %c0_0] : memref<2x400xf32, #tpu.memory_space<vmem>>, vector<2x400xf32>
    %c0_1 = arith.constant 0 : index
    %c0_2 = arith.constant 0 : index
    %1 = vector.load %arg2[%c0_1, %c0_2] : memref<400x120xf32, #tpu.memory_space<vmem>>, vector<400x120xf32>
    %cst = arith.constant dense<0.000000e+00> : vector<2x120xf32>
    %2 = tpu.matmul %0, %1, %cst {dimension_numbers = #tpu.dot_dimension_numbers<[1], [0], [0], [1], [0, 0, 1, 1], [], []>} : vector<2x400xf32>, vector<400x120xf32>, vector<2x120xf32> -> vector<2x120xf32>
    %c0_3 = arith.constant 0 : index
    %c0_4 = arith.constant 0 : index
    %3 = vector.load %arg3[%c0_3, %c0_4] : memref<1x120xf32, #tpu.memory_space<vmem>>, vector<1x120xf32>
    %4 = vector.broadcast %3 : vector<1x120xf32> to vector<2x120xf32>
    %5 = arith.addf %2, %4 : vector<2x120xf32>
    %cst_5 = arith.constant 0.000000e+00 : f32
    %6 = vector.broadcast %cst_5 : f32 to vector<2x120xf32>
    %7 = arith.maximumf %5, %6 : vector<2x120xf32>
    %c0_6 = arith.constant 0 : index
    %c0_7 = arith.constant 0 : index
    %8 = vector.load %arg4[%c0_6, %c0_7] : memref<120x84xf32, #tpu.memory_space<vmem>>, vector<120x84xf32>
    %cst_8 = arith.constant dense<0.000000e+00> : vector<2x84xf32>
    %9 = tpu.matmul %7, %8, %cst_8 {dimension_numbers = #tpu.dot_dimension_numbers<[1], [0], [0], [1], [0, 0, 1, 1], [], []>} : vector<2x120xf32>, vector<120x84xf32>, vector<2x84xf32> -> vector<2x84xf32>
    %c0_9 = arith.constant 0 : index
    %c0_10 = arith.constant 0 : index
    %10 = vector.load %arg5[%c0_9, %c0_10] : memref<1x84xf32, #tpu.memory_space<vmem>>, vector<1x84xf32>
    %11 = vector.broadcast %10 : vector<1x84xf32> to vector<2x84xf32>
    %12 = arith.addf %9, %11 : vector<2x84xf32>
    %cst_11 = arith.constant 0.000000e+00 : f32
    %13 = vector.broadcast %cst_11 : f32 to vector<2x84xf32>
    %14 = arith.maximumf %12, %13 : vector<2x84xf32>
    %c0_12 = arith.constant 0 : index
    %c0_13 = arith.constant 0 : index
    %15 = vector.load %arg6[%c0_12, %c0_13] : memref<84x10xf32, #tpu.memory_space<vmem>>, vector<84x10xf32>
    %cst_14 = arith.constant dense<0.000000e+00> : vector<2x10xf32>
    %16 = tpu.matmul %14, %15, %cst_14 {dimension_numbers = #tpu.dot_dimension_numbers<[1], [0], [0], [1], [0, 0, 1, 1], [], []>} : vector<2x84xf32>, vector<84x10xf32>, vector<2x10xf32> -> vector<2x10xf32>
    %c0_15 = arith.constant 0 : index
    %c0_16 = arith.constant 0 : index
    %17 = vector.load %arg7[%c0_15, %c0_16] : memref<1x10xf32, #tpu.memory_space<vmem>>, vector<1x10xf32>
    %18 = vector.broadcast %17 : vector<1x10xf32> to vector<2x10xf32>
    %19 = arith.addf %16, %18 : vector<2x10xf32>
    %c0_17 = arith.constant 0 : index
    %c0_18 = arith.constant 0 : index
    %20 = vector.load %arg8[%c0_17, %c0_18] : memref<2x10xf32, #tpu.memory_space<vmem>>, vector<2x10xf32>
    tpu.vector_store %arg8[%c0_17, %c0_18], %19 {strides = array<i32>} : memref<2x10xf32, #tpu.memory_space<vmem>>, vector<2x10xf32>,
    return
  }
  func.func @transform_0(%arg0: i32) -> (i32, i32) {
    %c0_i32 = arith.constant 0 : i32
    %c0_i32_0 = arith.constant 0 : i32
    %c0_i32_1 = arith.constant 0 : i32
    return %c0_i32, %c0_i32_0 : i32, i32
  }
  func.func @transform_1(%arg0: i32) -> (i32, i32) {
    %c0_i32 = arith.constant 0 : i32
    %c0_i32_0 = arith.constant 0 : i32
    %c0_i32_1 = arith.constant 0 : i32
    return %c0_i32, %c0_i32_0 : i32, i32
  }
  func.func @transform_2(%arg0: i32) -> (i32, i32) {
    %c0_i32 = arith.constant 0 : i32
    %c0_i32_0 = arith.constant 0 : i32
    %c0_i32_1 = arith.constant 0 : i32
    return %c0_i32, %c0_i32_0 : i32, i32
  }
  func.func @transform_3(%arg0: i32) -> (i32, i32) {
    %c0_i32 = arith.constant 0 : i32
    %c0_i32_0 = arith.constant 0 : i32
    %c0_i32_1 = arith.constant 0 : i32
    return %c0_i32, %c0_i32_0 : i32, i32
  }
  func.func @transform_4(%arg0: i32) -> (i32, i32) {
    %c0_i32 = arith.constant 0 : i32
    %c0_i32_0 = arith.constant 0 : i32
    %c0_i32_1 = arith.constant 0 : i32
    return %c0_i32, %c0_i32_0 : i32, i32
  }
  func.func @transform_5(%arg0: i32) -> (i32, i32) {
    %c0_i32 = arith.constant 0 : i32
    %c0_i32_0 = arith.constant 0 : i32
    %c0_i32_1 = arith.constant 0 : i32
    return %c0_i32, %c0_i32_0 : i32, i32
  }
  func.func @transform_6(%arg0: i32) -> (i32, i32) {
    %c0_i32 = arith.constant 0 : i32
    %c0_i32_0 = arith.constant 0 : i32
    %c0_i32_1 = arith.constant 0 : i32
    return %c0_i32, %c0_i32_0 : i32, i32
  }
  func.func @transform_7(%arg0: i32) -> (i32, i32) {
    %c0_i32 = arith.constant 0 : i32
    %c0_i32_0 = arith.constant 0 : i32
    %c0_i32_1 = arith.constant 0 : i32
    return %c0_i32, %c0_i32_0 : i32, i32
  }
}

</mosaic_0001>

<llo_original>
// kernel: forward.3
$region0: #{forward.3}
  #allocation0 [shape = 'u32[]', space=smem, size = 0x4, offset = 0x4, fixed_abs, tag = 'smem constant byte address 0x4 - core index']
  #allocation1 [shape = 'u32[144,128]{1,0:T(1,128)}', space=vmem, size = 0x12000, scoped, tag = 'internal scratch']
  #allocation2 [shape = 'f32[28,6]{1,0:T(8,128)}', space=vmem, size = 0x4000, scoped, tag = 'scratch operand']
  %s0 = inlined_call_operand.vmem [shape: f32[2,32,28,15], index: 0, kind: input, shape index: {}]
  %s1 = inlined_call_operand.vmem [shape: f32[5,15,6], index: 1, kind: input, shape index: {}]
  %s2 = inlined_call_operand.vmem [shape: f32[1,6], index: 2, kind: input, shape index: {}]
  %s3 = inlined_call_operand.vmem [shape: f32[2,14,14,6], index: 3, kind: output, shape index: {}]
  %s4 = sld [smem:[#allocation0]]
  $region52: #{forward.3} parent=0
    _
  %s6 = ssub.s32 1, %s4
  %s7 = scalar_select 0, %s6, %s4
  loop: start=0, step=1, limit=4
  $region2: #{forward.3} parent=0 // loop_pre_header
    _
  $region3: #{forward.3} parent=0 // loop_header
    %s9 = sphi 0, %s13
    %p10 = scmp.ge.s32.totalorder %s9, 4
    %s19 = sphi 0, %s21
    %s22 = sphi 0, %s19
    %s23 = sphi 0, %s22
    %s39 = sphi 0, %s23
    %s43 = sphi 0, %s43
    %s45 = sphi 0, %s43
    %s46 = sphi 0, %s45
    %s60 = sphi 0, %s46
    %s64 = sphi 0, %s64
    %s66 = sphi 0, %s64
    %s67 = sphi 0, %s66
    %s81 = sphi 0, %s67
    %s87 = sphi 0, %s89
    %s90 = sphi 0, %s87
    %s91 = sphi 0, %s90
    %s107 = sphi 0, %s91
  $region4: #{forward.3} parent=0 // loop_header_branch
    %12 = sbr.rel (%p10) target = $region8
  $region5: #{forward.3} parent=0 // loop_body
    %s14 = ssub.s32 %s9, 1
    %s15 = ssub.s32 %s9, 2
    %s16 = sadd.s32 %s9, 1
    %s17 = ssub.s32 %s9, %s16
    %p18 = scmp.eq.s32.totalorder %s17, 0
    %s20 = sadd.s32 %s19, 1
    %s21 = scalar_select %p18, %s19, %s20
    %p24 = pneg %p18
    %p25 = scmp.eq.s32.totalorder %s9, 1
    %p26 = por %p24, %p25
    %p27 = scmp.ne.s32.totalorder %s19, %s22
    %p28 = scmp.eq.s32.totalorder %s9, 0
    %p29 = por %p27, %p28
    %p30 = scmp.ne.s32.totalorder %s19, %s22
    %p31 = scmp.eq.s32.totalorder %s14, 1
    %p32 = por %p30, %p31
    %p33 = scmp.ne.s32.totalorder %s22, %s23
    %p34 = scmp.eq.s32.totalorder %s14, 0
    %p35 = por %p33, %p34
    %p36 = scmp.ne.s32.totalorder %s22, %s23
    %p37 = scmp.eq.s32.totalorder %s15, 1
    %p38 = por %p36, %p37
    %p40 = scmp.ne.s32.totalorder %s23, %s39
    %p41 = scmp.eq.s32.totalorder %s15, 0
    %p42 = por %p40, %p41
    %s44 = sadd.s32 %s43, 1
    %p47 = scmp.eq.s32.totalorder %s9, 1
    %p48 = scmp.ne.s32.totalorder %s43, %s45
    %p49 = scmp.eq.s32.totalorder %s9, 0
    %p50 = por %p48, %p49
    %p51 = scmp.ne.s32.totalorder %s43, %s45
    %p52 = scmp.eq.s32.totalorder %s14, 1
    %p53 = por %p51, %p52
    %p54 = scmp.ne.s32.totalorder %s45, %s46
    %p55 = scmp.eq.s32.totalorder %s14, 0
    %p56 = por %p54, %p55
    %p57 = scmp.ne.s32.totalorder %s45, %s46
    %p58 = scmp.eq.s32.totalorder %s15, 1
    %p59 = por %p57, %p58
    %p61 = scmp.ne.s32.totalorder %s46, %s60
    %p62 = scmp.eq.s32.totalorder %s15, 0
    %p63 = por %p61, %p62
    %s65 = sadd.s32 %s64, 1
    %p68 = scmp.eq.s32.totalorder %s9, 1
    %p69 = scmp.ne.s32.totalorder %s64, %s66
    %p70 = scmp.eq.s32.totalorder %s9, 0
    %p71 = por %p69, %p70
    %p72 = scmp.ne.s32.totalorder %s64, %s66
    %p73 = scmp.eq.s32.totalorder %s14, 1
    %p74 = por %p72, %p73
    %p75 = scmp.ne.s32.totalorder %s66, %s67
    %p76 = scmp.eq.s32.totalorder %s14, 0
    %p77 = por %p75, %p76
    %p78 = scmp.ne.s32.totalorder %s66, %s67
    %p79 = scmp.eq.s32.totalorder %s15, 1
    %p80 = por %p78, %p79
    %p82 = scmp.ne.s32.totalorder %s67, %s81
    %p83 = scmp.eq.s32.totalorder %s15, 0
    %p84 = por %p82, %p83
    %s85 = ssub.s32 %s9, %s16
    %p86 = scmp.eq.s32.totalorder %s85, 0
    %s88 = sadd.s32 %s87, 1
    %s89 = scalar_select %p86, %s87, %s88
    %p92 = pneg %p86
    %p93 = scmp.eq.s32.totalorder %s9, 1
    %p94 = por %p92, %p93
    %p95 = scmp.ne.s32.totalorder %s87, %s90
    %p96 = scmp.eq.s32.totalorder %s9, 0
    %p97 = por %p95, %p96
    %p98 = scmp.ne.s32.totalorder %s87, %s90
    %p99 = scmp.eq.s32.totalorder %s14, 1
    %p100 = por %p98, %p99
    %p101 = scmp.ne.s32.totalorder %s90, %s91
    %p102 = scmp.eq.s32.totalorder %s14, 0
    %p103 = por %p101, %p102
    %p104 = scmp.ne.s32.totalorder %s90, %s91
    %p105 = scmp.eq.s32.totalorder %s15, 1
    %p106 = por %p104, %p105
    %p108 = scmp.ne.s32.totalorder %s91, %s107
    %p109 = scmp.eq.s32.totalorder %s15, 0
    %p110 = por %p108, %p109
    %p111 = scmp.le.s32.totalorder 1, %s9
    %p112 = scmp.lt.s32.totalorder %s9, 3
    %p113 = pnand %p111, %p112
    %p114 = pneg %p113
    // Predicated region
    $region9: #{forward.3} parent=5 // pred_check
      _
    $region10: #{forward.3} parent=5 // pred_check_branch
      %116 = sbr.rel (%p113) target = $region12
    $region11: #{forward.3} parent=5 // pred_region
      %s117 = ssub.s32 %s9, 1
      // Predicated region
      $region13: #{forward.3} parent=11 // pred_check
        %p118 = pneg %p56
      $region14: #{forward.3} parent=11 // pred_check_branch
        %120 = sbr.rel (%p118) target = $region16
      $region15: #{forward.3} parent=11 // pred_region
        _
      $region16: #{forward.3} parent=11 // pred_fallthru
        _
      // Predicated region
      $region17: #{forward.3} parent=11 // pred_check
        %p121 = pneg %p77
      $region18: #{forward.3} parent=11 // pred_check_branch
        %123 = sbr.rel (%p121) target = $region20
      $region19: #{forward.3} parent=11 // pred_region
        _
      $region20: #{forward.3} parent=11 // pred_fallthru
        _
    $region12: #{forward.3} parent=5 // pred_fallthru
      _
    %p124 = scmp.lt.s32.totalorder %s9, 2
    // Predicated region
    $region21: #{forward.3} parent=5 // pred_check
      %p125 = pneg %p124
    $region22: #{forward.3} parent=5 // pred_check_branch
      %127 = sbr.rel (%p125) target = $region24
    $region23: #{forward.3} parent=5 // pred_region
      // Predicated region
      $region25: #{forward.3} parent=23 // pred_check
        %p128 = pneg %p29
      $region26: #{forward.3} parent=23 // pred_check_branch
        %130 = sbr.rel (%p128) target = $region28
      $region27: #{forward.3} parent=23 // pred_region
        %p131 = scmp.lt.s32.totalorder %s9, 1
        %s132 = scalar_select %p131, %s9, 1
        %s133 = smul.addr %s132, 128
        %s134 = smul.addr %s133, 8
        %s135 = scalar_lea.vmem %s0, %s134
      $region28: #{forward.3} parent=23 // pred_fallthru
        _
    $region24: #{forward.3} parent=5 // pred_fallthru
      _
    %p136 = scmp.le.s32.totalorder 1, %s9
    %p137 = scmp.lt.s32.totalorder %s9, 3
    %p138 = pnand %p136, %p137
    %p139 = pneg %p138
    // Predicated region
    $region29: #{forward.3} parent=5 // pred_check
      _
    $region30: #{forward.3} parent=5 // pred_check_branch
      %141 = sbr.rel (%p138) target = $region32
    $region31: #{forward.3} parent=5 // pred_region
      %s142 = ssub.s32 %s9, 1
      %p143 = scmp.lt.s32.totalorder %s14, 1
      %s144 = scalar_select %p143, %s14, 1
      %s145 = smul.addr %s144, 128
      %s146 = smul.addr %s145, 8
      %s147 = scalar_lea.vmem %s0, %s146
      %p148 = pneg %p35
      %p149 = pneg %p32
      %p150 = pneg %p56
      %p151 = pneg %p53
      %p152 = pneg %p77
      %p153 = pneg %p74
      %p154 = pneg %p103
      %p155 = pneg %p100
      %p156 = scmp.lt.s32.totalorder %s14, 1
      %s157 = scalar_select %p156, %s14, 1
      %s158 = smul.addr %s157, 28
      %s159 = smul.addr %s158, 8
      %s160 = scalar_lea.vmem %s3, %s159
      %p161 = scmp.lt.s32.totalorder %s14, 1
      %s162 = scalar_select %p161, %s14, 1
      %s163 = smul.addr %s162, 128
      %s164 = smul.addr %s163, 8
      %s165 = scalar_lea.vmem %s0, %s164
      %p166 = scmp.lt.s32.totalorder %s14, 1
      %s167 = scalar_select %p166, %s14, 1
      %s168 = smul.addr %s167, 28
      %s169 = smul.addr %s168, 8
      %s170 = scalar_lea.vmem %s3, %s169
      loop: start=0, step=1, limit=14
      $region33: #{forward.3} parent=31 // loop_pre_header
        _
      $region34: #{forward.3} parent=31 // loop_header
        %s172 = sphi 0, %s176
        %p173 = scmp.ge.s32.totalorder %s172, 14
      $region35: #{forward.3} parent=31 // loop_header_branch
        %175 = sbr.rel (%p173) target = $region39
      $region36: #{forward.3} parent=31 // loop_body
        %s177 = smul.u32 %s172, 2
        %s178 = smul.u32 %s177, 32
        %s179 = scalar_lea.vmem %s165, %s178
        %v180 = vld [vmem:[%s179] sm:$0xff]
        %v181 = vld [vmem:[%s179 + $0x8] sm:$0xff]
        %v182 = vld [vmem:[%s179 + $0x10] sm:$0xff]
        %v183 = vld [vmem:[%s179 + $0x18] sm:$0xf]
        %v184 = vld [vmem:[%s1] sm:$0xff]
        %v185 = vld [vmem:[%s1 + $0x8] sm:$0x7f]
        %s186 = sadd.s32 %s177, 1
        %s187 = smul.u32 %s186, 32
        %s188 = scalar_lea.vmem %s165, %s187
        %v189 = vld [vmem:[%s188] sm:$0xff]
        %v190 = vld [vmem:[%s188 + $0x8] sm:$0xff]
        %v191 = vld [vmem:[%s188 + $0x10] sm:$0xff]
        %v192 = vld [vmem:[%s188 + $0x18] sm:$0xf]
        %s193 = scalar_lea.vmem %s1, 16
        %v194 = vld [vmem:[%s193] sm:$0xff]
        %v195 = vld [vmem:[%s193 + $0x8] sm:$0x7f]
        %vm196 = vcmask 121856
        %v198 = vsel %vm196, %v189, 0
        %v201 = vsel %vm196, %v190, 0
        %v204 = vsel %vm196, %v191, 0
        %v207 = vsel %vm196, %v192, 0
        %vm209 = vcmask 1046528
        %v211 = vsel %vm209, %v195, 0
        %213 = vmatprep.subr.mxu0 0.0
        %214 = vmatpush1.msra.mxu0 0.0
        %215 = vmatprep.subr.mxu0 0.0
        %216 = vmatpush1.msra.mxu0 0.0
        %217 = vmatprep.subr.mxu0 0.0
        %218 = vmatpush1.msra.mxu0 0.0
        %219 = vmatprep.subr.mxu0 0.0
        %220 = vmatpush1.msra.mxu0 0.0
        %221 = vmatprep.subr.mxu0 0.0
        %222 = vmatpush1.msra.mxu0 0.0
        %223 = vmatprep.subr.mxu0 0.0
        %224 = vmatpush1.msra.mxu0 0.0
        %225 = vmatprep.subr.mxu0 0.0
        %226 = vmatpush1.msra.mxu0 0.0
        %227 = vmatprep.subr.mxu0 0.0
        %228 = vmatpush1.msra.mxu0 0.0
        %229 = vmatprep.subr.mxu0 0.0
        %230 = vmatpush1.msra.mxu0 0.0
        %231 = vmatprep.subr.mxu0 0.0
        %232 = vmatpush1.msra.mxu0 0.0
        %233 = vmatprep.subr.mxu0 0.0
        %234 = vmatpush1.msra.mxu0 0.0
        %235 = vmatprep.subr.mxu0 0.0
        %236 = vmatpush1.msra.mxu0 0.0
        %237 = vmatprep.subr.mxu0 0.0
        %238 = vmatpush1.msra.mxu0 0.0
        %239 = vmatprep.subr.mxu0 0.0
        %240 = vmatpush1.msra.mxu0 0.0
        %241 = vmatprep.subr.mxu0 0.0
        %242 = vmatpush1.msra.mxu0 %v211
        %243 = vmatprep.subr.mxu0 0.0
        %244 = vmatpush1.msra.mxu0 %v194
        %245 = vmatprep.subr.mxu0 0.0
        %246 = vmatpush2.msra.mxu0 0.0
        %247 = vmatprep.subr.mxu0 0.0
        %248 = vmatpush2.msra.mxu0 0.0
        %249 = vmatprep.subr.mxu0 0.0
        %250 = vmatpush2.msra.mxu0 0.0
        %251 = vmatprep.subr.mxu0 0.0
        %252 = vmatpush2.msra.mxu0 0.0
        %253 = vmatprep.subr.mxu0 0.0
        %254 = vmatpush2.msra.mxu0 0.0
        %255 = vmatprep.subr.mxu0 0.0
        %256 = vmatpush2.msra.mxu0 0.0
        %257 = vmatprep.subr.mxu0 0.0
        %258 = vmatpush2.msra.mxu0 0.0
        %259 = vmatprep.subr.mxu0 0.0
        %260 = vmatpush2.msra.mxu0 0.0
        %261 = vmatprep.subr.mxu0 0.0
        %262 = vmatpush2.msra.mxu0 0.0
        %263 = vmatprep.subr.mxu0 0.0
        %264 = vmatpush2.msra.mxu0 0.0
        %265 = vmatprep.subr.mxu0 0.0
        %266 = vmatpush2.msra.mxu0 0.0
        %267 = vmatprep.subr.mxu0 0.0
        %268 = vmatpush2.msra.mxu0 0.0
        %269 = vmatprep.subr.mxu0 0.0
        %270 = vmatpush2.msra.mxu0 0.0
        %271 = vmatprep.subr.mxu0 0.0
        %272 = vmatpush2.msra.mxu0 0.0
        %273 = vmatprep.subr.mxu0 0.0
        %274 = vmatpush2.msra.mxu0 0.0
        %275 = vmatprep.subr.mxu0 0.0
        %276 = vmatpush2.msra.mxu0 0.0
        %277 = vmatprep.mubr.f32.mxu0 0.0
        %278 = vmatmul.mubr.f32.gmra.mxu0 %v198
        %v279 = vpop.f32.mrf.mxu0
        %v280 = vadd.f32 0.0, %v279
        %v281 = vpop.f32.mrf.mxu0
        %282 = vmatprep.mubr.f32.mxu0 0.0
        %283 = vmatmul.mubr.f32.gmra.mxu0 %v201
        %v284 = vpop.f32.mrf.mxu0
        %v285 = vadd.f32 0.0, %v284
        %v286 = vpop.f32.mrf.mxu0
        %287 = vmatprep.mubr.f32.mxu0 0.0
        %288 = vmatmul.mubr.f32.gmra.mxu0 %v204
        %v289 = vpop.f32.mrf.mxu0
        %v290 = vadd.f32 0.0, %v289
        %v291 = vpop.f32.mrf.mxu0
        %292 = vmatprep.mubr.f32.mxu0 0.0
        %293 = vmatmul.mubr.f32.gmra.mxu0 %v207
        %v294 = vpop.f32.mrf.mxu0
        %v295 = vadd.f32 0.0, %v294
        %v296 = vpop.f32.mrf.mxu0
        %297 = vdwg.mxu0
        %v299 = vsel %vm196, %v180, 0
        %v302 = vsel %vm196, %v181, 0
        %v305 = vsel %vm196, %v182, 0
        %v308 = vsel %vm196, %v183, 0
        %v311 = vsel %vm209, %v185, 0
        %313 = vmatprep.subr.mxu0 0.0
        %314 = vmatpush1.msra.mxu0 0.0
        %315 = vmatprep.subr.mxu0 0.0
        %316 = vmatpush1.msra.mxu0 0.0
        %317 = vmatprep.subr.mxu0 0.0
        %318 = vmatpush1.msra.mxu0 0.0
        %319 = vmatprep.subr.mxu0 0.0
        %320 = vmatpush1.msra.mxu0 0.0
        %321 = vmatprep.subr.mxu0 0.0
        %322 = vmatpush1.msra.mxu0 0.0
        %323 = vmatprep.subr.mxu0 0.0
        %324 = vmatpush1.msra.mxu0 0.0
        %325 = vmatprep.subr.mxu0 0.0
        %326 = vmatpush1.msra.mxu0 0.0
        %327 = vmatprep.subr.mxu0 0.0
        %328 = vmatpush1.msra.mxu0 0.0
        %329 = vmatprep.subr.mxu0 0.0
        %330 = vmatpush1.msra.mxu0 0.0
        %331 = vmatprep.subr.mxu0 0.0
        %332 = vmatpush1.msra.mxu0 0.0
        %333 = vmatprep.subr.mxu0 0.0
        %334 = vmatpush1.msra.mxu0 0.0
        %335 = vmatprep.subr.mxu0 0.0
        %336 = vmatpush1.msra.mxu0 0.0
        %337 = vmatprep.subr.mxu0 0.0
        %338 = vmatpush1.msra.mxu0 0.0
        %339 = vmatprep.subr.mxu0 0.0
        %340 = vmatpush1.msra.mxu0 0.0
        %341 = vmatprep.subr.mxu0 0.0
        %342 = vmatpush1.msra.mxu0 %v311
        %343 = vmatprep.subr.mxu0 0.0
        %344 = vmatpush1.msra.mxu0 %v184
        %345 = vmatprep.subr.mxu0 0.0
        %346 = vmatpush2.msra.mxu0 0.0
        %347 = vmatprep.subr.mxu0 0.0
        %348 = vmatpush2.msra.mxu0 0.0
        %349 = vmatprep.subr.mxu0 0.0
        %350 = vmatpush2.msra.mxu0 0.0
        %351 = vmatprep.subr.mxu0 0.0
        %352 = vmatpush2.msra.mxu0 0.0
        %353 = vmatprep.subr.mxu0 0.0
        %354 = vmatpush2.msra.mxu0 0.0
        %355 = vmatprep.subr.mxu0 0.0
        %356 = vmatpush2.msra.mxu0 0.0
        %357 = vmatprep.subr.mxu0 0.0
        %358 = vmatpush2.msra.mxu0 0.0
        %359 = vmatprep.subr.mxu0 0.0
        %360 = vmatpush2.msra.mxu0 0.0
        %361 = vmatprep.subr.mxu0 0.0
        %362 = vmatpush2.msra.mxu0 0.0
        %363 = vmatprep.subr.mxu0 0.0
        %364 = vmatpush2.msra.mxu0 0.0
        %365 = vmatprep.subr.mxu0 0.0
        %366 = vmatpush2.msra.mxu0 0.0
        %367 = vmatprep.subr.mxu0 0.0
        %368 = vmatpush2.msra.mxu0 0.0
        %369 = vmatprep.subr.mxu0 0.0
        %370 = vmatpush2.msra.mxu0 0.0
        %371 = vmatprep.subr.mxu0 0.0
        %372 = vmatpush2.msra.mxu0 0.0
        %373 = vmatprep.subr.mxu0 0.0
        %374 = vmatpush2.msra.mxu0 0.0
        %375 = vmatprep.subr.mxu0 0.0
        %376 = vmatpush2.msra.mxu0 0.0
        %377 = vmatprep.mubr.f32.mxu0 0.0
        %378 = vmatmul.mubr.f32.gmra.mxu0 %v299
        %v379 = vpop.f32.mrf.mxu0
        %v380 = vadd.f32 %v280, %v379
        %v381 = vpop.f32.mrf.mxu0
        %382 = vmatprep.mubr.f32.mxu0 0.0
        %383 = vmatmul.mubr.f32.gmra.mxu0 %v302
        %v384 = vpop.f32.mrf.mxu0
        %v385 = vadd.f32 %v285, %v384
        %v386 = vpop.f32.mrf.mxu0
        %387 = vmatprep.mubr.f32.mxu0 0.0
        %388 = vmatmul.mubr.f32.gmra.mxu0 %v305
        %v389 = vpop.f32.mrf.mxu0
        %v390 = vadd.f32 %v290, %v389
        %v391 = vpop.f32.mrf.mxu0
        %392 = vmatprep.mubr.f32.mxu0 0.0
        %393 = vmatmul.mubr.f32.gmra.mxu0 %v308
        %v394 = vpop.f32.mrf.mxu0
        %v395 = vadd.f32 %v295, %v394
        %v396 = vpop.f32.mrf.mxu0
        %397 = vdwg.mxu0
        %s398 = sadd.s32 %s177, 2
        %s399 = smul.u32 %s398, 32
        %s400 = scalar_lea.vmem %s165, %s399
        %v401 = vld [vmem:[%s400] sm:$0xff]
        %v402 = vld [vmem:[%s400 + $0x8] sm:$0xff]
        %v403 = vld [vmem:[%s400 + $0x10] sm:$0xff]
        %v404 = vld [vmem:[%s400 + $0x18] sm:$0xf]
        %s405 = scalar_lea.vmem %s1, 32
        %v406 = vld [vmem:[%s405] sm:$0xff]
        %v407 = vld [vmem:[%s405 + $0x8] sm:$0x7f]
        %v409 = vsel %vm196, %v401, 0
        %v412 = vsel %vm196, %v402, 0
        %v415 = vsel %vm196, %v403, 0
        %v418 = vsel %vm196, %v404, 0
        %v421 = vsel %vm209, %v407, 0
        %423 = vmatprep.subr.mxu0 0.0
        %424 = vmatpush1.msra.mxu0 0.0
        %425 = vmatprep.subr.mxu0 0.0
        %426 = vmatpush1.msra.mxu0 0.0
        %427 = vmatprep.subr.mxu0 0.0
        %428 = vmatpush1.msra.mxu0 0.0
        %429 = vmatprep.subr.mxu0 0.0
        %430 = vmatpush1.msra.mxu0 0.0
        %431 = vmatprep.subr.mxu0 0.0
        %432 = vmatpush1.msra.mxu0 0.0
        %433 = vmatprep.subr.mxu0 0.0
        %434 = vmatpush1.msra.mxu0 0.0
        %435 = vmatprep.subr.mxu0 0.0
        %436 = vmatpush1.msra.mxu0 0.0
        %437 = vmatprep.subr.mxu0 0.0
        %438 = vmatpush1.msra.mxu0 0.0
        %439 = vmatprep.subr.mxu0 0.0
        %440 = vmatpush1.msra.mxu0 0.0
        %441 = vmatprep.subr.mxu0 0.0
        %442 = vmatpush1.msra.mxu0 0.0
        %443 = vmatprep.subr.mxu0 0.0
        %444 = vmatpush1.msra.mxu0 0.0
        %445 = vmatprep.subr.mxu0 0.0
        %446 = vmatpush1.msra.mxu0 0.0
        %447 = vmatprep.subr.mxu0 0.0
        %448 = vmatpush1.msra.mxu0 0.0
        %449 = vmatprep.subr.mxu0 0.0
        %450 = vmatpush1.msra.mxu0 0.0
        %451 = vmatprep.subr.mxu0 0.0
        %452 = vmatpush1.msra.mxu0 %v421
        %453 = vmatprep.subr.mxu0 0.0
        %454 = vmatpush1.msra.mxu0 %v406
        %455 = vmatprep.subr.mxu0 0.0
        %456 = vmatpush2.msra.mxu0 0.0
        %457 = vmatprep.subr.mxu0 0.0
        %458 = vmatpush2.msra.mxu0 0.0
        %459 = vmatprep.subr.mxu0 0.0
        %460 = vmatpush2.msra.mxu0 0.0
        %461 = vmatprep.subr.mxu0 0.0
        %462 = vmatpush2.msra.mxu0 0.0
        %463 = vmatprep.subr.mxu0 0.0
        %464 = vmatpush2.msra.mxu0 0.0
        %465 = vmatprep.subr.mxu0 0.0
        %466 = vmatpush2.msra.mxu0 0.0
        %467 = vmatprep.subr.mxu0 0.0
        %468 = vmatpush2.msra.mxu0 0.0
        %469 = vmatprep.subr.mxu0 0.0
        %470 = vmatpush2.msra.mxu0 0.0
        %471 = vmatprep.subr.mxu0 0.0
        %472 = vmatpush2.msra.mxu0 0.0
        %473 = vmatprep.subr.mxu0 0.0
        %474 = vmatpush2.msra.mxu0 0.0
        %475 = vmatprep.subr.mxu0 0.0
        %476 = vmatpush2.msra.mxu0 0.0
        %477 = vmatprep.subr.mxu0 0.0
        %478 = vmatpush2.msra.mxu0 0.0
        %479 = vmatprep.subr.mxu0 0.0
        %480 = vmatpush2.msra.mxu0 0.0
        %481 = vmatprep.subr.mxu0 0.0
        %482 = vmatpush2.msra.mxu0 0.0
        %483 = vmatprep.subr.mxu0 0.0
        %484 = vmatpush2.msra.mxu0 0.0
        %485 = vmatprep.subr.mxu0 0.0
        %486 = vmatpush2.msra.mxu0 0.0
        %487 = vmatprep.mubr.f32.mxu0 0.0
        %488 = vmatmul.mubr.f32.gmra.mxu0 %v409
        %v489 = vpop.f32.mrf.mxu0
        %v490 = vadd.f32 0.0, %v489
        %v491 = vpop.f32.mrf.mxu0
        %492 = vmatprep.mubr.f32.mxu0 0.0
        %493 = vmatmul.mubr.f32.gmra.mxu0 %v412
        %v494 = vpop.f32.mrf.mxu0
        %v495 = vadd.f32 0.0, %v494
        %v496 = vpop.f32.mrf.mxu0
        %497 = vmatprep.mubr.f32.mxu0 0.0
        %498 = vmatmul.mubr.f32.gmra.mxu0 %v415
        %v499 = vpop.f32.mrf.mxu0
        %v500 = vadd.f32 0.0, %v499
        %v501 = vpop.f32.mrf.mxu0
        %502 = vmatprep.mubr.f32.mxu0 0.0
        %503 = vmatmul.mubr.f32.gmra.mxu0 %v418
        %v504 = vpop.f32.mrf.mxu0
        %v505 = vadd.f32 0.0, %v504
        %v506 = vpop.f32.mrf.mxu0
        %507 = vdwg.mxu0
        %v508 = vadd.f32 %v380, %v490
        %v509 = vadd.f32 %v385, %v495
        %v510 = vadd.f32 %v390, %v500
        %v511 = vadd.f32 %v395, %v505
        %s512 = sadd.s32 %s177, 3
        %s513 = smul.u32 %s512, 32
        %s514 = scalar_lea.vmem %s165, %s513
        %v515 = vld [vmem:[%s514] sm:$0xff]
        %v516 = vld [vmem:[%s514 + $0x8] sm:$0xff]
        %v517 = vld [vmem:[%s514 + $0x10] sm:$0xff]
        %v518 = vld [vmem:[%s514 + $0x18] sm:$0xf]
        %s519 = scalar_lea.vmem %s1, 48
        %v520 = vld [vmem:[%s519] sm:$0xff]
        %v521 = vld [vmem:[%s519 + $0x8] sm:$0x7f]
        %v523 = vsel %vm196, %v515, 0
        %v526 = vsel %vm196, %v516, 0
        %v529 = vsel %vm196, %v517, 0
        %v532 = vsel %vm196, %v518, 0
        %v535 = vsel %vm209, %v521, 0
        %537 = vmatprep.subr.mxu0 0.0
        %538 = vmatpush1.msra.mxu0 0.0
        %539 = vmatprep.subr.mxu0 0.0
        %540 = vmatpush1.msra.mxu0 0.0
        %541 = vmatprep.subr.mxu0 0.0
        %542 = vmatpush1.msra.mxu0 0.0
        %543 = vmatprep.subr.mxu0 0.0
        %544 = vmatpush1.msra.mxu0 0.0
        %545 = vmatprep.subr.mxu0 0.0
        %546 = vmatpush1.msra.mxu0 0.0
        %547 = vmatprep.subr.mxu0 0.0
        %548 = vmatpush1.msra.mxu0 0.0
        %549 = vmatprep.subr.mxu0 0.0
        %550 = vmatpush1.msra.mxu0 0.0
        %551 = vmatprep.subr.mxu0 0.0
        %552 = vmatpush1.msra.mxu0 0.0
        %553 = vmatprep.subr.mxu0 0.0
        %554 = vmatpush1.msra.mxu0 0.0
        %555 = vmatprep.subr.mxu0 0.0
        %556 = vmatpush1.msra.mxu0 0.0
        %557 = vmatprep.subr.mxu0 0.0
        %558 = vmatpush1.msra.mxu0 0.0
        %559 = vmatprep.subr.mxu0 0.0
        %560 = vmatpush1.msra.mxu0 0.0
        %561 = vmatprep.subr.mxu0 0.0
        %562 = vmatpush1.msra.mxu0 0.0
        %563 = vmatprep.subr.mxu0 0.0
        %564 = vmatpush1.msra.mxu0 0.0
        %565 = vmatprep.subr.mxu0 0.0
        %566 = vmatpush1.msra.mxu0 %v535
        %567 = vmatprep.subr.mxu0 0.0
        %568 = vmatpush1.msra.mxu0 %v520
        %569 = vmatprep.subr.mxu0 0.0
        %570 = vmatpush2.msra.mxu0 0.0
        %571 = vmatprep.subr.mxu0 0.0
        %572 = vmatpush2.msra.mxu0 0.0
        %573 = vmatprep.subr.mxu0 0.0
        %574 = vmatpush2.msra.mxu0 0.0
        %575 = vmatprep.subr.mxu0 0.0
        %576 = vmatpush2.msra.mxu0 0.0
        %577 = vmatprep.subr.mxu0 0.0
        %578 = vmatpush2.msra.mxu0 0.0
        %579 = vmatprep.subr.mxu0 0.0
        %580 = vmatpush2.msra.mxu0 0.0
        %581 = vmatprep.subr.mxu0 0.0
        %582 = vmatpush2.msra.mxu0 0.0
        %583 = vmatprep.subr.mxu0 0.0
        %584 = vmatpush2.msra.mxu0 0.0
        %585 = vmatprep.subr.mxu0 0.0
        %586 = vmatpush2.msra.mxu0 0.0
        %587 = vmatprep.subr.mxu0 0.0
        %588 = vmatpush2.msra.mxu0 0.0
        %589 = vmatprep.subr.mxu0 0.0
        %590 = vmatpush2.msra.mxu0 0.0
        %591 = vmatprep.subr.mxu0 0.0
        %592 = vmatpush2.msra.mxu0 0.0
        %593 = vmatprep.subr.mxu0 0.0
        %594 = vmatpush2.msra.mxu0 0.0
        %595 = vmatprep.subr.mxu0 0.0
        %596 = vmatpush2.msra.mxu0 0.0
        %597 = vmatprep.subr.mxu0 0.0
        %598 = vmatpush2.msra.mxu0 0.0
        %599 = vmatprep.subr.mxu0 0.0
        %600 = vmatpush2.msra.mxu0 0.0
        %601 = vmatprep.mubr.f32.mxu0 0.0
        %602 = vmatmul.mubr.f32.gmra.mxu0 %v523
        %v603 = vpop.f32.mrf.mxu0
        %v604 = vadd.f32 0.0, %v603
        %v605 = vpop.f32.mrf.mxu0
        %606 = vmatprep.mubr.f32.mxu0 0.0
        %607 = vmatmul.mubr.f32.gmra.mxu0 %v526
        %v608 = vpop.f32.mrf.mxu0
        %v609 = vadd.f32 0.0, %v608
        %v610 = vpop.f32.mrf.mxu0
        %611 = vmatprep.mubr.f32.mxu0 0.0
        %612 = vmatmul.mubr.f32.gmra.mxu0 %v529
        %v613 = vpop.f32.mrf.mxu0
        %v614 = vadd.f32 0.0, %v613
        %v615 = vpop.f32.mrf.mxu0
        %616 = vmatprep.mubr.f32.mxu0 0.0
        %617 = vmatmul.mubr.f32.gmra.mxu0 %v532
        %v618 = vpop.f32.mrf.mxu0
        %v619 = vadd.f32 0.0, %v618
        %v620 = vpop.f32.mrf.mxu0
        %621 = vdwg.mxu0
        %v622 = vadd.f32 %v508, %v604
        %v623 = vadd.f32 %v509, %v609
        %v624 = vadd.f32 %v510, %v614
        %v625 = vadd.f32 %v511, %v619
        %s626 = sadd.s32 %s177, 4
        %s627 = smul.u32 %s626, 32
        %s628 = scalar_lea.vmem %s165, %s627
        %v629 = vld [vmem:[%s628] sm:$0xff]
        %v630 = vld [vmem:[%s628 + $0x8] sm:$0xff]
        %v631 = vld [vmem:[%s628 + $0x10] sm:$0xff]
        %v632 = vld [vmem:[%s628 + $0x18] sm:$0xf]
        %s633 = scalar_lea.vmem %s1, 64
        %v634 = vld [vmem:[%s633] sm:$0xff]
        %v635 = vld [vmem:[%s633 + $0x8] sm:$0x7f]
        %v637 = vsel %vm196, %v629, 0
        %v640 = vsel %vm196, %v630, 0
        %v643 = vsel %vm196, %v631, 0
        %v646 = vsel %vm196, %v632, 0
        %v649 = vsel %vm209, %v635, 0
        %651 = vmatprep.subr.mxu0 0.0
        %652 = vmatpush1.msra.mxu0 0.0
        %653 = vmatprep.subr.mxu0 0.0
        %654 = vmatpush1.msra.mxu0 0.0
        %655 = vmatprep.subr.mxu0 0.0
        %656 = vmatpush1.msra.mxu0 0.0
        %657 = vmatprep.subr.mxu0 0.0
        %658 = vmatpush1.msra.mxu0 0.0
        %659 = vmatprep.subr.mxu0 0.0
        %660 = vmatpush1.msra.mxu0 0.0
        %661 = vmatprep.subr.mxu0 0.0
        %662 = vmatpush1.msra.mxu0 0.0
        %663 = vmatprep.subr.mxu0 0.0
        %664 = vmatpush1.msra.mxu0 0.0
        %665 = vmatprep.subr.mxu0 0.0
        %666 = vmatpush1.msra.mxu0 0.0
        %667 = vmatprep.subr.mxu0 0.0
        %668 = vmatpush1.msra.mxu0 0.0
        %669 = vmatprep.subr.mxu0 0.0
        %670 = vmatpush1.msra.mxu0 0.0
        %671 = vmatprep.subr.mxu0 0.0
        %672 = vmatpush1.msra.mxu0 0.0
        %673 = vmatprep.subr.mxu0 0.0
        %674 = vmatpush1.msra.mxu0 0.0
        %675 = vmatprep.subr.mxu0 0.0
        %676 = vmatpush1.msra.mxu0 0.0
        %677 = vmatprep.subr.mxu0 0.0
        %678 = vmatpush1.msra.mxu0 0.0
        %679 = vmatprep.subr.mxu0 0.0
        %680 = vmatpush1.msra.mxu0 %v649
        %681 = vmatprep.subr.mxu0 0.0
        %682 = vmatpush1.msra.mxu0 %v634
        %683 = vmatprep.subr.mxu0 0.0
        %684 = vmatpush2.msra.mxu0 0.0
        %685 = vmatprep.subr.mxu0 0.0
        %686 = vmatpush2.msra.mxu0 0.0
        %687 = vmatprep.subr.mxu0 0.0
        %688 = vmatpush2.msra.mxu0 0.0
        %689 = vmatprep.subr.mxu0 0.0
        %690 = vmatpush2.msra.mxu0 0.0
        %691 = vmatprep.subr.mxu0 0.0
        %692 = vmatpush2.msra.mxu0 0.0
        %693 = vmatprep.subr.mxu0 0.0
        %694 = vmatpush2.msra.mxu0 0.0
        %695 = vmatprep.subr.mxu0 0.0
        %696 = vmatpush2.msra.mxu0 0.0
        %697 = vmatprep.subr.mxu0 0.0
        %698 = vmatpush2.msra.mxu0 0.0
        %699 = vmatprep.subr.mxu0 0.0
        %700 = vmatpush2.msra.mxu0 0.0
        %701 = vmatprep.subr.mxu0 0.0
        %702 = vmatpush2.msra.mxu0 0.0
        %703 = vmatprep.subr.mxu0 0.0
        %704 = vmatpush2.msra.mxu0 0.0
        %705 = vmatprep.subr.mxu0 0.0
        %706 = vmatpush2.msra.mxu0 0.0
        %707 = vmatprep.subr.mxu0 0.0
        %708 = vmatpush2.msra.mxu0 0.0
        %709 = vmatprep.subr.mxu0 0.0
        %710 = vmatpush2.msra.mxu0 0.0
        %711 = vmatprep.subr.mxu0 0.0
        %712 = vmatpush2.msra.mxu0 0.0
        %713 = vmatprep.subr.mxu0 0.0
        %714 = vmatpush2.msra.mxu0 0.0
        %715 = vmatprep.mubr.f32.mxu0 0.0
        %716 = vmatmul.mubr.f32.gmra.mxu0 %v637
        %v717 = vpop.f32.mrf.mxu0
        %v718 = vadd.f32 0.0, %v717
        %v719 = vpop.f32.mrf.mxu0
        %720 = vmatprep.mubr.f32.mxu0 0.0
        %721 = vmatmul.mubr.f32.gmra.mxu0 %v640
        %v722 = vpop.f32.mrf.mxu0
        %v723 = vadd.f32 0.0, %v722
        %v724 = vpop.f32.mrf.mxu0
        %725 = vmatprep.mubr.f32.mxu0 0.0
        %726 = vmatmul.mubr.f32.gmra.mxu0 %v643
        %v727 = vpop.f32.mrf.mxu0
        %v728 = vadd.f32 0.0, %v727
        %v729 = vpop.f32.mrf.mxu0
        %730 = vmatprep.mubr.f32.mxu0 0.0
        %731 = vmatmul.mubr.f32.gmra.mxu0 %v646
        %v732 = vpop.f32.mrf.mxu0
        %v733 = vadd.f32 0.0, %v732
        %v734 = vpop.f32.mrf.mxu0
        %735 = vdwg.mxu0
        %v736 = vadd.f32 %v622, %v718
        %v737 = vadd.f32 %v623, %v723
        %v738 = vadd.f32 %v624, %v728
        %v739 = vadd.f32 %v625, %v733
        %v740 = vld [vmem:[%s2] sm:$0x1]
        %v742 = vlaneseq
        %v743 = vshrl.u32 %v742, 7
        %v744 = vsub.s32 0, %v743
        %v745 = vrot.slane %v740, %v744
        %v747 = vadd.f32 %v736, %v745
        %v748 = vadd.f32 %v737, %v745
        %v749 = vadd.f32 %v738, %v745
        %v750 = vadd.f32 %v739, %v745
        %v751 = vmax.f32 %v747, 0.0
        %v752 = vmax.f32 %v748, 0.0
        %v753 = vmax.f32 %v749, 0.0
        %v754 = vmax.f32 %v750, 0.0
        %vm755 = vcmask 48128
        %756 = vst.msk [vmem:[#allocation2] sm:$0xff] %vm755, %v751
        %757 = vst.msk [vmem:[#allocation2 + $0x8] sm:$0xff] %vm755, %v752
        %758 = vst.msk [vmem:[#allocation2 + $0x10] sm:$0xff] %vm755, %v753
        %vm759 = vcmask 44032
        %760 = vst.msk [vmem:[#allocation2 + $0x18] sm:$0xf] %vm759, %v754
        %v761 = vld [vmem:[#allocation2] sm:$0xff]
        %v762 = vld [vmem:[#allocation2 + $0x8] sm:$0xff]
        %v763 = vld [vmem:[#allocation2 + $0x10] sm:$0xff]
        %v764 = vld [vmem:[#allocation2 + $0x18] sm:$0xf]
        %v765 = vld [vmem:[%s188] sm:$0xff]
        %v766 = vld [vmem:[%s188 + $0x8] sm:$0xff]
        %v767 = vld [vmem:[%s188 + $0x10] sm:$0xff]
        %v768 = vld [vmem:[%s188 + $0x18] sm:$0xf]
        %v769 = vld [vmem:[%s1] sm:$0xff]
        %v770 = vld [vmem:[%s1 + $0x8] sm:$0x7f]
        %v771 = vld [vmem:[%s400] sm:$0xff]
        %v772 = vld [vmem:[%s400 + $0x8] sm:$0xff]
        %v773 = vld [vmem:[%s400 + $0x10] sm:$0xff]
        %v774 = vld [vmem:[%s400 + $0x18] sm:$0xf]
        %v775 = vld [vmem:[%s193] sm:$0xff]
        %v776 = vld [vmem:[%s193 + $0x8] sm:$0x7f]
        %v778 = vsel %vm196, %v771, 0
        %v781 = vsel %vm196, %v772, 0
        %v784 = vsel %vm196, %v773, 0
        %v787 = vsel %vm196, %v774, 0
        %v790 = vsel %vm209, %v776, 0
        %792 = vmatprep.subr.mxu0 0.0
        %793 = vmatpush1.msra.mxu0 0.0
        %794 = vmatprep.subr.mxu0 0.0
        %795 = vmatpush1.msra.mxu0 0.0
        %796 = vmatprep.subr.mxu0 0.0
        %797 = vmatpush1.msra.mxu0 0.0
        %798 = vmatprep.subr.mxu0 0.0
        %799 = vmatpush1.msra.mxu0 0.0
        %800 = vmatprep.subr.mxu0 0.0
        %801 = vmatpush1.msra.mxu0 0.0
        %802 = vmatprep.subr.mxu0 0.0
        %803 = vmatpush1.msra.mxu0 0.0
        %804 = vmatprep.subr.mxu0 0.0
        %805 = vmatpush1.msra.mxu0 0.0
        %806 = vmatprep.subr.mxu0 0.0
        %807 = vmatpush1.msra.mxu0 0.0
        %808 = vmatprep.subr.mxu0 0.0
        %809 = vmatpush1.msra.mxu0 0.0
        %810 = vmatprep.subr.mxu0 0.0
        %811 = vmatpush1.msra.mxu0 0.0
        %812 = vmatprep.subr.mxu0 0.0
        %813 = vmatpush1.msra.mxu0 0.0
        %814 = vmatprep.subr.mxu0 0.0
        %815 = vmatpush1.msra.mxu0 0.0
        %816 = vmatprep.subr.mxu0 0.0
        %817 = vmatpush1.msra.mxu0 0.0
        %818 = vmatprep.subr.mxu0 0.0
        %819 = vmatpush1.msra.mxu0 0.0
        %820 = vmatprep.subr.mxu0 0.0
        %821 = vmatpush1.msra.mxu0 %v790
        %822 = vmatprep.subr.mxu0 0.0
        %823 = vmatpush1.msra.mxu0 %v775
        %824 = vmatprep.subr.mxu0 0.0
        %825 = vmatpush2.msra.mxu0 0.0
        %826 = vmatprep.subr.mxu0 0.0
        %827 = vmatpush2.msra.mxu0 0.0
        %828 = vmatprep.subr.mxu0 0.0
        %829 = vmatpush2.msra.mxu0 0.0
        %830 = vmatprep.subr.mxu0 0.0
        %831 = vmatpush2.msra.mxu0 0.0
        %832 = vmatprep.subr.mxu0 0.0
        %833 = vmatpush2.msra.mxu0 0.0
        %834 = vmatprep.subr.mxu0 0.0
        %835 = vmatpush2.msra.mxu0 0.0
        %836 = vmatprep.subr.mxu0 0.0
        %837 = vmatpush2.msra.mxu0 0.0
        %838 = vmatprep.subr.mxu0 0.0
        %839 = vmatpush2.msra.mxu0 0.0
        %840 = vmatprep.subr.mxu0 0.0
        %841 = vmatpush2.msra.mxu0 0.0
        %842 = vmatprep.subr.mxu0 0.0
        %843 = vmatpush2.msra.mxu0 0.0
        %844 = vmatprep.subr.mxu0 0.0
        %845 = vmatpush2.msra.mxu0 0.0
        %846 = vmatprep.subr.mxu0 0.0
        %847 = vmatpush2.msra.mxu0 0.0
        %848 = vmatprep.subr.mxu0 0.0
        %849 = vmatpush2.msra.mxu0 0.0
        %850 = vmatprep.subr.mxu0 0.0
        %851 = vmatpush2.msra.mxu0 0.0
        %852 = vmatprep.subr.mxu0 0.0
        %853 = vmatpush2.msra.mxu0 0.0
        %854 = vmatprep.subr.mxu0 0.0
        %855 = vmatpush2.msra.mxu0 0.0
        %856 = vmatprep.mubr.f32.mxu0 0.0
        %857 = vmatmul.mubr.f32.gmra.mxu0 %v778
        %v858 = vpop.f32.mrf.mxu0
        %v859 = vadd.f32 0.0, %v858
        %v860 = vpop.f32.mrf.mxu0
        %861 = vmatprep.mubr.f32.mxu0 0.0
        %862 = vmatmul.mubr.f32.gmra.mxu0 %v781
        %v863 = vpop.f32.mrf.mxu0
        %v864 = vadd.f32 0.0, %v863
        %v865 = vpop.f32.mrf.mxu0
        %866 = vmatprep.mubr.f32.mxu0 0.0
        %867 = vmatmul.mubr.f32.gmra.mxu0 %v784
        %v868 = vpop.f32.mrf.mxu0
        %v869 = vadd.f32 0.0, %v868
        %v870 = vpop.f32.mrf.mxu0
        %871 = vmatprep.mubr.f32.mxu0 0.0
        %872 = vmatmul.mubr.f32.gmra.mxu0 %v787
        %v873 = vpop.f32.mrf.mxu0
        %v874 = vadd.f32 0.0, %v873
        %v875 = vpop.f32.mrf.mxu0
        %876 = vdwg.mxu0
        %v878 = vsel %vm196, %v765, 0
        %v881 = vsel %vm196, %v766, 0
        %v884 = vsel %vm196, %v767, 0
        %v887 = vsel %vm196, %v768, 0
        %v890 = vsel %vm209, %v770, 0
        %892 = vmatprep.subr.mxu0 0.0
        %893 = vmatpush1.msra.mxu0 0.0
        %894 = vmatprep.subr.mxu0 0.0
        %895 = vmatpush1.msra.mxu0 0.0
        %896 = vmatprep.subr.mxu0 0.0
        %897 = vmatpush1.msra.mxu0 0.0
        %898 = vmatprep.subr.mxu0 0.0
        %899 = vmatpush1.msra.mxu0 0.0
        %900 = vmatprep.subr.mxu0 0.0
        %901 = vmatpush1.msra.mxu0 0.0
        %902 = vmatprep.subr.mxu0 0.0
        %903 = vmatpush1.msra.mxu0 0.0
        %904 = vmatprep.subr.mxu0 0.0
        %905 = vmatpush1.msra.mxu0 0.0
        %906 = vmatprep.subr.mxu0 0.0
        %907 = vmatpush1.msra.mxu0 0.0
        %908 = vmatprep.subr.mxu0 0.0
        %909 = vmatpush1.msra.mxu0 0.0
        %910 = vmatprep.subr.mxu0 0.0
        %911 = vmatpush1.msra.mxu0 0.0
        %912 = vmatprep.subr.mxu0 0.0
        %913 = vmatpush1.msra.mxu0 0.0
        %914 = vmatprep.subr.mxu0 0.0
        %915 = vmatpush1.msra.mxu0 0.0
        %916 = vmatprep.subr.mxu0 0.0
        %917 = vmatpush1.msra.mxu0 0.0
        %918 = vmatprep.subr.mxu0 0.0
        %919 = vmatpush1.msra.mxu0 0.0
        %920 = vmatprep.subr.mxu0 0.0
        %921 = vmatpush1.msra.mxu0 %v890
        %922 = vmatprep.subr.mxu0 0.0
        %923 = vmatpush1.msra.mxu0 %v769
        %924 = vmatprep.subr.mxu0 0.0
        %925 = vmatpush2.msra.mxu0 0.0
        %926 = vmatprep.subr.mxu0 0.0
        %927 = vmatpush2.msra.mxu0 0.0
        %928 = vmatprep.subr.mxu0 0.0
        %929 = vmatpush2.msra.mxu0 0.0
        %930 = vmatprep.subr.mxu0 0.0
        %931 = vmatpush2.msra.mxu0 0.0
        %932 = vmatprep.subr.mxu0 0.0
        %933 = vmatpush2.msra.mxu0 0.0
        %934 = vmatprep.subr.mxu0 0.0
        %935 = vmatpush2.msra.mxu0 0.0
        %936 = vmatprep.subr.mxu0 0.0
        %937 = vmatpush2.msra.mxu0 0.0
        %938 = vmatprep.subr.mxu0 0.0
        %939 = vmatpush2.msra.mxu0 0.0
        %940 = vmatprep.subr.mxu0 0.0
        %941 = vmatpush2.msra.mxu0 0.0
        %942 = vmatprep.subr.mxu0 0.0
        %943 = vmatpush2.msra.mxu0 0.0
        %944 = vmatprep.subr.mxu0 0.0
        %945 = vmatpush2.msra.mxu0 0.0
        %946 = vmatprep.subr.mxu0 0.0
        %947 = vmatpush2.msra.mxu0 0.0
        %948 = vmatprep.subr.mxu0 0.0
        %949 = vmatpush2.msra.mxu0 0.0
        %950 = vmatprep.subr.mxu0 0.0
        %951 = vmatpush2.msra.mxu0 0.0
        %952 = vmatprep.subr.mxu0 0.0
        %953 = vmatpush2.msra.mxu0 0.0
        %954 = vmatprep.subr.mxu0 0.0
        %955 = vmatpush2.msra.mxu0 0.0
        %956 = vmatprep.mubr.f32.mxu0 0.0
        %957 = vmatmul.mubr.f32.gmra.mxu0 %v878
        %v958 = vpop.f32.mrf.mxu0
        %v959 = vadd.f32 %v859, %v958
        %v960 = vpop.f32.mrf.mxu0
        %961 = vmatprep.mubr.f32.mxu0 0.0
        %962 = vmatmul.mubr.f32.gmra.mxu0 %v881
        %v963 = vpop.f32.mrf.mxu0
        %v964 = vadd.f32 %v864, %v963
        %v965 = vpop.f32.mrf.mxu0
        %966 = vmatprep.mubr.f32.mxu0 0.0
        %967 = vmatmul.mubr.f32.gmra.mxu0 %v884
        %v968 = vpop.f32.mrf.mxu0
        %v969 = vadd.f32 %v869, %v968
        %v970 = vpop.f32.mrf.mxu0
        %971 = vmatprep.mubr.f32.mxu0 0.0
        %972 = vmatmul.mubr.f32.gmra.mxu0 %v887
        %v973 = vpop.f32.mrf.mxu0
        %v974 = vadd.f32 %v874, %v973
        %v975 = vpop.f32.mrf.mxu0
        %976 = vdwg.mxu0
        %v977 = vld [vmem:[%s514] sm:$0xff]
        %v978 = vld [vmem:[%s514 + $0x8] sm:$0xff]
        %v979 = vld [vmem:[%s514 + $0x10] sm:$0xff]
        %v980 = vld [vmem:[%s514 + $0x18] sm:$0xf]
        %v981 = vld [vmem:[%s405] sm:$0xff]
        %v982 = vld [vmem:[%s405 + $0x8] sm:$0x7f]
        %v984 = vsel %vm196, %v977, 0
        %v987 = vsel %vm196, %v978, 0
        %v990 = vsel %vm196, %v979, 0
        %v993 = vsel %vm196, %v980, 0
        %v996 = vsel %vm209, %v982, 0
        %998 = vmatprep.subr.mxu0 0.0
        %999 = vmatpush1.msra.mxu0 0.0
        %1000 = vmatprep.subr.mxu0 0.0
        %1001 = vmatpush1.msra.mxu0 0.0
        %1002 = vmatprep.subr.mxu0 0.0
        %1003 = vmatpush1.msra.mxu0 0.0
        %1004 = vmatprep.subr.mxu0 0.0
        %1005 = vmatpush1.msra.mxu0 0.0
        %1006 = vmatprep.subr.mxu0 0.0
        %1007 = vmatpush1.msra.mxu0 0.0
        %1008 = vmatprep.subr.mxu0 0.0
        %1009 = vmatpush1.msra.mxu0 0.0
        %1010 = vmatprep.subr.mxu0 0.0
        %1011 = vmatpush1.msra.mxu0 0.0
        %1012 = vmatprep.subr.mxu0 0.0
        %1013 = vmatpush1.msra.mxu0 0.0
        %1014 = vmatprep.subr.mxu0 0.0
        %1015 = vmatpush1.msra.mxu0 0.0
        %1016 = vmatprep.subr.mxu0 0.0
        %1017 = vmatpush1.msra.mxu0 0.0
        %1018 = vmatprep.subr.mxu0 0.0
        %1019 = vmatpush1.msra.mxu0 0.0
        %1020 = vmatprep.subr.mxu0 0.0
        %1021 = vmatpush1.msra.mxu0 0.0
        %1022 = vmatprep.subr.mxu0 0.0
        %1023 = vmatpush1.msra.mxu0 0.0
        %1024 = vmatprep.subr.mxu0 0.0
        %1025 = vmatpush1.msra.mxu0 0.0
        %1026 = vmatprep.subr.mxu0 0.0
        %1027 = vmatpush1.msra.mxu0 %v996
        %1028 = vmatprep.subr.mxu0 0.0
        %1029 = vmatpush1.msra.mxu0 %v981
        %1030 = vmatprep.subr.mxu0 0.0
        %1031 = vmatpush2.msra.mxu0 0.0
        %1032 = vmatprep.subr.mxu0 0.0
        %1033 = vmatpush2.msra.mxu0 0.0
        %1034 = vmatprep.subr.mxu0 0.0
        %1035 = vmatpush2.msra.mxu0 0.0
        %1036 = vmatprep.subr.mxu0 0.0
        %1037 = vmatpush2.msra.mxu0 0.0
        %1038 = vmatprep.subr.mxu0 0.0
        %1039 = vmatpush2.msra.mxu0 0.0
        %1040 = vmatprep.subr.mxu0 0.0
        %1041 = vmatpush2.msra.mxu0 0.0
        %1042 = vmatprep.subr.mxu0 0.0
        %1043 = vmatpush2.msra.mxu0 0.0
        %1044 = vmatprep.subr.mxu0 0.0
        %1045 = vmatpush2.msra.mxu0 0.0
        %1046 = vmatprep.subr.mxu0 0.0
        %1047 = vmatpush2.msra.mxu0 0.0
        %1048 = vmatprep.subr.mxu0 0.0
        %1049 = vmatpush2.msra.mxu0 0.0
        %1050 = vmatprep.subr.mxu0 0.0
        %1051 = vmatpush2.msra.mxu0 0.0
        %1052 = vmatprep.subr.mxu0 0.0
        %1053 = vmatpush2.msra.mxu0 0.0
        %1054 = vmatprep.subr.mxu0 0.0
        %1055 = vmatpush2.msra.mxu0 0.0
        %1056 = vmatprep.subr.mxu0 0.0
        %1057 = vmatpush2.msra.mxu0 0.0
        %1058 = vmatprep.subr.mxu0 0.0
        %1059 = vmatpush2.msra.mxu0 0.0
        %1060 = vmatprep.subr.mxu0 0.0
        %1061 = vmatpush2.msra.mxu0 0.0
        %1062 = vmatprep.mubr.f32.mxu0 0.0
        %1063 = vmatmul.mubr.f32.gmra.mxu0 %v984
        %v1064 = vpop.f32.mrf.mxu0
        %v1065 = vadd.f32 0.0, %v1064
        %v1066 = vpop.f32.mrf.mxu0
        %1067 = vmatprep.mubr.f32.mxu0 0.0
        %1068 = vmatmul.mubr.f32.gmra.mxu0 %v987
        %v1069 = vpop.f32.mrf.mxu0
        %v1070 = vadd.f32 0.0, %v1069
        %v1071 = vpop.f32.mrf.mxu0
        %1072 = vmatprep.mubr.f32.mxu0 0.0
        %1073 = vmatmul.mubr.f32.gmra.mxu0 %v990
        %v1074 = vpop.f32.mrf.mxu0
        %v1075 = vadd.f32 0.0, %v1074
        %v1076 = vpop.f32.mrf.mxu0
        %1077 = vmatprep.mubr.f32.mxu0 0.0
        %1078 = vmatmul.mubr.f32.gmra.mxu0 %v993
        %v1079 = vpop.f32.mrf.mxu0
        %v1080 = vadd.f32 0.0, %v1079
        %v1081 = vpop.f32.mrf.mxu0
        %1082 = vdwg.mxu0
        %v1083 = vadd.f32 %v959, %v1065
        %v1084 = vadd.f32 %v964, %v1070
        %v1085 = vadd.f32 %v969, %v1075
        %v1086 = vadd.f32 %v974, %v1080
        %v1087 = vld [vmem:[%s628] sm:$0xff]
        %v1088 = vld [vmem:[%s628 + $0x8] sm:$0xff]
        %v1089 = vld [vmem:[%s628 + $0x10] sm:$0xff]
        %v1090 = vld [vmem:[%s628 + $0x18] sm:$0xf]
        %v1091 = vld [vmem:[%s519] sm:$0xff]
        %v1092 = vld [vmem:[%s519 + $0x8] sm:$0x7f]
        %v1094 = vsel %vm196, %v1087, 0
        %v1097 = vsel %vm196, %v1088, 0
        %v1100 = vsel %vm196, %v1089, 0
        %v1103 = vsel %vm196, %v1090, 0
        %v1106 = vsel %vm209, %v1092, 0
        %1108 = vmatprep.subr.mxu0 0.0
        %1109 = vmatpush1.msra.mxu0 0.0
        %1110 = vmatprep.subr.mxu0 0.0
        %1111 = vmatpush1.msra.mxu0 0.0
        %1112 = vmatprep.subr.mxu0 0.0
        %1113 = vmatpush1.msra.mxu0 0.0
        %1114 = vmatprep.subr.mxu0 0.0
        %1115 = vmatpush1.msra.mxu0 0.0
        %1116 = vmatprep.subr.mxu0 0.0
        %1117 = vmatpush1.msra.mxu0 0.0
        %1118 = vmatprep.subr.mxu0 0.0
        %1119 = vmatpush1.msra.mxu0 0.0
        %1120 = vmatprep.subr.mxu0 0.0
        %1121 = vmatpush1.msra.mxu0 0.0
        %1122 = vmatprep.subr.mxu0 0.0
        %1123 = vmatpush1.msra.mxu0 0.0
        %1124 = vmatprep.subr.mxu0 0.0
        %1125 = vmatpush1.msra.mxu0 0.0
        %1126 = vmatprep.subr.mxu0 0.0
        %1127 = vmatpush1.msra.mxu0 0.0
        %1128 = vmatprep.subr.mxu0 0.0
        %1129 = vmatpush1.msra.mxu0 0.0
        %1130 = vmatprep.subr.mxu0 0.0
        %1131 = vmatpush1.msra.mxu0 0.0
        %1132 = vmatprep.subr.mxu0 0.0
        %1133 = vmatpush1.msra.mxu0 0.0
        %1134 = vmatprep.subr.mxu0 0.0
        %1135 = vmatpush1.msra.mxu0 0.0
        %1136 = vmatprep.subr.mxu0 0.0
        %1137 = vmatpush1.msra.mxu0 %v1106
        %1138 = vmatprep.subr.mxu0 0.0
        %1139 = vmatpush1.msra.mxu0 %v1091
        %1140 = vmatprep.subr.mxu0 0.0
        %1141 = vmatpush2.msra.mxu0 0.0
        %1142 = vmatprep.subr.mxu0 0.0
        %1143 = vmatpush2.msra.mxu0 0.0
        %1144 = vmatprep.subr.mxu0 0.0
        %1145 = vmatpush2.msra.mxu0 0.0
        %1146 = vmatprep.subr.mxu0 0.0
        %1147 = vmatpush2.msra.mxu0 0.0
        %1148 = vmatprep.subr.mxu0 0.0
        %1149 = vmatpush2.msra.mxu0 0.0
        %1150 = vmatprep.subr.mxu0 0.0
        %1151 = vmatpush2.msra.mxu0 0.0
        %1152 = vmatprep.subr.mxu0 0.0
        %1153 = vmatpush2.msra.mxu0 0.0
        %1154 = vmatprep.subr.mxu0 0.0
        %1155 = vmatpush2.msra.mxu0 0.0
        %1156 = vmatprep.subr.mxu0 0.0
        %1157 = vmatpush2.msra.mxu0 0.0
        %1158 = vmatprep.subr.mxu0 0.0
        %1159 = vmatpush2.msra.mxu0 0.0
        %1160 = vmatprep.subr.mxu0 0.0
        %1161 = vmatpush2.msra.mxu0 0.0
        %1162 = vmatprep.subr.mxu0 0.0
        %1163 = vmatpush2.msra.mxu0 0.0
        %1164 = vmatprep.subr.mxu0 0.0
        %1165 = vmatpush2.msra.mxu0 0.0
        %1166 = vmatprep.subr.mxu0 0.0
        %1167 = vmatpush2.msra.mxu0 0.0
        %1168 = vmatprep.subr.mxu0 0.0
        %1169 = vmatpush2.msra.mxu0 0.0
        %1170 = vmatprep.subr.mxu0 0.0
        %1171 = vmatpush2.msra.mxu0 0.0
        %1172 = vmatprep.mubr.f32.mxu0 0.0
        %1173 = vmatmul.mubr.f32.gmra.mxu0 %v1094
        %v1174 = vpop.f32.mrf.mxu0
        %v1175 = vadd.f32 0.0, %v1174
        %v1176 = vpop.f32.mrf.mxu0
        %1177 = vmatprep.mubr.f32.mxu0 0.0
        %1178 = vmatmul.mubr.f32.gmra.mxu0 %v1097
        %v1179 = vpop.f32.mrf.mxu0
        %v1180 = vadd.f32 0.0, %v1179
        %v1181 = vpop.f32.mrf.mxu0
        %1182 = vmatprep.mubr.f32.mxu0 0.0
        %1183 = vmatmul.mubr.f32.gmra.mxu0 %v1100
        %v1184 = vpop.f32.mrf.mxu0
        %v1185 = vadd.f32 0.0, %v1184
        %v1186 = vpop.f32.mrf.mxu0
        %1187 = vmatprep.mubr.f32.mxu0 0.0
        %1188 = vmatmul.mubr.f32.gmra.mxu0 %v1103
        %v1189 = vpop.f32.mrf.mxu0
        %v1190 = vadd.f32 0.0, %v1189
        %v1191 = vpop.f32.mrf.mxu0
        %1192 = vdwg.mxu0
        %v1193 = vadd.f32 %v1083, %v1175
        %v1194 = vadd.f32 %v1084, %v1180
        %v1195 = vadd.f32 %v1085, %v1185
        %v1196 = vadd.f32 %v1086, %v1190
        %s1197 = sadd.s32 %s177, 5
        %s1198 = smul.u32 %s1197, 32
        %s1199 = scalar_lea.vmem %s165, %s1198
        %v1200 = vld [vmem:[%s1199] sm:$0xff]
        %v1201 = vld [vmem:[%s1199 + $0x8] sm:$0xff]
        %v1202 = vld [vmem:[%s1199 + $0x10] sm:$0xff]
        %v1203 = vld [vmem:[%s1199 + $0x18] sm:$0xf]
        %v1204 = vld [vmem:[%s633] sm:$0xff]
        %v1205 = vld [vmem:[%s633 + $0x8] sm:$0x7f]
        %v1207 = vsel %vm196, %v1200, 0
        %v1210 = vsel %vm196, %v1201, 0
        %v1213 = vsel %vm196, %v1202, 0
        %v1216 = vsel %vm196, %v1203, 0
        %v1219 = vsel %vm209, %v1205, 0
        %1221 = vmatprep.subr.mxu0 0.0
        %1222 = vmatpush1.msra.mxu0 0.0
        %1223 = vmatprep.subr.mxu0 0.0
        %1224 = vmatpush1.msra.mxu0 0.0
        %1225 = vmatprep.subr.mxu0 0.0
        %1226 = vmatpush1.msra.mxu0 0.0
        %1227 = vmatprep.subr.mxu0 0.0
        %1228 = vmatpush1.msra.mxu0 0.0
        %1229 = vmatprep.subr.mxu0 0.0
        %1230 = vmatpush1.msra.mxu0 0.0
        %1231 = vmatprep.subr.mxu0 0.0
        %1232 = vmatpush1.msra.mxu0 0.0
        %1233 = vmatprep.subr.mxu0 0.0
        %1234 = vmatpush1.msra.mxu0 0.0
        %1235 = vmatprep.subr.mxu0 0.0
        %1236 = vmatpush1.msra.mxu0 0.0
        %1237 = vmatprep.subr.mxu0 0.0
        %1238 = vmatpush1.msra.mxu0 0.0
        %1239 = vmatprep.subr.mxu0 0.0
        %1240 = vmatpush1.msra.mxu0 0.0
        %1241 = vmatprep.subr.mxu0 0.0
        %1242 = vmatpush1.msra.mxu0 0.0
        %1243 = vmatprep.subr.mxu0 0.0
        %1244 = vmatpush1.msra.mxu0 0.0
        %1245 = vmatprep.subr.mxu0 0.0
        %1246 = vmatpush1.msra.mxu0 0.0
        %1247 = vmatprep.subr.mxu0 0.0
        %1248 = vmatpush1.msra.mxu0 0.0
        %1249 = vmatprep.subr.mxu0 0.0
        %1250 = vmatpush1.msra.mxu0 %v1219
        %1251 = vmatprep.subr.mxu0 0.0
        %1252 = vmatpush1.msra.mxu0 %v1204
        %1253 = vmatprep.subr.mxu0 0.0
        %1254 = vmatpush2.msra.mxu0 0.0
        %1255 = vmatprep.subr.mxu0 0.0
        %1256 = vmatpush2.msra.mxu0 0.0
        %1257 = vmatprep.subr.mxu0 0.0
        %1258 = vmatpush2.msra.mxu0 0.0
        %1259 = vmatprep.subr.mxu0 0.0
        %1260 = vmatpush2.msra.mxu0 0.0
        %1261 = vmatprep.subr.mxu0 0.0
        %1262 = vmatpush2.msra.mxu0 0.0
        %1263 = vmatprep.subr.mxu0 0.0
        %1264 = vmatpush2.msra.mxu0 0.0
        %1265 = vmatprep.subr.mxu0 0.0
        %1266 = vmatpush2.msra.mxu0 0.0
        %1267 = vmatprep.subr.mxu0 0.0
        %1268 = vmatpush2.msra.mxu0 0.0
        %1269 = vmatprep.subr.mxu0 0.0
        %1270 = vmatpush2.msra.mxu0 0.0
        %1271 = vmatprep.subr.mxu0 0.0
        %1272 = vmatpush2.msra.mxu0 0.0
        %1273 = vmatprep.subr.mxu0 0.0
        %1274 = vmatpush2.msra.mxu0 0.0
        %1275 = vmatprep.subr.mxu0 0.0
        %1276 = vmatpush2.msra.mxu0 0.0
        %1277 = vmatprep.subr.mxu0 0.0
        %1278 = vmatpush2.msra.mxu0 0.0
        %1279 = vmatprep.subr.mxu0 0.0
        %1280 = vmatpush2.msra.mxu0 0.0
        %1281 = vmatprep.subr.mxu0 0.0
        %1282 = vmatpush2.msra.mxu0 0.0
        %1283 = vmatprep.subr.mxu0 0.0
        %1284 = vmatpush2.msra.mxu0 0.0
        %1285 = vmatprep.mubr.f32.mxu0 0.0
        %1286 = vmatmul.mubr.f32.gmra.mxu0 %v1207
        %v1287 = vpop.f32.mrf.mxu0
        %v1288 = vadd.f32 0.0, %v1287
        %v1289 = vpop.f32.mrf.mxu0
        %1290 = vmatprep.mubr.f32.mxu0 0.0
        %1291 = vmatmul.mubr.f32.gmra.mxu0 %v1210
        %v1292 = vpop.f32.mrf.mxu0
        %v1293 = vadd.f32 0.0, %v1292
        %v1294 = vpop.f32.mrf.mxu0
        %1295 = vmatprep.mubr.f32.mxu0 0.0
        %1296 = vmatmul.mubr.f32.gmra.mxu0 %v1213
        %v1297 = vpop.f32.mrf.mxu0
        %v1298 = vadd.f32 0.0, %v1297
        %v1299 = vpop.f32.mrf.mxu0
        %1300 = vmatprep.mubr.f32.mxu0 0.0
        %1301 = vmatmul.mubr.f32.gmra.mxu0 %v1216
        %v1302 = vpop.f32.mrf.mxu0
        %v1303 = vadd.f32 0.0, %v1302
        %v1304 = vpop.f32.mrf.mxu0
        %1305 = vdwg.mxu0
        %v1306 = vadd.f32 %v1193, %v1288
        %v1307 = vadd.f32 %v1194, %v1293
        %v1308 = vadd.f32 %v1195, %v1298
        %v1309 = vadd.f32 %v1196, %v1303
        %v1310 = vld [vmem:[%s2] sm:$0x1]
        %v1312 = vlaneseq
        %v1313 = vshrl.u32 %v1312, 7
        %v1314 = vsub.s32 0, %v1313
        %v1315 = vrot.slane %v1310, %v1314
        %v1317 = vadd.f32 %v1306, %v1315
        %v1318 = vadd.f32 %v1307, %v1315
        %v1319 = vadd.f32 %v1308, %v1315
        %v1320 = vadd.f32 %v1309, %v1315
        %v1321 = vmax.f32 %v1317, 0.0
        %v1322 = vmax.f32 %v1318, 0.0
        %v1323 = vmax.f32 %v1319, 0.0
        %v1324 = vmax.f32 %v1320, 0.0
        %v1325 = vmax.f32 %v761, %v1321
        %v1326 = vmax.f32 %v762, %v1322
        %v1327 = vmax.f32 %v763, %v1323
        %v1328 = vmax.f32 %v764, %v1324
        %1329 = vst.msk [vmem:[#allocation2] sm:$0xff] %vm755, %v1325
        %1330 = vst.msk [vmem:[#allocation2 + $0x8] sm:$0xff] %vm755, %v1326
        %1331 = vst.msk [vmem:[#allocation2 + $0x10] sm:$0xff] %vm755, %v1327
        %1332 = vst.msk [vmem:[#allocation2 + $0x18] sm:$0xf] %vm759, %v1328
        %v1333 = vld [vmem:[#allocation2] ss:$2 sm:$0xff]
        %s1334 = scalar_lea.vmem [#allocation2], 16
        %v1335 = vld [vmem:[%s1334] ss:$2 sm:$0x3f]
        %s1336 = scalar_lea.vmem [#allocation2], 1
        %v1337 = vld [vmem:[%s1336] ss:$2 sm:$0xff]
        %s1338 = scalar_lea.vmem [#allocation2], 17
        %v1339 = vld [vmem:[%s1338] ss:$2 sm:$0x3f]
        %v1340 = vmax.f32 %v1333, %v1337
        %v1341 = vmax.f32 %v1335, %v1339
        %s1342 = smul.u32 %s172, 16
        %s1343 = scalar_lea.vmem %s170, %s1342
        %1344 = vst.msk [vmem:[%s1343] sm:$0xff] %vm755, %v1340
        %vm1345 = vcmask 46080
        %1346 = vst.msk [vmem:[%s1343 + $0x8] sm:$0x3f] %vm1345, %v1341
      $region37: #{forward.3} parent=31 // loop_footer
        %s176 = sadd.s32 1, %s172
      $region38: #{forward.3} parent=31 // loop_footer_branch
        %171 = sbr.rel target = $region34
      $region39: #{forward.3} parent=31 // loop_exit
        _
      %p1347 = scmp.lt.s32.totalorder %s14, 1
      %s1348 = scalar_select %p1347, %s14, 1
      %s1349 = smul.addr %s1348, 28
      %s1350 = smul.addr %s1349, 8
      %s1351 = scalar_lea.vmem %s3, %s1350
      // Predicated region
      $region40: #{forward.3} parent=31 // pred_check
        %p1352 = pneg %p100
      $region41: #{forward.3} parent=31 // pred_check_branch
        %1354 = sbr.rel (%p1352) target = $region43
      $region42: #{forward.3} parent=31 // pred_region
        _
      $region43: #{forward.3} parent=31 // pred_fallthru
        _
    $region32: #{forward.3} parent=5 // pred_fallthru
      _
    %p1355 = scmp.le.s32.totalorder 2, %s9
    // Predicated region
    $region44: #{forward.3} parent=5 // pred_check
      %p1356 = pneg %p1355
    $region45: #{forward.3} parent=5 // pred_check_branch
      %1358 = sbr.rel (%p1356) target = $region47
    $region46: #{forward.3} parent=5 // pred_region
      %s1359 = ssub.s32 %s9, 2
      // Predicated region
      $region48: #{forward.3} parent=46 // pred_check
        %p1360 = pneg %p106
      $region49: #{forward.3} parent=46 // pred_check_branch
        %1362 = sbr.rel (%p1360) target = $region51
      $region50: #{forward.3} parent=46 // pred_region
        %p1363 = scmp.lt.s32.totalorder %s15, 1
        %s1364 = scalar_select %p1363, %s15, 1
        %s1365 = smul.addr %s1364, 28
        %s1366 = smul.addr %s1365, 8
        %s1367 = scalar_lea.vmem %s3, %s1366
      $region51: #{forward.3} parent=46 // pred_fallthru
        _
    $region47: #{forward.3} parent=5 // pred_fallthru
      _
  $region6: #{forward.3} parent=0 // loop_footer
    %s13 = sadd.s32 1, %s9
  $region7: #{forward.3} parent=0 // loop_footer_branch
    %8 = sbr.rel target = $region3
  $region8: #{forward.3} parent=0 // loop_exit
    _

// kernel: forward.4
$region0: #{forward.4}
  #allocation0 [shape = 'u32[]', space=smem, size = 0x4, offset = 0x4, fixed_abs, tag = 'smem constant byte address 0x4 - core index']
  #allocation1 [shape = 'u32[144,128]{1,0:T(1,128)}', space=vmem, size = 0x12000, scoped, tag = 'internal scratch']
  #allocation2 [shape = 'f32[10,16]{1,0:T(8,128)}', space=vmem, size = 0x2000, scoped, tag = 'scratch operand']
  %s0 = inlined_call_operand.vmem [shape: f32[2,14,10,30], index: 0, kind: input, shape index: {}]
  %s1 = inlined_call_operand.vmem [shape: f32[5,30,16], index: 1, kind: input, shape index: {}]
  %s2 = inlined_call_operand.vmem [shape: f32[1,16], index: 2, kind: input, shape index: {}]
  %s3 = inlined_call_operand.vmem [shape: f32[2,5,5,16], index: 3, kind: output, shape index: {}]
  %s4 = sld [smem:[#allocation0]]
  $region52: #{forward.4} parent=0
    _
  %s6 = ssub.s32 1, %s4
  %s7 = scalar_select 0, %s6, %s4
  loop: start=0, step=1, limit=4
  $region2: #{forward.4} parent=0 // loop_pre_header
    _
  $region3: #{forward.4} parent=0 // loop_header
    %s9 = sphi 0, %s13
    %p10 = scmp.ge.s32.totalorder %s9, 4
    %s19 = sphi 0, %s21
    %s22 = sphi 0, %s19
    %s23 = sphi 0, %s22
    %s39 = sphi 0, %s23
    %s43 = sphi 0, %s43
    %s45 = sphi 0, %s43
    %s46 = sphi 0, %s45
    %s60 = sphi 0, %s46
    %s64 = sphi 0, %s64
    %s66 = sphi 0, %s64
    %s67 = sphi 0, %s66
    %s81 = sphi 0, %s67
    %s87 = sphi 0, %s89
    %s90 = sphi 0, %s87
    %s91 = sphi 0, %s90
    %s107 = sphi 0, %s91
  $region4: #{forward.4} parent=0 // loop_header_branch
    %12 = sbr.rel (%p10) target = $region8
  $region5: #{forward.4} parent=0 // loop_body
    %s14 = ssub.s32 %s9, 1
    %s15 = ssub.s32 %s9, 2
    %s16 = sadd.s32 %s9, 1
    %s17 = ssub.s32 %s9, %s16
    %p18 = scmp.eq.s32.totalorder %s17, 0
    %s20 = sadd.s32 %s19, 1
    %s21 = scalar_select %p18, %s19, %s20
    %p24 = pneg %p18
    %p25 = scmp.eq.s32.totalorder %s9, 1
    %p26 = por %p24, %p25
    %p27 = scmp.ne.s32.totalorder %s19, %s22
    %p28 = scmp.eq.s32.totalorder %s9, 0
    %p29 = por %p27, %p28
    %p30 = scmp.ne.s32.totalorder %s19, %s22
    %p31 = scmp.eq.s32.totalorder %s14, 1
    %p32 = por %p30, %p31
    %p33 = scmp.ne.s32.totalorder %s22, %s23
    %p34 = scmp.eq.s32.totalorder %s14, 0
    %p35 = por %p33, %p34
    %p36 = scmp.ne.s32.totalorder %s22, %s23
    %p37 = scmp.eq.s32.totalorder %s15, 1
    %p38 = por %p36, %p37
    %p40 = scmp.ne.s32.totalorder %s23, %s39
    %p41 = scmp.eq.s32.totalorder %s15, 0
    %p42 = por %p40, %p41
    %s44 = sadd.s32 %s43, 1
    %p47 = scmp.eq.s32.totalorder %s9, 1
    %p48 = scmp.ne.s32.totalorder %s43, %s45
    %p49 = scmp.eq.s32.totalorder %s9, 0
    %p50 = por %p48, %p49
    %p51 = scmp.ne.s32.totalorder %s43, %s45
    %p52 = scmp.eq.s32.totalorder %s14, 1
    %p53 = por %p51, %p52
    %p54 = scmp.ne.s32.totalorder %s45, %s46
    %p55 = scmp.eq.s32.totalorder %s14, 0
    %p56 = por %p54, %p55
    %p57 = scmp.ne.s32.totalorder %s45, %s46
    %p58 = scmp.eq.s32.totalorder %s15, 1
    %p59 = por %p57, %p58
    %p61 = scmp.ne.s32.totalorder %s46, %s60
    %p62 = scmp.eq.s32.totalorder %s15, 0
    %p63 = por %p61, %p62
    %s65 = sadd.s32 %s64, 1
    %p68 = scmp.eq.s32.totalorder %s9, 1
    %p69 = scmp.ne.s32.totalorder %s64, %s66
    %p70 = scmp.eq.s32.totalorder %s9, 0
    %p71 = por %p69, %p70
    %p72 = scmp.ne.s32.totalorder %s64, %s66
    %p73 = scmp.eq.s32.totalorder %s14, 1
    %p74 = por %p72, %p73
    %p75 = scmp.ne.s32.totalorder %s66, %s67
    %p76 = scmp.eq.s32.totalorder %s14, 0
    %p77 = por %p75, %p76
    %p78 = scmp.ne.s32.totalorder %s66, %s67
    %p79 = scmp.eq.s32.totalorder %s15, 1
    %p80 = por %p78, %p79
    %p82 = scmp.ne.s32.totalorder %s67, %s81
    %p83 = scmp.eq.s32.totalorder %s15, 0
    %p84 = por %p82, %p83
    %s85 = ssub.s32 %s9, %s16
    %p86 = scmp.eq.s32.totalorder %s85, 0
    %s88 = sadd.s32 %s87, 1
    %s89 = scalar_select %p86, %s87, %s88
    %p92 = pneg %p86
    %p93 = scmp.eq.s32.totalorder %s9, 1
    %p94 = por %p92, %p93
    %p95 = scmp.ne.s32.totalorder %s87, %s90
    %p96 = scmp.eq.s32.totalorder %s9, 0
    %p97 = por %p95, %p96
    %p98 = scmp.ne.s32.totalorder %s87, %s90
    %p99 = scmp.eq.s32.totalorder %s14, 1
    %p100 = por %p98, %p99
    %p101 = scmp.ne.s32.totalorder %s90, %s91
    %p102 = scmp.eq.s32.totalorder %s14, 0
    %p103 = por %p101, %p102
    %p104 = scmp.ne.s32.totalorder %s90, %s91
    %p105 = scmp.eq.s32.totalorder %s15, 1
    %p106 = por %p104, %p105
    %p108 = scmp.ne.s32.totalorder %s91, %s107
    %p109 = scmp.eq.s32.totalorder %s15, 0
    %p110 = por %p108, %p109
    %p111 = scmp.le.s32.totalorder 1, %s9
    %p112 = scmp.lt.s32.totalorder %s9, 3
    %p113 = pnand %p111, %p112
    %p114 = pneg %p113
    // Predicated region
    $region9: #{forward.4} parent=5 // pred_check
      _
    $region10: #{forward.4} parent=5 // pred_check_branch
      %116 = sbr.rel (%p113) target = $region12
    $region11: #{forward.4} parent=5 // pred_region
      %s117 = ssub.s32 %s9, 1
      // Predicated region
      $region13: #{forward.4} parent=11 // pred_check
        %p118 = pneg %p56
      $region14: #{forward.4} parent=11 // pred_check_branch
        %120 = sbr.rel (%p118) target = $region16
      $region15: #{forward.4} parent=11 // pred_region
        _
      $region16: #{forward.4} parent=11 // pred_fallthru
        _
      // Predicated region
      $region17: #{forward.4} parent=11 // pred_check
        %p121 = pneg %p77
      $region18: #{forward.4} parent=11 // pred_check_branch
        %123 = sbr.rel (%p121) target = $region20
      $region19: #{forward.4} parent=11 // pred_region
        _
      $region20: #{forward.4} parent=11 // pred_fallthru
        _
    $region12: #{forward.4} parent=5 // pred_fallthru
      _
    %p124 = scmp.lt.s32.totalorder %s9, 2
    // Predicated region
    $region21: #{forward.4} parent=5 // pred_check
      %p125 = pneg %p124
    $region22: #{forward.4} parent=5 // pred_check_branch
      %127 = sbr.rel (%p125) target = $region24
    $region23: #{forward.4} parent=5 // pred_region
      // Predicated region
      $region25: #{forward.4} parent=23 // pred_check
        %p128 = pneg %p29
      $region26: #{forward.4} parent=23 // pred_check_branch
        %130 = sbr.rel (%p128) target = $region28
      $region27: #{forward.4} parent=23 // pred_region
        %p131 = scmp.lt.s32.totalorder %s9, 1
        %s132 = scalar_select %p131, %s9, 1
        %s133 = smul.addr %s132, 28
        %s134 = smul.addr %s133, 8
        %s135 = scalar_lea.vmem %s0, %s134
      $region28: #{forward.4} parent=23 // pred_fallthru
        _
    $region24: #{forward.4} parent=5 // pred_fallthru
      _
    %p136 = scmp.le.s32.totalorder 1, %s9
    %p137 = scmp.lt.s32.totalorder %s9, 3
    %p138 = pnand %p136, %p137
    %p139 = pneg %p138
    // Predicated region
    $region29: #{forward.4} parent=5 // pred_check
      _
    $region30: #{forward.4} parent=5 // pred_check_branch
      %141 = sbr.rel (%p138) target = $region32
    $region31: #{forward.4} parent=5 // pred_region
      %s142 = ssub.s32 %s9, 1
      %p143 = scmp.lt.s32.totalorder %s14, 1
      %s144 = scalar_select %p143, %s14, 1
      %s145 = smul.addr %s144, 28
      %s146 = smul.addr %s145, 8
      %s147 = scalar_lea.vmem %s0, %s146
      %p148 = pneg %p35
      %p149 = pneg %p32
      %p150 = pneg %p56
      %p151 = pneg %p53
      %p152 = pneg %p77
      %p153 = pneg %p74
      %p154 = pneg %p103
      %p155 = pneg %p100
      %p156 = scmp.lt.s32.totalorder %s14, 1
      %s157 = scalar_select %p156, %s14, 1
      %s158 = smul.addr %s157, 5
      %s159 = smul.addr %s158, 8
      %s160 = scalar_lea.vmem %s3, %s159
      %p161 = scmp.lt.s32.totalorder %s14, 1
      %s162 = scalar_select %p161, %s14, 1
      %s163 = smul.addr %s162, 28
      %s164 = smul.addr %s163, 8
      %s165 = scalar_lea.vmem %s0, %s164
      %p166 = scmp.lt.s32.totalorder %s14, 1
      %s167 = scalar_select %p166, %s14, 1
      %s168 = smul.addr %s167, 5
      %s169 = smul.addr %s168, 8
      %s170 = scalar_lea.vmem %s3, %s169
      loop: start=0, step=1, limit=5
      $region33: #{forward.4} parent=31 // loop_pre_header
        _
      $region34: #{forward.4} parent=31 // loop_header
        %s172 = sphi 0, %s176
        %p173 = scmp.ge.s32.totalorder %s172, 5
      $region35: #{forward.4} parent=31 // loop_header_branch
        %175 = sbr.rel (%p173) target = $region39
      $region36: #{forward.4} parent=31 // loop_body
        %s177 = smul.u32 %s172, 2
        %s178 = smul.u32 %s177, 16
        %s179 = scalar_lea.vmem %s165, %s178
        %v180 = vld [vmem:[%s179] sm:$0xff]
        %v181 = vld [vmem:[%s179 + $0x8] sm:$0x3]
        %v182 = vld [vmem:[%s1] sm:$0xff]
        %v183 = vld [vmem:[%s1 + $0x8] sm:$0xff]
        %v184 = vld [vmem:[%s1 + $0x10] sm:$0xff]
        %v185 = vld [vmem:[%s1 + $0x18] sm:$0x3f]
        %s186 = sadd.s32 %s177, 1
        %s187 = smul.u32 %s186, 16
        %s188 = scalar_lea.vmem %s165, %s187
        %v189 = vld [vmem:[%s188] sm:$0xff]
        %v190 = vld [vmem:[%s188 + $0x8] sm:$0x3]
        %s191 = scalar_lea.vmem %s1, 32
        %v192 = vld [vmem:[%s191] sm:$0xff]
        %v193 = vld [vmem:[%s191 + $0x8] sm:$0xff]
        %v194 = vld [vmem:[%s191 + $0x10] sm:$0xff]
        %v195 = vld [vmem:[%s191 + $0x18] sm:$0x3f]
        %vm196 = vcmask 244736
        %v198 = vsel %vm196, %v189, 0
        %v201 = vsel %vm196, %v190, 0
        %vm203 = vcmask 1045504
        %v205 = vsel %vm203, %v195, 0
        %207 = vmatprep.subr.mxu0 0.0
        %208 = vmatpush1.msra.mxu0 0.0
        %209 = vmatprep.subr.mxu0 0.0
        %210 = vmatpush1.msra.mxu0 0.0
        %211 = vmatprep.subr.mxu0 0.0
        %212 = vmatpush1.msra.mxu0 0.0
        %213 = vmatprep.subr.mxu0 0.0
        %214 = vmatpush1.msra.mxu0 0.0
        %215 = vmatprep.subr.mxu0 0.0
        %216 = vmatpush1.msra.mxu0 0.0
        %217 = vmatprep.subr.mxu0 0.0
        %218 = vmatpush1.msra.mxu0 0.0
        %219 = vmatprep.subr.mxu0 0.0
        %220 = vmatpush1.msra.mxu0 0.0
        %221 = vmatprep.subr.mxu0 0.0
        %222 = vmatpush1.msra.mxu0 0.0
        %223 = vmatprep.subr.mxu0 0.0
        %224 = vmatpush1.msra.mxu0 0.0
        %225 = vmatprep.subr.mxu0 0.0
        %226 = vmatpush1.msra.mxu0 0.0
        %227 = vmatprep.subr.mxu0 0.0
        %228 = vmatpush1.msra.mxu0 0.0
        %229 = vmatprep.subr.mxu0 0.0
        %230 = vmatpush1.msra.mxu0 0.0
        %231 = vmatprep.subr.mxu0 0.0
        %232 = vmatpush1.msra.mxu0 %v205
        %233 = vmatprep.subr.mxu0 0.0
        %234 = vmatpush1.msra.mxu0 %v194
        %235 = vmatprep.subr.mxu0 0.0
        %236 = vmatpush1.msra.mxu0 %v193
        %237 = vmatprep.subr.mxu0 0.0
        %238 = vmatpush1.msra.mxu0 %v192
        %239 = vmatprep.subr.mxu0 0.0
        %240 = vmatpush2.msra.mxu0 0.0
        %241 = vmatprep.subr.mxu0 0.0
        %242 = vmatpush2.msra.mxu0 0.0
        %243 = vmatprep.subr.mxu0 0.0
        %244 = vmatpush2.msra.mxu0 0.0
        %245 = vmatprep.subr.mxu0 0.0
        %246 = vmatpush2.msra.mxu0 0.0
        %247 = vmatprep.subr.mxu0 0.0
        %248 = vmatpush2.msra.mxu0 0.0
        %249 = vmatprep.subr.mxu0 0.0
        %250 = vmatpush2.msra.mxu0 0.0
        %251 = vmatprep.subr.mxu0 0.0
        %252 = vmatpush2.msra.mxu0 0.0
        %253 = vmatprep.subr.mxu0 0.0
        %254 = vmatpush2.msra.mxu0 0.0
        %255 = vmatprep.subr.mxu0 0.0
        %256 = vmatpush2.msra.mxu0 0.0
        %257 = vmatprep.subr.mxu0 0.0
        %258 = vmatpush2.msra.mxu0 0.0
        %259 = vmatprep.subr.mxu0 0.0
        %260 = vmatpush2.msra.mxu0 0.0
        %261 = vmatprep.subr.mxu0 0.0
        %262 = vmatpush2.msra.mxu0 0.0
        %263 = vmatprep.subr.mxu0 0.0
        %264 = vmatpush2.msra.mxu0 0.0
        %265 = vmatprep.subr.mxu0 0.0
        %266 = vmatpush2.msra.mxu0 0.0
        %267 = vmatprep.subr.mxu0 0.0
        %268 = vmatpush2.msra.mxu0 0.0
        %269 = vmatprep.subr.mxu0 0.0
        %270 = vmatpush2.msra.mxu0 0.0
        %271 = vmatprep.mubr.f32.mxu0 0.0
        %272 = vmatmul.mubr.f32.gmra.mxu0 %v198
        %v273 = vpop.f32.mrf.mxu0
        %v274 = vadd.f32 0.0, %v273
        %v275 = vpop.f32.mrf.mxu0
        %276 = vmatprep.mubr.f32.mxu0 0.0
        %277 = vmatmul.mubr.f32.gmra.mxu0 %v201
        %v278 = vpop.f32.mrf.mxu0
        %v279 = vadd.f32 0.0, %v278
        %v280 = vpop.f32.mrf.mxu0
        %281 = vdwg.mxu0
        %v283 = vsel %vm196, %v180, 0
        %v286 = vsel %vm196, %v181, 0
        %v289 = vsel %vm203, %v185, 0
        %291 = vmatprep.subr.mxu0 0.0
        %292 = vmatpush1.msra.mxu0 0.0
        %293 = vmatprep.subr.mxu0 0.0
        %294 = vmatpush1.msra.mxu0 0.0
        %295 = vmatprep.subr.mxu0 0.0
        %296 = vmatpush1.msra.mxu0 0.0
        %297 = vmatprep.subr.mxu0 0.0
        %298 = vmatpush1.msra.mxu0 0.0
        %299 = vmatprep.subr.mxu0 0.0
        %300 = vmatpush1.msra.mxu0 0.0
        %301 = vmatprep.subr.mxu0 0.0
        %302 = vmatpush1.msra.mxu0 0.0
        %303 = vmatprep.subr.mxu0 0.0
        %304 = vmatpush1.msra.mxu0 0.0
        %305 = vmatprep.subr.mxu0 0.0
        %306 = vmatpush1.msra.mxu0 0.0
        %307 = vmatprep.subr.mxu0 0.0
        %308 = vmatpush1.msra.mxu0 0.0
        %309 = vmatprep.subr.mxu0 0.0
        %310 = vmatpush1.msra.mxu0 0.0
        %311 = vmatprep.subr.mxu0 0.0
        %312 = vmatpush1.msra.mxu0 0.0
        %313 = vmatprep.subr.mxu0 0.0
        %314 = vmatpush1.msra.mxu0 0.0
        %315 = vmatprep.subr.mxu0 0.0
        %316 = vmatpush1.msra.mxu0 %v289
        %317 = vmatprep.subr.mxu0 0.0
        %318 = vmatpush1.msra.mxu0 %v184
        %319 = vmatprep.subr.mxu0 0.0
        %320 = vmatpush1.msra.mxu0 %v183
        %321 = vmatprep.subr.mxu0 0.0
        %322 = vmatpush1.msra.mxu0 %v182
        %323 = vmatprep.subr.mxu0 0.0
        %324 = vmatpush2.msra.mxu0 0.0
        %325 = vmatprep.subr.mxu0 0.0
        %326 = vmatpush2.msra.mxu0 0.0
        %327 = vmatprep.subr.mxu0 0.0
        %328 = vmatpush2.msra.mxu0 0.0
        %329 = vmatprep.subr.mxu0 0.0
        %330 = vmatpush2.msra.mxu0 0.0
        %331 = vmatprep.subr.mxu0 0.0
        %332 = vmatpush2.msra.mxu0 0.0
        %333 = vmatprep.subr.mxu0 0.0
        %334 = vmatpush2.msra.mxu0 0.0
        %335 = vmatprep.subr.mxu0 0.0
        %336 = vmatpush2.msra.mxu0 0.0
        %337 = vmatprep.subr.mxu0 0.0
        %338 = vmatpush2.msra.mxu0 0.0
        %339 = vmatprep.subr.mxu0 0.0
        %340 = vmatpush2.msra.mxu0 0.0
        %341 = vmatprep.subr.mxu0 0.0
        %342 = vmatpush2.msra.mxu0 0.0
        %343 = vmatprep.subr.mxu0 0.0
        %344 = vmatpush2.msra.mxu0 0.0
        %345 = vmatprep.subr.mxu0 0.0
        %346 = vmatpush2.msra.mxu0 0.0
        %347 = vmatprep.subr.mxu0 0.0
        %348 = vmatpush2.msra.mxu0 0.0
        %349 = vmatprep.subr.mxu0 0.0
        %350 = vmatpush2.msra.mxu0 0.0
        %351 = vmatprep.subr.mxu0 0.0
        %352 = vmatpush2.msra.mxu0 0.0
        %353 = vmatprep.subr.mxu0 0.0
        %354 = vmatpush2.msra.mxu0 0.0
        %355 = vmatprep.mubr.f32.mxu0 0.0
        %356 = vmatmul.mubr.f32.gmra.mxu0 %v283
        %v357 = vpop.f32.mrf.mxu0
        %v358 = vadd.f32 %v274, %v357
        %v359 = vpop.f32.mrf.mxu0
        %360 = vmatprep.mubr.f32.mxu0 0.0
        %361 = vmatmul.mubr.f32.gmra.mxu0 %v286
        %v362 = vpop.f32.mrf.mxu0
        %v363 = vadd.f32 %v279, %v362
        %v364 = vpop.f32.mrf.mxu0
        %365 = vdwg.mxu0
        %s366 = sadd.s32 %s177, 2
        %s367 = smul.u32 %s366, 16
        %s368 = scalar_lea.vmem %s165, %s367
        %v369 = vld [vmem:[%s368] sm:$0xff]
        %v370 = vld [vmem:[%s368 + $0x8] sm:$0x3]
        %s371 = scalar_lea.vmem %s1, 64
        %v372 = vld [vmem:[%s371] sm:$0xff]
        %v373 = vld [vmem:[%s371 + $0x8] sm:$0xff]
        %v374 = vld [vmem:[%s371 + $0x10] sm:$0xff]
        %v375 = vld [vmem:[%s371 + $0x18] sm:$0x3f]
        %v377 = vsel %vm196, %v369, 0
        %v380 = vsel %vm196, %v370, 0
        %v383 = vsel %vm203, %v375, 0
        %385 = vmatprep.subr.mxu0 0.0
        %386 = vmatpush1.msra.mxu0 0.0
        %387 = vmatprep.subr.mxu0 0.0
        %388 = vmatpush1.msra.mxu0 0.0
        %389 = vmatprep.subr.mxu0 0.0
        %390 = vmatpush1.msra.mxu0 0.0
        %391 = vmatprep.subr.mxu0 0.0
        %392 = vmatpush1.msra.mxu0 0.0
        %393 = vmatprep.subr.mxu0 0.0
        %394 = vmatpush1.msra.mxu0 0.0
        %395 = vmatprep.subr.mxu0 0.0
        %396 = vmatpush1.msra.mxu0 0.0
        %397 = vmatprep.subr.mxu0 0.0
        %398 = vmatpush1.msra.mxu0 0.0
        %399 = vmatprep.subr.mxu0 0.0
        %400 = vmatpush1.msra.mxu0 0.0
        %401 = vmatprep.subr.mxu0 0.0
        %402 = vmatpush1.msra.mxu0 0.0
        %403 = vmatprep.subr.mxu0 0.0
        %404 = vmatpush1.msra.mxu0 0.0
        %405 = vmatprep.subr.mxu0 0.0
        %406 = vmatpush1.msra.mxu0 0.0
        %407 = vmatprep.subr.mxu0 0.0
        %408 = vmatpush1.msra.mxu0 0.0
        %409 = vmatprep.subr.mxu0 0.0
        %410 = vmatpush1.msra.mxu0 %v383
        %411 = vmatprep.subr.mxu0 0.0
        %412 = vmatpush1.msra.mxu0 %v374
        %413 = vmatprep.subr.mxu0 0.0
        %414 = vmatpush1.msra.mxu0 %v373
        %415 = vmatprep.subr.mxu0 0.0
        %416 = vmatpush1.msra.mxu0 %v372
        %417 = vmatprep.subr.mxu0 0.0
        %418 = vmatpush2.msra.mxu0 0.0
        %419 = vmatprep.subr.mxu0 0.0
        %420 = vmatpush2.msra.mxu0 0.0
        %421 = vmatprep.subr.mxu0 0.0
        %422 = vmatpush2.msra.mxu0 0.0
        %423 = vmatprep.subr.mxu0 0.0
        %424 = vmatpush2.msra.mxu0 0.0
        %425 = vmatprep.subr.mxu0 0.0
        %426 = vmatpush2.msra.mxu0 0.0
        %427 = vmatprep.subr.mxu0 0.0
        %428 = vmatpush2.msra.mxu0 0.0
        %429 = vmatprep.subr.mxu0 0.0
        %430 = vmatpush2.msra.mxu0 0.0
        %431 = vmatprep.subr.mxu0 0.0
        %432 = vmatpush2.msra.mxu0 0.0
        %433 = vmatprep.subr.mxu0 0.0
        %434 = vmatpush2.msra.mxu0 0.0
        %435 = vmatprep.subr.mxu0 0.0
        %436 = vmatpush2.msra.mxu0 0.0
        %437 = vmatprep.subr.mxu0 0.0
        %438 = vmatpush2.msra.mxu0 0.0
        %439 = vmatprep.subr.mxu0 0.0
        %440 = vmatpush2.msra.mxu0 0.0
        %441 = vmatprep.subr.mxu0 0.0
        %442 = vmatpush2.msra.mxu0 0.0
        %443 = vmatprep.subr.mxu0 0.0
        %444 = vmatpush2.msra.mxu0 0.0
        %445 = vmatprep.subr.mxu0 0.0
        %446 = vmatpush2.msra.mxu0 0.0
        %447 = vmatprep.subr.mxu0 0.0
        %448 = vmatpush2.msra.mxu0 0.0
        %449 = vmatprep.mubr.f32.mxu0 0.0
        %450 = vmatmul.mubr.f32.gmra.mxu0 %v377
        %v451 = vpop.f32.mrf.mxu0
        %v452 = vadd.f32 0.0, %v451
        %v453 = vpop.f32.mrf.mxu0
        %454 = vmatprep.mubr.f32.mxu0 0.0
        %455 = vmatmul.mubr.f32.gmra.mxu0 %v380
        %v456 = vpop.f32.mrf.mxu0
        %v457 = vadd.f32 0.0, %v456
        %v458 = vpop.f32.mrf.mxu0
        %459 = vdwg.mxu0
        %v460 = vadd.f32 %v358, %v452
        %v461 = vadd.f32 %v363, %v457
        %s462 = sadd.s32 %s177, 3
        %s463 = smul.u32 %s462, 16
        %s464 = scalar_lea.vmem %s165, %s463
        %v465 = vld [vmem:[%s464] sm:$0xff]
        %v466 = vld [vmem:[%s464 + $0x8] sm:$0x3]
        %s467 = scalar_lea.vmem %s1, 96
        %v468 = vld [vmem:[%s467] sm:$0xff]
        %v469 = vld [vmem:[%s467 + $0x8] sm:$0xff]
        %v470 = vld [vmem:[%s467 + $0x10] sm:$0xff]
        %v471 = vld [vmem:[%s467 + $0x18] sm:$0x3f]
        %v473 = vsel %vm196, %v465, 0
        %v476 = vsel %vm196, %v466, 0
        %v479 = vsel %vm203, %v471, 0
        %481 = vmatprep.subr.mxu0 0.0
        %482 = vmatpush1.msra.mxu0 0.0
        %483 = vmatprep.subr.mxu0 0.0
        %484 = vmatpush1.msra.mxu0 0.0
        %485 = vmatprep.subr.mxu0 0.0
        %486 = vmatpush1.msra.mxu0 0.0
        %487 = vmatprep.subr.mxu0 0.0
        %488 = vmatpush1.msra.mxu0 0.0
        %489 = vmatprep.subr.mxu0 0.0
        %490 = vmatpush1.msra.mxu0 0.0
        %491 = vmatprep.subr.mxu0 0.0
        %492 = vmatpush1.msra.mxu0 0.0
        %493 = vmatprep.subr.mxu0 0.0
        %494 = vmatpush1.msra.mxu0 0.0
        %495 = vmatprep.subr.mxu0 0.0
        %496 = vmatpush1.msra.mxu0 0.0
        %497 = vmatprep.subr.mxu0 0.0
        %498 = vmatpush1.msra.mxu0 0.0
        %499 = vmatprep.subr.mxu0 0.0
        %500 = vmatpush1.msra.mxu0 0.0
        %501 = vmatprep.subr.mxu0 0.0
        %502 = vmatpush1.msra.mxu0 0.0
        %503 = vmatprep.subr.mxu0 0.0
        %504 = vmatpush1.msra.mxu0 0.0
        %505 = vmatprep.subr.mxu0 0.0
        %506 = vmatpush1.msra.mxu0 %v479
        %507 = vmatprep.subr.mxu0 0.0
        %508 = vmatpush1.msra.mxu0 %v470
        %509 = vmatprep.subr.mxu0 0.0
        %510 = vmatpush1.msra.mxu0 %v469
        %511 = vmatprep.subr.mxu0 0.0
        %512 = vmatpush1.msra.mxu0 %v468
        %513 = vmatprep.subr.mxu0 0.0
        %514 = vmatpush2.msra.mxu0 0.0
        %515 = vmatprep.subr.mxu0 0.0
        %516 = vmatpush2.msra.mxu0 0.0
        %517 = vmatprep.subr.mxu0 0.0
        %518 = vmatpush2.msra.mxu0 0.0
        %519 = vmatprep.subr.mxu0 0.0
        %520 = vmatpush2.msra.mxu0 0.0
        %521 = vmatprep.subr.mxu0 0.0
        %522 = vmatpush2.msra.mxu0 0.0
        %523 = vmatprep.subr.mxu0 0.0
        %524 = vmatpush2.msra.mxu0 0.0
        %525 = vmatprep.subr.mxu0 0.0
        %526 = vmatpush2.msra.mxu0 0.0
        %527 = vmatprep.subr.mxu0 0.0
        %528 = vmatpush2.msra.mxu0 0.0
        %529 = vmatprep.subr.mxu0 0.0
        %530 = vmatpush2.msra.mxu0 0.0
        %531 = vmatprep.subr.mxu0 0.0
        %532 = vmatpush2.msra.mxu0 0.0
        %533 = vmatprep.subr.mxu0 0.0
        %534 = vmatpush2.msra.mxu0 0.0
        %535 = vmatprep.subr.mxu0 0.0
        %536 = vmatpush2.msra.mxu0 0.0
        %537 = vmatprep.subr.mxu0 0.0
        %538 = vmatpush2.msra.mxu0 0.0
        %539 = vmatprep.subr.mxu0 0.0
        %540 = vmatpush2.msra.mxu0 0.0
        %541 = vmatprep.subr.mxu0 0.0
        %542 = vmatpush2.msra.mxu0 0.0
        %543 = vmatprep.subr.mxu0 0.0
        %544 = vmatpush2.msra.mxu0 0.0
        %545 = vmatprep.mubr.f32.mxu0 0.0
        %546 = vmatmul.mubr.f32.gmra.mxu0 %v473
        %v547 = vpop.f32.mrf.mxu0
        %v548 = vadd.f32 0.0, %v547
        %v549 = vpop.f32.mrf.mxu0
        %550 = vmatprep.mubr.f32.mxu0 0.0
        %551 = vmatmul.mubr.f32.gmra.mxu0 %v476
        %v552 = vpop.f32.mrf.mxu0
        %v553 = vadd.f32 0.0, %v552
        %v554 = vpop.f32.mrf.mxu0
        %555 = vdwg.mxu0
        %v556 = vadd.f32 %v460, %v548
        %v557 = vadd.f32 %v461, %v553
        %s558 = sadd.s32 %s177, 4
        %s559 = smul.u32 %s558, 16
        %s560 = scalar_lea.vmem %s165, %s559
        %v561 = vld [vmem:[%s560] sm:$0xff]
        %v562 = vld [vmem:[%s560 + $0x8] sm:$0x3]
        %s563 = scalar_lea.vmem %s1, 128
        %v564 = vld [vmem:[%s563] sm:$0xff]
        %v565 = vld [vmem:[%s563 + $0x8] sm:$0xff]
        %v566 = vld [vmem:[%s563 + $0x10] sm:$0xff]
        %v567 = vld [vmem:[%s563 + $0x18] sm:$0x3f]
        %v569 = vsel %vm196, %v561, 0
        %v572 = vsel %vm196, %v562, 0
        %v575 = vsel %vm203, %v567, 0
        %577 = vmatprep.subr.mxu0 0.0
        %578 = vmatpush1.msra.mxu0 0.0
        %579 = vmatprep.subr.mxu0 0.0
        %580 = vmatpush1.msra.mxu0 0.0
        %581 = vmatprep.subr.mxu0 0.0
        %582 = vmatpush1.msra.mxu0 0.0
        %583 = vmatprep.subr.mxu0 0.0
        %584 = vmatpush1.msra.mxu0 0.0
        %585 = vmatprep.subr.mxu0 0.0
        %586 = vmatpush1.msra.mxu0 0.0
        %587 = vmatprep.subr.mxu0 0.0
        %588 = vmatpush1.msra.mxu0 0.0
        %589 = vmatprep.subr.mxu0 0.0
        %590 = vmatpush1.msra.mxu0 0.0
        %591 = vmatprep.subr.mxu0 0.0
        %592 = vmatpush1.msra.mxu0 0.0
        %593 = vmatprep.subr.mxu0 0.0
        %594 = vmatpush1.msra.mxu0 0.0
        %595 = vmatprep.subr.mxu0 0.0
        %596 = vmatpush1.msra.mxu0 0.0
        %597 = vmatprep.subr.mxu0 0.0
        %598 = vmatpush1.msra.mxu0 0.0
        %599 = vmatprep.subr.mxu0 0.0
        %600 = vmatpush1.msra.mxu0 0.0
        %601 = vmatprep.subr.mxu0 0.0
        %602 = vmatpush1.msra.mxu0 %v575
        %603 = vmatprep.subr.mxu0 0.0
        %604 = vmatpush1.msra.mxu0 %v566
        %605 = vmatprep.subr.mxu0 0.0
        %606 = vmatpush1.msra.mxu0 %v565
        %607 = vmatprep.subr.mxu0 0.0
        %608 = vmatpush1.msra.mxu0 %v564
        %609 = vmatprep.subr.mxu0 0.0
        %610 = vmatpush2.msra.mxu0 0.0
        %611 = vmatprep.subr.mxu0 0.0
        %612 = vmatpush2.msra.mxu0 0.0
        %613 = vmatprep.subr.mxu0 0.0
        %614 = vmatpush2.msra.mxu0 0.0
        %615 = vmatprep.subr.mxu0 0.0
        %616 = vmatpush2.msra.mxu0 0.0
        %617 = vmatprep.subr.mxu0 0.0
        %618 = vmatpush2.msra.mxu0 0.0
        %619 = vmatprep.subr.mxu0 0.0
        %620 = vmatpush2.msra.mxu0 0.0
        %621 = vmatprep.subr.mxu0 0.0
        %622 = vmatpush2.msra.mxu0 0.0
        %623 = vmatprep.subr.mxu0 0.0
        %624 = vmatpush2.msra.mxu0 0.0
        %625 = vmatprep.subr.mxu0 0.0
        %626 = vmatpush2.msra.mxu0 0.0
        %627 = vmatprep.subr.mxu0 0.0
        %628 = vmatpush2.msra.mxu0 0.0
        %629 = vmatprep.subr.mxu0 0.0
        %630 = vmatpush2.msra.mxu0 0.0
        %631 = vmatprep.subr.mxu0 0.0
        %632 = vmatpush2.msra.mxu0 0.0
        %633 = vmatprep.subr.mxu0 0.0
        %634 = vmatpush2.msra.mxu0 0.0
        %635 = vmatprep.subr.mxu0 0.0
        %636 = vmatpush2.msra.mxu0 0.0
        %637 = vmatprep.subr.mxu0 0.0
        %638 = vmatpush2.msra.mxu0 0.0
        %639 = vmatprep.subr.mxu0 0.0
        %640 = vmatpush2.msra.mxu0 0.0
        %641 = vmatprep.mubr.f32.mxu0 0.0
        %642 = vmatmul.mubr.f32.gmra.mxu0 %v569
        %v643 = vpop.f32.mrf.mxu0
        %v644 = vadd.f32 0.0, %v643
        %v645 = vpop.f32.mrf.mxu0
        %646 = vmatprep.mubr.f32.mxu0 0.0
        %647 = vmatmul.mubr.f32.gmra.mxu0 %v572
        %v648 = vpop.f32.mrf.mxu0
        %v649 = vadd.f32 0.0, %v648
        %v650 = vpop.f32.mrf.mxu0
        %651 = vdwg.mxu0
        %v652 = vadd.f32 %v556, %v644
        %v653 = vadd.f32 %v557, %v649
        %v654 = vld [vmem:[%s2] sm:$0x1]
        %v656 = vlaneseq
        %v657 = vshrl.u32 %v656, 7
        %v658 = vsub.s32 0, %v657
        %v659 = vrot.slane %v654, %v658
        %v661 = vadd.f32 %v652, %v659
        %v662 = vadd.f32 %v653, %v659
        %v663 = vmax.f32 %v661, 0.0
        %v664 = vmax.f32 %v662, 0.0
        %vm665 = vcmask 130048
        %666 = vst.msk [vmem:[#allocation2] sm:$0xff] %vm665, %v663
        %vm667 = vcmask 123904
        %668 = vst.msk [vmem:[#allocation2 + $0x8] sm:$0x3] %vm667, %v664
        %v669 = vld [vmem:[#allocation2] sm:$0xff]
        %v670 = vld [vmem:[#allocation2 + $0x8] sm:$0x3]
        %v671 = vld [vmem:[%s188] sm:$0xff]
        %v672 = vld [vmem:[%s188 + $0x8] sm:$0x3]
        %v673 = vld [vmem:[%s1] sm:$0xff]
        %v674 = vld [vmem:[%s1 + $0x8] sm:$0xff]
        %v675 = vld [vmem:[%s1 + $0x10] sm:$0xff]
        %v676 = vld [vmem:[%s1 + $0x18] sm:$0x3f]
        %v677 = vld [vmem:[%s368] sm:$0xff]
        %v678 = vld [vmem:[%s368 + $0x8] sm:$0x3]
        %v679 = vld [vmem:[%s191] sm:$0xff]
        %v680 = vld [vmem:[%s191 + $0x8] sm:$0xff]
        %v681 = vld [vmem:[%s191 + $0x10] sm:$0xff]
        %v682 = vld [vmem:[%s191 + $0x18] sm:$0x3f]
        %v684 = vsel %vm196, %v677, 0
        %v687 = vsel %vm196, %v678, 0
        %v690 = vsel %vm203, %v682, 0
        %692 = vmatprep.subr.mxu0 0.0
        %693 = vmatpush1.msra.mxu0 0.0
        %694 = vmatprep.subr.mxu0 0.0
        %695 = vmatpush1.msra.mxu0 0.0
        %696 = vmatprep.subr.mxu0 0.0
        %697 = vmatpush1.msra.mxu0 0.0
        %698 = vmatprep.subr.mxu0 0.0
        %699 = vmatpush1.msra.mxu0 0.0
        %700 = vmatprep.subr.mxu0 0.0
        %701 = vmatpush1.msra.mxu0 0.0
        %702 = vmatprep.subr.mxu0 0.0
        %703 = vmatpush1.msra.mxu0 0.0
        %704 = vmatprep.subr.mxu0 0.0
        %705 = vmatpush1.msra.mxu0 0.0
        %706 = vmatprep.subr.mxu0 0.0
        %707 = vmatpush1.msra.mxu0 0.0
        %708 = vmatprep.subr.mxu0 0.0
        %709 = vmatpush1.msra.mxu0 0.0
        %710 = vmatprep.subr.mxu0 0.0
        %711 = vmatpush1.msra.mxu0 0.0
        %712 = vmatprep.subr.mxu0 0.0
        %713 = vmatpush1.msra.mxu0 0.0
        %714 = vmatprep.subr.mxu0 0.0
        %715 = vmatpush1.msra.mxu0 0.0
        %716 = vmatprep.subr.mxu0 0.0
        %717 = vmatpush1.msra.mxu0 %v690
        %718 = vmatprep.subr.mxu0 0.0
        %719 = vmatpush1.msra.mxu0 %v681
        %720 = vmatprep.subr.mxu0 0.0
        %721 = vmatpush1.msra.mxu0 %v680
        %722 = vmatprep.subr.mxu0 0.0
        %723 = vmatpush1.msra.mxu0 %v679
        %724 = vmatprep.subr.mxu0 0.0
        %725 = vmatpush2.msra.mxu0 0.0
        %726 = vmatprep.subr.mxu0 0.0
        %727 = vmatpush2.msra.mxu0 0.0
        %728 = vmatprep.subr.mxu0 0.0
        %729 = vmatpush2.msra.mxu0 0.0
        %730 = vmatprep.subr.mxu0 0.0
        %731 = vmatpush2.msra.mxu0 0.0
        %732 = vmatprep.subr.mxu0 0.0
        %733 = vmatpush2.msra.mxu0 0.0
        %734 = vmatprep.subr.mxu0 0.0
        %735 = vmatpush2.msra.mxu0 0.0
        %736 = vmatprep.subr.mxu0 0.0
        %737 = vmatpush2.msra.mxu0 0.0
        %738 = vmatprep.subr.mxu0 0.0
        %739 = vmatpush2.msra.mxu0 0.0
        %740 = vmatprep.subr.mxu0 0.0
        %741 = vmatpush2.msra.mxu0 0.0
        %742 = vmatprep.subr.mxu0 0.0
        %743 = vmatpush2.msra.mxu0 0.0
        %744 = vmatprep.subr.mxu0 0.0
        %745 = vmatpush2.msra.mxu0 0.0
        %746 = vmatprep.subr.mxu0 0.0
        %747 = vmatpush2.msra.mxu0 0.0
        %748 = vmatprep.subr.mxu0 0.0
        %749 = vmatpush2.msra.mxu0 0.0
        %750 = vmatprep.subr.mxu0 0.0
        %751 = vmatpush2.msra.mxu0 0.0
        %752 = vmatprep.subr.mxu0 0.0
        %753 = vmatpush2.msra.mxu0 0.0
        %754 = vmatprep.subr.mxu0 0.0
        %755 = vmatpush2.msra.mxu0 0.0
        %756 = vmatprep.mubr.f32.mxu0 0.0
        %757 = vmatmul.mubr.f32.gmra.mxu0 %v684
        %v758 = vpop.f32.mrf.mxu0
        %v759 = vadd.f32 0.0, %v758
        %v760 = vpop.f32.mrf.mxu0
        %761 = vmatprep.mubr.f32.mxu0 0.0
        %762 = vmatmul.mubr.f32.gmra.mxu0 %v687
        %v763 = vpop.f32.mrf.mxu0
        %v764 = vadd.f32 0.0, %v763
        %v765 = vpop.f32.mrf.mxu0
        %766 = vdwg.mxu0
        %v768 = vsel %vm196, %v671, 0
        %v771 = vsel %vm196, %v672, 0
        %v774 = vsel %vm203, %v676, 0
        %776 = vmatprep.subr.mxu0 0.0
        %777 = vmatpush1.msra.mxu0 0.0
        %778 = vmatprep.subr.mxu0 0.0
        %779 = vmatpush1.msra.mxu0 0.0
        %780 = vmatprep.subr.mxu0 0.0
        %781 = vmatpush1.msra.mxu0 0.0
        %782 = vmatprep.subr.mxu0 0.0
        %783 = vmatpush1.msra.mxu0 0.0
        %784 = vmatprep.subr.mxu0 0.0
        %785 = vmatpush1.msra.mxu0 0.0
        %786 = vmatprep.subr.mxu0 0.0
        %787 = vmatpush1.msra.mxu0 0.0
        %788 = vmatprep.subr.mxu0 0.0
        %789 = vmatpush1.msra.mxu0 0.0
        %790 = vmatprep.subr.mxu0 0.0
        %791 = vmatpush1.msra.mxu0 0.0
        %792 = vmatprep.subr.mxu0 0.0
        %793 = vmatpush1.msra.mxu0 0.0
        %794 = vmatprep.subr.mxu0 0.0
        %795 = vmatpush1.msra.mxu0 0.0
        %796 = vmatprep.subr.mxu0 0.0
        %797 = vmatpush1.msra.mxu0 0.0
        %798 = vmatprep.subr.mxu0 0.0
        %799 = vmatpush1.msra.mxu0 0.0
        %800 = vmatprep.subr.mxu0 0.0
        %801 = vmatpush1.msra.mxu0 %v774
        %802 = vmatprep.subr.mxu0 0.0
        %803 = vmatpush1.msra.mxu0 %v675
        %804 = vmatprep.subr.mxu0 0.0
        %805 = vmatpush1.msra.mxu0 %v674
        %806 = vmatprep.subr.mxu0 0.0
        %807 = vmatpush1.msra.mxu0 %v673
        %808 = vmatprep.subr.mxu0 0.0
        %809 = vmatpush2.msra.mxu0 0.0
        %810 = vmatprep.subr.mxu0 0.0
        %811 = vmatpush2.msra.mxu0 0.0
        %812 = vmatprep.subr.mxu0 0.0
        %813 = vmatpush2.msra.mxu0 0.0
        %814 = vmatprep.subr.mxu0 0.0
        %815 = vmatpush2.msra.mxu0 0.0
        %816 = vmatprep.subr.mxu0 0.0
        %817 = vmatpush2.msra.mxu0 0.0
        %818 = vmatprep.subr.mxu0 0.0
        %819 = vmatpush2.msra.mxu0 0.0
        %820 = vmatprep.subr.mxu0 0.0
        %821 = vmatpush2.msra.mxu0 0.0
        %822 = vmatprep.subr.mxu0 0.0
        %823 = vmatpush2.msra.mxu0 0.0
        %824 = vmatprep.subr.mxu0 0.0
        %825 = vmatpush2.msra.mxu0 0.0
        %826 = vmatprep.subr.mxu0 0.0
        %827 = vmatpush2.msra.mxu0 0.0
        %828 = vmatprep.subr.mxu0 0.0
        %829 = vmatpush2.msra.mxu0 0.0
        %830 = vmatprep.subr.mxu0 0.0
        %831 = vmatpush2.msra.mxu0 0.0
        %832 = vmatprep.subr.mxu0 0.0
        %833 = vmatpush2.msra.mxu0 0.0
        %834 = vmatprep.subr.mxu0 0.0
        %835 = vmatpush2.msra.mxu0 0.0
        %836 = vmatprep.subr.mxu0 0.0
        %837 = vmatpush2.msra.mxu0 0.0
        %838 = vmatprep.subr.mxu0 0.0
        %839 = vmatpush2.msra.mxu0 0.0
        %840 = vmatprep.mubr.f32.mxu0 0.0
        %841 = vmatmul.mubr.f32.gmra.mxu0 %v768
        %v842 = vpop.f32.mrf.mxu0
        %v843 = vadd.f32 %v759, %v842
        %v844 = vpop.f32.mrf.mxu0
        %845 = vmatprep.mubr.f32.mxu0 0.0
        %846 = vmatmul.mubr.f32.gmra.mxu0 %v771
        %v847 = vpop.f32.mrf.mxu0
        %v848 = vadd.f32 %v764, %v847
        %v849 = vpop.f32.mrf.mxu0
        %850 = vdwg.mxu0
        %v851 = vld [vmem:[%s464] sm:$0xff]
        %v852 = vld [vmem:[%s464 + $0x8] sm:$0x3]
        %v853 = vld [vmem:[%s371] sm:$0xff]
        %v854 = vld [vmem:[%s371 + $0x8] sm:$0xff]
        %v855 = vld [vmem:[%s371 + $0x10] sm:$0xff]
        %v856 = vld [vmem:[%s371 + $0x18] sm:$0x3f]
        %v858 = vsel %vm196, %v851, 0
        %v861 = vsel %vm196, %v852, 0
        %v864 = vsel %vm203, %v856, 0
        %866 = vmatprep.subr.mxu0 0.0
        %867 = vmatpush1.msra.mxu0 0.0
        %868 = vmatprep.subr.mxu0 0.0
        %869 = vmatpush1.msra.mxu0 0.0
        %870 = vmatprep.subr.mxu0 0.0
        %871 = vmatpush1.msra.mxu0 0.0
        %872 = vmatprep.subr.mxu0 0.0
        %873 = vmatpush1.msra.mxu0 0.0
        %874 = vmatprep.subr.mxu0 0.0
        %875 = vmatpush1.msra.mxu0 0.0
        %876 = vmatprep.subr.mxu0 0.0
        %877 = vmatpush1.msra.mxu0 0.0
        %878 = vmatprep.subr.mxu0 0.0
        %879 = vmatpush1.msra.mxu0 0.0
        %880 = vmatprep.subr.mxu0 0.0
        %881 = vmatpush1.msra.mxu0 0.0
        %882 = vmatprep.subr.mxu0 0.0
        %883 = vmatpush1.msra.mxu0 0.0
        %884 = vmatprep.subr.mxu0 0.0
        %885 = vmatpush1.msra.mxu0 0.0
        %886 = vmatprep.subr.mxu0 0.0
        %887 = vmatpush1.msra.mxu0 0.0
        %888 = vmatprep.subr.mxu0 0.0
        %889 = vmatpush1.msra.mxu0 0.0
        %890 = vmatprep.subr.mxu0 0.0
        %891 = vmatpush1.msra.mxu0 %v864
        %892 = vmatprep.subr.mxu0 0.0
        %893 = vmatpush1.msra.mxu0 %v855
        %894 = vmatprep.subr.mxu0 0.0
        %895 = vmatpush1.msra.mxu0 %v854
        %896 = vmatprep.subr.mxu0 0.0
        %897 = vmatpush1.msra.mxu0 %v853
        %898 = vmatprep.subr.mxu0 0.0
        %899 = vmatpush2.msra.mxu0 0.0
        %900 = vmatprep.subr.mxu0 0.0
        %901 = vmatpush2.msra.mxu0 0.0
        %902 = vmatprep.subr.mxu0 0.0
        %903 = vmatpush2.msra.mxu0 0.0
        %904 = vmatprep.subr.mxu0 0.0
        %905 = vmatpush2.msra.mxu0 0.0
        %906 = vmatprep.subr.mxu0 0.0
        %907 = vmatpush2.msra.mxu0 0.0
        %908 = vmatprep.subr.mxu0 0.0
        %909 = vmatpush2.msra.mxu0 0.0
        %910 = vmatprep.subr.mxu0 0.0
        %911 = vmatpush2.msra.mxu0 0.0
        %912 = vmatprep.subr.mxu0 0.0
        %913 = vmatpush2.msra.mxu0 0.0
        %914 = vmatprep.subr.mxu0 0.0
        %915 = vmatpush2.msra.mxu0 0.0
        %916 = vmatprep.subr.mxu0 0.0
        %917 = vmatpush2.msra.mxu0 0.0
        %918 = vmatprep.subr.mxu0 0.0
        %919 = vmatpush2.msra.mxu0 0.0
        %920 = vmatprep.subr.mxu0 0.0
        %921 = vmatpush2.msra.mxu0 0.0
        %922 = vmatprep.subr.mxu0 0.0
        %923 = vmatpush2.msra.mxu0 0.0
        %924 = vmatprep.subr.mxu0 0.0
        %925 = vmatpush2.msra.mxu0 0.0
        %926 = vmatprep.subr.mxu0 0.0
        %927 = vmatpush2.msra.mxu0 0.0
        %928 = vmatprep.subr.mxu0 0.0
        %929 = vmatpush2.msra.mxu0 0.0
        %930 = vmatprep.mubr.f32.mxu0 0.0
        %931 = vmatmul.mubr.f32.gmra.mxu0 %v858
        %v932 = vpop.f32.mrf.mxu0
        %v933 = vadd.f32 0.0, %v932
        %v934 = vpop.f32.mrf.mxu0
        %935 = vmatprep.mubr.f32.mxu0 0.0
        %936 = vmatmul.mubr.f32.gmra.mxu0 %v861
        %v937 = vpop.f32.mrf.mxu0
        %v938 = vadd.f32 0.0, %v937
        %v939 = vpop.f32.mrf.mxu0
        %940 = vdwg.mxu0
        %v941 = vadd.f32 %v843, %v933
        %v942 = vadd.f32 %v848, %v938
        %v943 = vld [vmem:[%s560] sm:$0xff]
        %v944 = vld [vmem:[%s560 + $0x8] sm:$0x3]
        %v945 = vld [vmem:[%s467] sm:$0xff]
        %v946 = vld [vmem:[%s467 + $0x8] sm:$0xff]
        %v947 = vld [vmem:[%s467 + $0x10] sm:$0xff]
        %v948 = vld [vmem:[%s467 + $0x18] sm:$0x3f]
        %v950 = vsel %vm196, %v943, 0
        %v953 = vsel %vm196, %v944, 0
        %v956 = vsel %vm203, %v948, 0
        %958 = vmatprep.subr.mxu0 0.0
        %959 = vmatpush1.msra.mxu0 0.0
        %960 = vmatprep.subr.mxu0 0.0
        %961 = vmatpush1.msra.mxu0 0.0
        %962 = vmatprep.subr.mxu0 0.0
        %963 = vmatpush1.msra.mxu0 0.0
        %964 = vmatprep.subr.mxu0 0.0
        %965 = vmatpush1.msra.mxu0 0.0
        %966 = vmatprep.subr.mxu0 0.0
        %967 = vmatpush1.msra.mxu0 0.0
        %968 = vmatprep.subr.mxu0 0.0
        %969 = vmatpush1.msra.mxu0 0.0
        %970 = vmatprep.subr.mxu0 0.0
        %971 = vmatpush1.msra.mxu0 0.0
        %972 = vmatprep.subr.mxu0 0.0
        %973 = vmatpush1.msra.mxu0 0.0
        %974 = vmatprep.subr.mxu0 0.0
        %975 = vmatpush1.msra.mxu0 0.0
        %976 = vmatprep.subr.mxu0 0.0
        %977 = vmatpush1.msra.mxu0 0.0
        %978 = vmatprep.subr.mxu0 0.0
        %979 = vmatpush1.msra.mxu0 0.0
        %980 = vmatprep.subr.mxu0 0.0
        %981 = vmatpush1.msra.mxu0 0.0
        %982 = vmatprep.subr.mxu0 0.0
        %983 = vmatpush1.msra.mxu0 %v956
        %984 = vmatprep.subr.mxu0 0.0
        %985 = vmatpush1.msra.mxu0 %v947
        %986 = vmatprep.subr.mxu0 0.0
        %987 = vmatpush1.msra.mxu0 %v946
        %988 = vmatprep.subr.mxu0 0.0
        %989 = vmatpush1.msra.mxu0 %v945
        %990 = vmatprep.subr.mxu0 0.0
        %991 = vmatpush2.msra.mxu0 0.0
        %992 = vmatprep.subr.mxu0 0.0
        %993 = vmatpush2.msra.mxu0 0.0
        %994 = vmatprep.subr.mxu0 0.0
        %995 = vmatpush2.msra.mxu0 0.0
        %996 = vmatprep.subr.mxu0 0.0
        %997 = vmatpush2.msra.mxu0 0.0
        %998 = vmatprep.subr.mxu0 0.0
        %999 = vmatpush2.msra.mxu0 0.0
        %1000 = vmatprep.subr.mxu0 0.0
        %1001 = vmatpush2.msra.mxu0 0.0
        %1002 = vmatprep.subr.mxu0 0.0
        %1003 = vmatpush2.msra.mxu0 0.0
        %1004 = vmatprep.subr.mxu0 0.0
        %1005 = vmatpush2.msra.mxu0 0.0
        %1006 = vmatprep.subr.mxu0 0.0
        %1007 = vmatpush2.msra.mxu0 0.0
        %1008 = vmatprep.subr.mxu0 0.0
        %1009 = vmatpush2.msra.mxu0 0.0
        %1010 = vmatprep.subr.mxu0 0.0
        %1011 = vmatpush2.msra.mxu0 0.0
        %1012 = vmatprep.subr.mxu0 0.0
        %1013 = vmatpush2.msra.mxu0 0.0
        %1014 = vmatprep.subr.mxu0 0.0
        %1015 = vmatpush2.msra.mxu0 0.0
        %1016 = vmatprep.subr.mxu0 0.0
        %1017 = vmatpush2.msra.mxu0 0.0
        %1018 = vmatprep.subr.mxu0 0.0
        %1019 = vmatpush2.msra.mxu0 0.0
        %1020 = vmatprep.subr.mxu0 0.0
        %1021 = vmatpush2.msra.mxu0 0.0
        %1022 = vmatprep.mubr.f32.mxu0 0.0
        %1023 = vmatmul.mubr.f32.gmra.mxu0 %v950
        %v1024 = vpop.f32.mrf.mxu0
        %v1025 = vadd.f32 0.0, %v1024
        %v1026 = vpop.f32.mrf.mxu0
        %1027 = vmatprep.mubr.f32.mxu0 0.0
        %1028 = vmatmul.mubr.f32.gmra.mxu0 %v953
        %v1029 = vpop.f32.mrf.mxu0
        %v1030 = vadd.f32 0.0, %v1029
        %v1031 = vpop.f32.mrf.mxu0
        %1032 = vdwg.mxu0
        %v1033 = vadd.f32 %v941, %v1025
        %v1034 = vadd.f32 %v942, %v1030
        %s1035 = sadd.s32 %s177, 5
        %s1036 = smul.u32 %s1035, 16
        %s1037 = scalar_lea.vmem %s165, %s1036
        %v1038 = vld [vmem:[%s1037] sm:$0xff]
        %v1039 = vld [vmem:[%s1037 + $0x8] sm:$0x3]
        %v1040 = vld [vmem:[%s563] sm:$0xff]
        %v1041 = vld [vmem:[%s563 + $0x8] sm:$0xff]
        %v1042 = vld [vmem:[%s563 + $0x10] sm:$0xff]
        %v1043 = vld [vmem:[%s563 + $0x18] sm:$0x3f]
        %v1045 = vsel %vm196, %v1038, 0
        %v1048 = vsel %vm196, %v1039, 0
        %v1051 = vsel %vm203, %v1043, 0
        %1053 = vmatprep.subr.mxu0 0.0
        %1054 = vmatpush1.msra.mxu0 0.0
        %1055 = vmatprep.subr.mxu0 0.0
        %1056 = vmatpush1.msra.mxu0 0.0
        %1057 = vmatprep.subr.mxu0 0.0
        %1058 = vmatpush1.msra.mxu0 0.0
        %1059 = vmatprep.subr.mxu0 0.0
        %1060 = vmatpush1.msra.mxu0 0.0
        %1061 = vmatprep.subr.mxu0 0.0
        %1062 = vmatpush1.msra.mxu0 0.0
        %1063 = vmatprep.subr.mxu0 0.0
        %1064 = vmatpush1.msra.mxu0 0.0
        %1065 = vmatprep.subr.mxu0 0.0
        %1066 = vmatpush1.msra.mxu0 0.0
        %1067 = vmatprep.subr.mxu0 0.0
        %1068 = vmatpush1.msra.mxu0 0.0
        %1069 = vmatprep.subr.mxu0 0.0
        %1070 = vmatpush1.msra.mxu0 0.0
        %1071 = vmatprep.subr.mxu0 0.0
        %1072 = vmatpush1.msra.mxu0 0.0
        %1073 = vmatprep.subr.mxu0 0.0
        %1074 = vmatpush1.msra.mxu0 0.0
        %1075 = vmatprep.subr.mxu0 0.0
        %1076 = vmatpush1.msra.mxu0 0.0
        %1077 = vmatprep.subr.mxu0 0.0
        %1078 = vmatpush1.msra.mxu0 %v1051
        %1079 = vmatprep.subr.mxu0 0.0
        %1080 = vmatpush1.msra.mxu0 %v1042
        %1081 = vmatprep.subr.mxu0 0.0
        %1082 = vmatpush1.msra.mxu0 %v1041
        %1083 = vmatprep.subr.mxu0 0.0
        %1084 = vmatpush1.msra.mxu0 %v1040
        %1085 = vmatprep.subr.mxu0 0.0
        %1086 = vmatpush2.msra.mxu0 0.0
        %1087 = vmatprep.subr.mxu0 0.0
        %1088 = vmatpush2.msra.mxu0 0.0
        %1089 = vmatprep.subr.mxu0 0.0
        %1090 = vmatpush2.msra.mxu0 0.0
        %1091 = vmatprep.subr.mxu0 0.0
        %1092 = vmatpush2.msra.mxu0 0.0
        %1093 = vmatprep.subr.mxu0 0.0
        %1094 = vmatpush2.msra.mxu0 0.0
        %1095 = vmatprep.subr.mxu0 0.0
        %1096 = vmatpush2.msra.mxu0 0.0
        %1097 = vmatprep.subr.mxu0 0.0
        %1098 = vmatpush2.msra.mxu0 0.0
        %1099 = vmatprep.subr.mxu0 0.0
        %1100 = vmatpush2.msra.mxu0 0.0
        %1101 = vmatprep.subr.mxu0 0.0
        %1102 = vmatpush2.msra.mxu0 0.0
        %1103 = vmatprep.subr.mxu0 0.0
        %1104 = vmatpush2.msra.mxu0 0.0
        %1105 = vmatprep.subr.mxu0 0.0
        %1106 = vmatpush2.msra.mxu0 0.0
        %1107 = vmatprep.subr.mxu0 0.0
        %1108 = vmatpush2.msra.mxu0 0.0
        %1109 = vmatprep.subr.mxu0 0.0
        %1110 = vmatpush2.msra.mxu0 0.0
        %1111 = vmatprep.subr.mxu0 0.0
        %1112 = vmatpush2.msra.mxu0 0.0
        %1113 = vmatprep.subr.mxu0 0.0
        %1114 = vmatpush2.msra.mxu0 0.0
        %1115 = vmatprep.subr.mxu0 0.0
        %1116 = vmatpush2.msra.mxu0 0.0
        %1117 = vmatprep.mubr.f32.mxu0 0.0
        %1118 = vmatmul.mubr.f32.gmra.mxu0 %v1045
        %v1119 = vpop.f32.mrf.mxu0
        %v1120 = vadd.f32 0.0, %v1119
        %v1121 = vpop.f32.mrf.mxu0
        %1122 = vmatprep.mubr.f32.mxu0 0.0
        %1123 = vmatmul.mubr.f32.gmra.mxu0 %v1048
        %v1124 = vpop.f32.mrf.mxu0
        %v1125 = vadd.f32 0.0, %v1124
        %v1126 = vpop.f32.mrf.mxu0
        %1127 = vdwg.mxu0
        %v1128 = vadd.f32 %v1033, %v1120
        %v1129 = vadd.f32 %v1034, %v1125
        %v1130 = vld [vmem:[%s2] sm:$0x1]
        %v1132 = vlaneseq
        %v1133 = vshrl.u32 %v1132, 7
        %v1134 = vsub.s32 0, %v1133
        %v1135 = vrot.slane %v1130, %v1134
        %v1137 = vadd.f32 %v1128, %v1135
        %v1138 = vadd.f32 %v1129, %v1135
        %v1139 = vmax.f32 %v1137, 0.0
        %v1140 = vmax.f32 %v1138, 0.0
        %v1141 = vmax.f32 %v669, %v1139
        %v1142 = vmax.f32 %v670, %v1140
        %1143 = vst.msk [vmem:[#allocation2] sm:$0xff] %vm665, %v1141
        %1144 = vst.msk [vmem:[#allocation2 + $0x8] sm:$0x3] %vm667, %v1142
        %v1145 = vld [vmem:[#allocation2] ss:$2 sm:$0x1f]
        %s1146 = scalar_lea.vmem [#allocation2], 1
        %v1147 = vld [vmem:[%s1146] ss:$2 sm:$0x1f]
        %v1148 = vmax.f32 %v1145, %v1147
        %s1149 = smul.u32 %s172, 8
        %s1150 = scalar_lea.vmem %s170, %s1149
        %vm1151 = vcmask 126976
        %1152 = vst.msk [vmem:[%s1150] sm:$0x1f] %vm1151, %v1148
      $region37: #{forward.4} parent=31 // loop_footer
        %s176 = sadd.s32 1, %s172
      $region38: #{forward.4} parent=31 // loop_footer_branch
        %171 = sbr.rel target = $region34
      $region39: #{forward.4} parent=31 // loop_exit
        _
      %p1153 = scmp.lt.s32.totalorder %s14, 1
      %s1154 = scalar_select %p1153, %s14, 1
      %s1155 = smul.addr %s1154, 5
      %s1156 = smul.addr %s1155, 8
      %s1157 = scalar_lea.vmem %s3, %s1156
      // Predicated region
      $region40: #{forward.4} parent=31 // pred_check
        %p1158 = pneg %p100
      $region41: #{forward.4} parent=31 // pred_check_branch
        %1160 = sbr.rel (%p1158) target = $region43
      $region42: #{forward.4} parent=31 // pred_region
        _
      $region43: #{forward.4} parent=31 // pred_fallthru
        _
    $region32: #{forward.4} parent=5 // pred_fallthru
      _
    %p1161 = scmp.le.s32.totalorder 2, %s9
    // Predicated region
    $region44: #{forward.4} parent=5 // pred_check
      %p1162 = pneg %p1161
    $region45: #{forward.4} parent=5 // pred_check_branch
      %1164 = sbr.rel (%p1162) target = $region47
    $region46: #{forward.4} parent=5 // pred_region
      %s1165 = ssub.s32 %s9, 2
      // Predicated region
      $region48: #{forward.4} parent=46 // pred_check
        %p1166 = pneg %p106
      $region49: #{forward.4} parent=46 // pred_check_branch
        %1168 = sbr.rel (%p1166) target = $region51
      $region50: #{forward.4} parent=46 // pred_region
        %p1169 = scmp.lt.s32.totalorder %s15, 1
        %s1170 = scalar_select %p1169, %s15, 1
        %s1171 = smul.addr %s1170, 5
        %s1172 = smul.addr %s1171, 8
        %s1173 = scalar_lea.vmem %s3, %s1172
      $region51: #{forward.4} parent=46 // pred_fallthru
        _
    $region47: #{forward.4} parent=5 // pred_fallthru
      _
  $region6: #{forward.4} parent=0 // loop_footer
    %s13 = sadd.s32 1, %s9
  $region7: #{forward.4} parent=0 // loop_footer_branch
    %8 = sbr.rel target = $region3
  $region8: #{forward.4} parent=0 // loop_exit
    _

// kernel: forward.5
$region0: #{forward.5}
  #allocation0 [shape = 'u32[]', space=smem, size = 0x4, offset = 0x4, fixed_abs, tag = 'smem constant byte address 0x4 - core index']
  #allocation1 [shape = 'u32[144,128]{1,0:T(1,128)}', space=vmem, size = 0x12000, scoped, tag = 'internal scratch']
  %s0 = inlined_call_operand.vmem [shape: f32[2,400], index: 0, kind: input, shape index: {}]
  %s1 = inlined_call_operand.vmem [shape: f32[400,120], index: 1, kind: input, shape index: {}]
  %s2 = inlined_call_operand.vmem [shape: f32[1,120], index: 2, kind: input, shape index: {}]
  %s3 = inlined_call_operand.vmem [shape: f32[120,84], index: 3, kind: input, shape index: {}]
  %s4 = inlined_call_operand.vmem [shape: f32[1,84], index: 4, kind: input, shape index: {}]
  %s5 = inlined_call_operand.vmem [shape: f32[84,10], index: 5, kind: input, shape index: {}]
  %s6 = inlined_call_operand.vmem [shape: f32[1,10], index: 6, kind: input, shape index: {}]
  %s7 = inlined_call_operand.hbm [shape: f32[2,10], index: 7, kind: output, shape index: {}]
  %s8 = sld [smem:[#allocation0]]
  $region38: #{forward.5} parent=0
    _
  %s10 = ssub.s32 1, %s8
  %s11 = scalar_select 0, %s10, %s8
  $region1: #{forward.5} parent=0
    #allocation2 [shape = 'u8[1024]{0}', space=vmem, size = 0x400, scoped, tag = 'output window, operand 0, single buffered']
    #allocation3 [shape = 's32[1]{0}', space=sflag, size = 0x4, scoped, tag = 'scoped memory for forward.5']
    %12 = vsyncpa [#allocation3], 0
    // Predicated region
    $region2: #{forward.5} parent=1 // pred_check
      _
    $region3: #{forward.5} parent=1 // pred_check_branch
      %14 = sbr.rel (0) target = $region5
    $region4: #{forward.5} parent=1 // pred_region
      _
    $region5: #{forward.5} parent=1 // pred_fallthru
      _
    // Predicated region
    $region6: #{forward.5} parent=1 // pred_check
      _
    $region7: #{forward.5} parent=1 // pred_check_branch
      %16 = sbr.rel (0) target = $region9
    $region8: #{forward.5} parent=1 // pred_region
      _
    $region9: #{forward.5} parent=1 // pred_fallthru
      _
    // Predicated region
    $region10: #{forward.5} parent=1 // pred_check
      _
    $region11: #{forward.5} parent=1 // pred_check_branch
      %18 = sbr.rel (0) target = $region13
    $region12: #{forward.5} parent=1 // pred_region
      _
    $region13: #{forward.5} parent=1 // pred_fallthru
      _
    // Predicated region
    $region14: #{forward.5} parent=1 // pred_check
      _
    $region15: #{forward.5} parent=1 // pred_check_branch
      %20 = sbr.rel (0) target = $region17
    $region16: #{forward.5} parent=1 // pred_region
      _
    $region17: #{forward.5} parent=1 // pred_fallthru
      _
    // Predicated region
    $region18: #{forward.5} parent=1 // pred_check
      _
    $region19: #{forward.5} parent=1 // pred_check_branch
      %22 = sbr.rel (0) target = $region21
    $region20: #{forward.5} parent=1 // pred_region
      _
    $region21: #{forward.5} parent=1 // pred_fallthru
      _
    // Predicated region
    $region22: #{forward.5} parent=1 // pred_check
      _
    $region23: #{forward.5} parent=1 // pred_check_branch
      %24 = sbr.rel (0) target = $region25
    $region24: #{forward.5} parent=1 // pred_region
      _
    $region25: #{forward.5} parent=1 // pred_fallthru
      _
    // Predicated region
    $region26: #{forward.5} parent=1 // pred_check
      _
    $region27: #{forward.5} parent=1 // pred_check_branch
      %26 = sbr.rel (0) target = $region29
    $region28: #{forward.5} parent=1 // pred_region
      _
    $region29: #{forward.5} parent=1 // pred_fallthru
      _
    %v27 = vld [vmem:[%s0] sm:$0xff]
    %v28 = vld [vmem:[%s1] sm:$0xff]
    %v29 = vld [vmem:[%s1 + $0x8] sm:$0xff]
    %v30 = vld [vmem:[%s1 + $0x10] sm:$0xff]
    %v31 = vld [vmem:[%s1 + $0x18] sm:$0xff]
    %v32 = vld [vmem:[%s1 + $0x20] sm:$0xff]
    %v33 = vld [vmem:[%s1 + $0x28] sm:$0xff]
    %v34 = vld [vmem:[%s1 + $0x30] sm:$0xff]
    %v35 = vld [vmem:[%s1 + $0x38] sm:$0xff]
    %v36 = vld [vmem:[%s1 + $0x40] sm:$0xff]
    %v37 = vld [vmem:[%s1 + $0x48] sm:$0xff]
    %v38 = vld [vmem:[%s1 + $0x50] sm:$0xff]
    %v39 = vld [vmem:[%s1 + $0x58] sm:$0xff]
    %v40 = vld [vmem:[%s1 + $0x60] sm:$0xff]
    %v41 = vld [vmem:[%s1 + $0x68] sm:$0xff]
    %v42 = vld [vmem:[%s1 + $0x70] sm:$0xff]
    %v43 = vld [vmem:[%s1 + $0x78] sm:$0xff]
    %v44 = vld [vmem:[%s1 + $0x80] sm:$0xff]
    %v45 = vld [vmem:[%s1 + $0x88] sm:$0xff]
    %v46 = vld [vmem:[%s1 + $0x90] sm:$0xff]
    %v47 = vld [vmem:[%s1 + $0x98] sm:$0xff]
    %v48 = vld [vmem:[%s1 + $0xa0] sm:$0xff]
    %v49 = vld [vmem:[%s1 + $0xa8] sm:$0xff]
    %v50 = vld [vmem:[%s1 + $0xb0] sm:$0xff]
    %v51 = vld [vmem:[%s1 + $0xb8] sm:$0xff]
    %v52 = vld [vmem:[%s1 + $0xc0] sm:$0xff]
    %v53 = vld [vmem:[%s1 + $0xc8] sm:$0xff]
    %v54 = vld [vmem:[%s1 + $0xd0] sm:$0xff]
    %v55 = vld [vmem:[%s1 + $0xd8] sm:$0xff]
    %v56 = vld [vmem:[%s1 + $0xe0] sm:$0xff]
    %v57 = vld [vmem:[%s1 + $0xe8] sm:$0xff]
    %v58 = vld [vmem:[%s1 + $0xf0] sm:$0xff]
    %v59 = vld [vmem:[%s1 + $0xf8] sm:$0xff]
    %v60 = vld [vmem:[%s1 + $0x100] sm:$0xff]
    %v61 = vld [vmem:[%s1 + $0x108] sm:$0xff]
    %v62 = vld [vmem:[%s1 + $0x110] sm:$0xff]
    %v63 = vld [vmem:[%s1 + $0x118] sm:$0xff]
    %v64 = vld [vmem:[%s1 + $0x120] sm:$0xff]
    %v65 = vld [vmem:[%s1 + $0x128] sm:$0xff]
    %v66 = vld [vmem:[%s1 + $0x130] sm:$0xff]
    %v67 = vld [vmem:[%s1 + $0x138] sm:$0xff]
    %v68 = vld [vmem:[%s1 + $0x140] sm:$0xff]
    %v69 = vld [vmem:[%s1 + $0x148] sm:$0xff]
    %v70 = vld [vmem:[%s1 + $0x150] sm:$0xff]
    %v71 = vld [vmem:[%s1 + $0x158] sm:$0xff]
    %v72 = vld [vmem:[%s1 + $0x160] sm:$0xff]
    %v73 = vld [vmem:[%s1 + $0x168] sm:$0xff]
    %v74 = vld [vmem:[%s1 + $0x170] sm:$0xff]
    %v75 = vld [vmem:[%s1 + $0x178] sm:$0xff]
    %v76 = vld [vmem:[%s1 + $0x180] sm:$0xff]
    %v77 = vld [vmem:[%s1 + $0x188] sm:$0xff]
    %v78 = vld [vmem:[%s2] sm:$0x1]
    %v80 = vlaneseq
    %v81 = vshrl.u32 %v80, 7
    %v82 = vsub.s32 0, %v81
    %v83 = vrot.slane %v78, %v82
    %v86 = vcombine.high %v27, %v27
    %v88 = vunpack.c.l.s4 1983009808
    %v89 = vunpack.c.0.s8 %v88
    %v90 = vlaneseq
    %v91 = vshrl.u32 %v90, 7
    %v92 = vsub.s32 %v89, %v91
    %v93 = vrot.slane %v27, %v92
    %v95 = vunpack.c.l.s4 1983009808
    %v96 = vunpack.c.0.s8 %v95
    %v97 = vlaneseq
    %v98 = vshrl.u32 %v97, 7
    %v99 = vsub.s32 %v96, %v98
    %v100 = vrot.slane %v86, %v99
    %v101 = vcombine.high %v93, %v93
    %v102 = vcombine.high %v100, %v100
    %vm106 = vcmask 130048
    %v107 = vsel %vm106, %v102, 0
    %109 = vmatprep.subr.mxu0 0.0
    %110 = vmatpush1.msra.mxu0 %v43
    %111 = vmatprep.subr.mxu0 0.0
    %112 = vmatpush1.msra.mxu0 %v42
    %113 = vmatprep.subr.mxu0 0.0
    %114 = vmatpush1.msra.mxu0 %v41
    %115 = vmatprep.subr.mxu0 0.0
    %116 = vmatpush1.msra.mxu0 %v40
    %117 = vmatprep.subr.mxu0 0.0
    %118 = vmatpush1.msra.mxu0 %v39
    %119 = vmatprep.subr.mxu0 0.0
    %120 = vmatpush1.msra.mxu0 %v38
    %121 = vmatprep.subr.mxu0 0.0
    %122 = vmatpush1.msra.mxu0 %v37
    %123 = vmatprep.subr.mxu0 0.0
    %124 = vmatpush1.msra.mxu0 %v36
    %125 = vmatprep.subr.mxu0 0.0
    %126 = vmatpush1.msra.mxu0 %v35
    %127 = vmatprep.subr.mxu0 0.0
    %128 = vmatpush1.msra.mxu0 %v34
    %129 = vmatprep.subr.mxu0 0.0
    %130 = vmatpush1.msra.mxu0 %v33
    %131 = vmatprep.subr.mxu0 0.0
    %132 = vmatpush1.msra.mxu0 %v32
    %133 = vmatprep.subr.mxu0 0.0
    %134 = vmatpush1.msra.mxu0 %v31
    %135 = vmatprep.subr.mxu0 0.0
    %136 = vmatpush1.msra.mxu0 %v30
    %137 = vmatprep.subr.mxu0 0.0
    %138 = vmatpush1.msra.mxu0 %v29
    %139 = vmatprep.subr.mxu0 0.0
    %140 = vmatpush1.msra.mxu0 %v28
    %141 = vmatprep.subr.mxu0 0.0
    %142 = vmatpush2.msra.mxu0 %v59
    %143 = vmatprep.subr.mxu0 0.0
    %144 = vmatpush2.msra.mxu0 %v58
    %145 = vmatprep.subr.mxu0 0.0
    %146 = vmatpush2.msra.mxu0 %v57
    %147 = vmatprep.subr.mxu0 0.0
    %148 = vmatpush2.msra.mxu0 %v56
    %149 = vmatprep.subr.mxu0 0.0
    %150 = vmatpush2.msra.mxu0 %v55
    %151 = vmatprep.subr.mxu0 0.0
    %152 = vmatpush2.msra.mxu0 %v54
    %153 = vmatprep.subr.mxu0 0.0
    %154 = vmatpush2.msra.mxu0 %v53
    %155 = vmatprep.subr.mxu0 0.0
    %156 = vmatpush2.msra.mxu0 %v52
    %157 = vmatprep.subr.mxu0 0.0
    %158 = vmatpush2.msra.mxu0 %v51
    %159 = vmatprep.subr.mxu0 0.0
    %160 = vmatpush2.msra.mxu0 %v50
    %161 = vmatprep.subr.mxu0 0.0
    %162 = vmatpush2.msra.mxu0 %v49
    %163 = vmatprep.subr.mxu0 0.0
    %164 = vmatpush2.msra.mxu0 %v48
    %165 = vmatprep.subr.mxu0 0.0
    %166 = vmatpush2.msra.mxu0 %v47
    %167 = vmatprep.subr.mxu0 0.0
    %168 = vmatpush2.msra.mxu0 %v46
    %169 = vmatprep.subr.mxu0 0.0
    %170 = vmatpush2.msra.mxu0 %v45
    %171 = vmatprep.subr.mxu0 0.0
    %172 = vmatpush2.msra.mxu0 %v44
    %173 = vmatprep.mubr.f32.mxu0 %v101
    %174 = vmatmul.mubr.f32.gmra.mxu0 %v93
    %v175 = vpop.f32.mrf.mxu0
    %v176 = vadd.f32 %v83, %v175
    %v177 = vpop.f32.mrf.mxu0
    %178 = vdwg.mxu0
    %179 = vmatprep.subr.mxu0 0.0
    %180 = vmatpush1.msra.mxu0 %v75
    %181 = vmatprep.subr.mxu0 0.0
    %182 = vmatpush1.msra.mxu0 %v74
    %183 = vmatprep.subr.mxu0 0.0
    %184 = vmatpush1.msra.mxu0 %v73
    %185 = vmatprep.subr.mxu0 0.0
    %186 = vmatpush1.msra.mxu0 %v72
    %187 = vmatprep.subr.mxu0 0.0
    %188 = vmatpush1.msra.mxu0 %v71
    %189 = vmatprep.subr.mxu0 0.0
    %190 = vmatpush1.msra.mxu0 %v70
    %191 = vmatprep.subr.mxu0 0.0
    %192 = vmatpush1.msra.mxu0 %v69
    %193 = vmatprep.subr.mxu0 0.0
    %194 = vmatpush1.msra.mxu0 %v68
    %195 = vmatprep.subr.mxu0 0.0
    %196 = vmatpush1.msra.mxu0 %v67
    %197 = vmatprep.subr.mxu0 0.0
    %198 = vmatpush1.msra.mxu0 %v66
    %199 = vmatprep.subr.mxu0 0.0
    %200 = vmatpush1.msra.mxu0 %v65
    %201 = vmatprep.subr.mxu0 0.0
    %202 = vmatpush1.msra.mxu0 %v64
    %203 = vmatprep.subr.mxu0 0.0
    %204 = vmatpush1.msra.mxu0 %v63
    %205 = vmatprep.subr.mxu0 0.0
    %206 = vmatpush1.msra.mxu0 %v62
    %207 = vmatprep.subr.mxu0 0.0
    %208 = vmatpush1.msra.mxu0 %v61
    %209 = vmatprep.subr.mxu0 0.0
    %210 = vmatpush1.msra.mxu0 %v60
    %211 = vmatprep.subr.mxu0 0.0
    %212 = vmatpush2.msra.mxu0 0.0
    %213 = vmatprep.subr.mxu0 0.0
    %214 = vmatpush2.msra.mxu0 0.0
    %215 = vmatprep.subr.mxu0 0.0
    %216 = vmatpush2.msra.mxu0 0.0
    %217 = vmatprep.subr.mxu0 0.0
    %218 = vmatpush2.msra.mxu0 0.0
    %219 = vmatprep.subr.mxu0 0.0
    %220 = vmatpush2.msra.mxu0 0.0
    %221 = vmatprep.subr.mxu0 0.0
    %222 = vmatpush2.msra.mxu0 0.0
    %223 = vmatprep.subr.mxu0 0.0
    %224 = vmatpush2.msra.mxu0 0.0
    %225 = vmatprep.subr.mxu0 0.0
    %226 = vmatpush2.msra.mxu0 0.0
    %227 = vmatprep.subr.mxu0 0.0
    %228 = vmatpush2.msra.mxu0 0.0
    %229 = vmatprep.subr.mxu0 0.0
    %230 = vmatpush2.msra.mxu0 0.0
    %231 = vmatprep.subr.mxu0 0.0
    %232 = vmatpush2.msra.mxu0 0.0
    %233 = vmatprep.subr.mxu0 0.0
    %234 = vmatpush2.msra.mxu0 0.0
    %235 = vmatprep.subr.mxu0 0.0
    %236 = vmatpush2.msra.mxu0 0.0
    %237 = vmatprep.subr.mxu0 0.0
    %238 = vmatpush2.msra.mxu0 0.0
    %239 = vmatprep.subr.mxu0 0.0
    %240 = vmatpush2.msra.mxu0 %v77
    %241 = vmatprep.subr.mxu0 0.0
    %242 = vmatpush2.msra.mxu0 %v76
    %243 = vmatprep.mubr.f32.mxu0 %v107
    %244 = vmatmul.mubr.f32.gmra.mxu0 %v100
    %v245 = vpop.f32.mrf.mxu0
    %v246 = vadd.f32 %v176, %v245
    %v247 = vpop.f32.mrf.mxu0
    %248 = vdwg.mxu0
    %v249 = vmax.f32 %v246, 0.0
    %v250 = vld [vmem:[%s3] sm:$0xff]
    %v251 = vld [vmem:[%s3 + $0x8] sm:$0xff]
    %v252 = vld [vmem:[%s3 + $0x10] sm:$0xff]
    %v253 = vld [vmem:[%s3 + $0x18] sm:$0xff]
    %v254 = vld [vmem:[%s3 + $0x20] sm:$0xff]
    %v255 = vld [vmem:[%s3 + $0x28] sm:$0xff]
    %v256 = vld [vmem:[%s3 + $0x30] sm:$0xff]
    %v257 = vld [vmem:[%s3 + $0x38] sm:$0xff]
    %v258 = vld [vmem:[%s3 + $0x40] sm:$0xff]
    %v259 = vld [vmem:[%s3 + $0x48] sm:$0xff]
    %v260 = vld [vmem:[%s3 + $0x50] sm:$0xff]
    %v261 = vld [vmem:[%s3 + $0x58] sm:$0xff]
    %v262 = vld [vmem:[%s3 + $0x60] sm:$0xff]
    %v263 = vld [vmem:[%s3 + $0x68] sm:$0xff]
    %v264 = vld [vmem:[%s3 + $0x70] sm:$0xff]
    %v265 = vld [vmem:[%s4] sm:$0x1]
    %v267 = vlaneseq
    %v268 = vshrl.u32 %v267, 7
    %v269 = vsub.s32 0, %v268
    %v270 = vrot.slane %v265, %v269
    %vm272 = vcmask 982016
    %v274 = vsel %vm272, %v249, 0
    %276 = vmatprep.subr.mxu0 0.0
    %277 = vmatpush1.msra.mxu0 0.0
    %278 = vmatprep.subr.mxu0 0.0
    %279 = vmatpush1.msra.mxu0 %v264
    %280 = vmatprep.subr.mxu0 0.0
    %281 = vmatpush1.msra.mxu0 %v263
    %282 = vmatprep.subr.mxu0 0.0
    %283 = vmatpush1.msra.mxu0 %v262
    %284 = vmatprep.subr.mxu0 0.0
    %285 = vmatpush1.msra.mxu0 %v261
    %286 = vmatprep.subr.mxu0 0.0
    %287 = vmatpush1.msra.mxu0 %v260
    %288 = vmatprep.subr.mxu0 0.0
    %289 = vmatpush1.msra.mxu0 %v259
    %290 = vmatprep.subr.mxu0 0.0
    %291 = vmatpush1.msra.mxu0 %v258
    %292 = vmatprep.subr.mxu0 0.0
    %293 = vmatpush1.msra.mxu0 %v257
    %294 = vmatprep.subr.mxu0 0.0
    %295 = vmatpush1.msra.mxu0 %v256
    %296 = vmatprep.subr.mxu0 0.0
    %297 = vmatpush1.msra.mxu0 %v255
    %298 = vmatprep.subr.mxu0 0.0
    %299 = vmatpush1.msra.mxu0 %v254
    %300 = vmatprep.subr.mxu0 0.0
    %301 = vmatpush1.msra.mxu0 %v253
    %302 = vmatprep.subr.mxu0 0.0
    %303 = vmatpush1.msra.mxu0 %v252
    %304 = vmatprep.subr.mxu0 0.0
    %305 = vmatpush1.msra.mxu0 %v251
    %306 = vmatprep.subr.mxu0 0.0
    %307 = vmatpush1.msra.mxu0 %v250
    %308 = vmatprep.subr.mxu0 0.0
    %309 = vmatpush2.msra.mxu0 0.0
    %310 = vmatprep.subr.mxu0 0.0
    %311 = vmatpush2.msra.mxu0 0.0
    %312 = vmatprep.subr.mxu0 0.0
    %313 = vmatpush2.msra.mxu0 0.0
    %314 = vmatprep.subr.mxu0 0.0
    %315 = vmatpush2.msra.mxu0 0.0
    %316 = vmatprep.subr.mxu0 0.0
    %317 = vmatpush2.msra.mxu0 0.0
    %318 = vmatprep.subr.mxu0 0.0
    %319 = vmatpush2.msra.mxu0 0.0
    %320 = vmatprep.subr.mxu0 0.0
    %321 = vmatpush2.msra.mxu0 0.0
    %322 = vmatprep.subr.mxu0 0.0
    %323 = vmatpush2.msra.mxu0 0.0
    %324 = vmatprep.subr.mxu0 0.0
    %325 = vmatpush2.msra.mxu0 0.0
    %326 = vmatprep.subr.mxu0 0.0
    %327 = vmatpush2.msra.mxu0 0.0
    %328 = vmatprep.subr.mxu0 0.0
    %329 = vmatpush2.msra.mxu0 0.0
    %330 = vmatprep.subr.mxu0 0.0
    %331 = vmatpush2.msra.mxu0 0.0
    %332 = vmatprep.subr.mxu0 0.0
    %333 = vmatpush2.msra.mxu0 0.0
    %334 = vmatprep.subr.mxu0 0.0
    %335 = vmatpush2.msra.mxu0 0.0
    %336 = vmatprep.subr.mxu0 0.0
    %337 = vmatpush2.msra.mxu0 0.0
    %338 = vmatprep.subr.mxu0 0.0
    %339 = vmatpush2.msra.mxu0 0.0
    %340 = vmatprep.mubr.f32.mxu0 0.0
    %341 = vmatmul.mubr.f32.gmra.mxu0 %v274
    %v342 = vpop.f32.mrf.mxu0
    %v343 = vadd.f32 %v270, %v342
    %v344 = vpop.f32.mrf.mxu0
    %345 = vdwg.mxu0
    %v346 = vmax.f32 %v343, 0.0
    %v347 = vld [vmem:[%s5] sm:$0xff]
    %v348 = vld [vmem:[%s5 + $0x8] sm:$0xff]
    %v349 = vld [vmem:[%s5 + $0x10] sm:$0xff]
    %v350 = vld [vmem:[%s5 + $0x18] sm:$0xff]
    %v351 = vld [vmem:[%s5 + $0x20] sm:$0xff]
    %v352 = vld [vmem:[%s5 + $0x28] sm:$0xff]
    %v353 = vld [vmem:[%s5 + $0x30] sm:$0xff]
    %v354 = vld [vmem:[%s5 + $0x38] sm:$0xff]
    %v355 = vld [vmem:[%s5 + $0x40] sm:$0xff]
    %v356 = vld [vmem:[%s5 + $0x48] sm:$0xff]
    %v357 = vld [vmem:[%s5 + $0x50] sm:$0xf]
    %v358 = vld [vmem:[%s6] sm:$0x1]
    %v360 = vlaneseq
    %v361 = vshrl.u32 %v360, 7
    %v362 = vsub.s32 0, %v361
    %v363 = vrot.slane %v358, %v362
    %vm365 = vcmask 687104
    %v367 = vsel %vm365, %v346, 0
    %vm369 = vcmask 1043456
    %v371 = vsel %vm369, %v357, 0
    %373 = vmatprep.subr.mxu0 0.0
    %374 = vmatpush1.msra.mxu0 0.0
    %375 = vmatprep.subr.mxu0 0.0
    %376 = vmatpush1.msra.mxu0 0.0
    %377 = vmatprep.subr.mxu0 0.0
    %378 = vmatpush1.msra.mxu0 0.0
    %379 = vmatprep.subr.mxu0 0.0
    %380 = vmatpush1.msra.mxu0 0.0
    %381 = vmatprep.subr.mxu0 0.0
    %382 = vmatpush1.msra.mxu0 0.0
    %383 = vmatprep.subr.mxu0 0.0
    %384 = vmatpush1.msra.mxu0 %v371
    %385 = vmatprep.subr.mxu0 0.0
    %386 = vmatpush1.msra.mxu0 %v356
    %387 = vmatprep.subr.mxu0 0.0
    %388 = vmatpush1.msra.mxu0 %v355
    %389 = vmatprep.subr.mxu0 0.0
    %390 = vmatpush1.msra.mxu0 %v354
    %391 = vmatprep.subr.mxu0 0.0
    %392 = vmatpush1.msra.mxu0 %v353
    %393 = vmatprep.subr.mxu0 0.0
    %394 = vmatpush1.msra.mxu0 %v352
    %395 = vmatprep.subr.mxu0 0.0
    %396 = vmatpush1.msra.mxu0 %v351
    %397 = vmatprep.subr.mxu0 0.0
    %398 = vmatpush1.msra.mxu0 %v350
    %399 = vmatprep.subr.mxu0 0.0
    %400 = vmatpush1.msra.mxu0 %v349
    %401 = vmatprep.subr.mxu0 0.0
    %402 = vmatpush1.msra.mxu0 %v348
    %403 = vmatprep.subr.mxu0 0.0
    %404 = vmatpush1.msra.mxu0 %v347
    %405 = vmatprep.subr.mxu0 0.0
    %406 = vmatpush2.msra.mxu0 0.0
    %407 = vmatprep.subr.mxu0 0.0
    %408 = vmatpush2.msra.mxu0 0.0
    %409 = vmatprep.subr.mxu0 0.0
    %410 = vmatpush2.msra.mxu0 0.0
    %411 = vmatprep.subr.mxu0 0.0
    %412 = vmatpush2.msra.mxu0 0.0
    %413 = vmatprep.subr.mxu0 0.0
    %414 = vmatpush2.msra.mxu0 0.0
    %415 = vmatprep.subr.mxu0 0.0
    %416 = vmatpush2.msra.mxu0 0.0
    %417 = vmatprep.subr.mxu0 0.0
    %418 = vmatpush2.msra.mxu0 0.0
    %419 = vmatprep.subr.mxu0 0.0
    %420 = vmatpush2.msra.mxu0 0.0
    %421 = vmatprep.subr.mxu0 0.0
    %422 = vmatpush2.msra.mxu0 0.0
    %423 = vmatprep.subr.mxu0 0.0
    %424 = vmatpush2.msra.mxu0 0.0
    %425 = vmatprep.subr.mxu0 0.0
    %426 = vmatpush2.msra.mxu0 0.0
    %427 = vmatprep.subr.mxu0 0.0
    %428 = vmatpush2.msra.mxu0 0.0
    %429 = vmatprep.subr.mxu0 0.0
    %430 = vmatpush2.msra.mxu0 0.0
    %431 = vmatprep.subr.mxu0 0.0
    %432 = vmatpush2.msra.mxu0 0.0
    %433 = vmatprep.subr.mxu0 0.0
    %434 = vmatpush2.msra.mxu0 0.0
    %435 = vmatprep.subr.mxu0 0.0
    %436 = vmatpush2.msra.mxu0 0.0
    %437 = vmatprep.mubr.f32.mxu0 0.0
    %438 = vmatmul.mubr.f32.gmra.mxu0 %v367
    %v439 = vpop.f32.mrf.mxu0
    %v440 = vadd.f32 %v363, %v439
    %v441 = vpop.f32.mrf.mxu0
    %442 = vdwg.mxu0
    %vm443 = vcmask 74752
    %444 = vst.msk [vmem:[#allocation2] sm:$0x3] %vm443, %v440
    // Predicated region
    $region30: #{forward.5} parent=1 // pred_check
      _
    $region31: #{forward.5} parent=1 // pred_check_branch
      %446 = sbr.rel (0) target = $region33
    $region32: #{forward.5} parent=1 // pred_region
      %s448 = ssub.s32 32, 32
      %449 = vsyncadd [#allocation3], %s448
      %s451 = sshll.u32 [#allocation2], 4
      %s452 = int_to_ptr.vmem [resolvable:$true] %s451
      %454 = dma.vmem_to_hbm [thread:$0]  %s452, 32, %s7, [#allocation3]
    $region33: #{forward.5} parent=1 // pred_fallthru
      _
    // Predicated region
    $region34: #{forward.5} parent=1 // pred_check
      _
    $region35: #{forward.5} parent=1 // pred_check_branch
      %456 = sbr.rel (0) target = $region37
    $region36: #{forward.5} parent=1 // pred_region
      %457 = dma.done [#allocation3], 32
    $region37: #{forward.5} parent=1 // pred_fallthru
      _
    %458 = vsyncpa [#allocation3], 1

</llo_original>
